<compile_context>
chip_gen: v6e
topology: v6e:2x2x1
jax: 0.10.0
libtpu: 0.0.40
codegen_flags: <defaults>
</compile_context>

<pallas_src>
import jax
import jax.numpy as jnp
from jax import lax
from jax.experimental import pallas as pl
from jax.experimental.pallas import tpu as pltpu

# Everything is tiny (<1 MiB total), so every operand is a full-array VMEM block.
VMEM_SPEC = pl.BlockSpec(memory_space=pltpu.MemorySpace.VMEM)


# ---------------------------------------------------------------------------
# Fused kernel: encoder LSTM -> repeat -> decoder LSTM -> output Linear
# ---------------------------------------------------------------------------
def fused_autoencoder_kernel(
    x_ref,            # (B, T, F)   native batch-first layout
    enc_w_ih_ref,     # (F, 4E)
    enc_w_hh_ref,     # (E, 4E)
    enc_b_ref,        # (1, 4E)     b_ih + b_hh folded
    dec_w_ih_ref,     # (E, 4H)     H = 2E
    dec_w_hh_ref,     # (H, 4H)
    dec_b_ref,        # (1, 4H)
    out_w_ref,        # (H, F)
    out_b_ref,        # (1, F)
    o_ref,            # (1, B*T, F) output
    hseq_ref,         # VMEM scratch (B*T, H): decoder hidden sequence
):
    B, T, F = x_ref.shape
    E = enc_w_hh_ref.shape[0]
    H = dec_w_hh_ref.shape[0]
    S = B * T

    def gate_split(gates, hid):
        # PyTorch LSTM gate order: i, f, g, o
        i = jax.nn.sigmoid(gates[:, 0 * hid:1 * hid])
        f = jax.nn.sigmoid(gates[:, 1 * hid:2 * hid])
        g = jnp.tanh(gates[:, 2 * hid:3 * hid])
        o = jax.nn.sigmoid(gates[:, 3 * hid:4 * hid])
        return i, f, g, o

    # ----------------------- Encoder LSTM (F -> E) -----------------------
    enc_w_hh = enc_w_hh_ref[...]                       # hoisted, loop-invariant
    # Hoisted input projection for ALL timesteps + bias folded in (added once):
    # (B*T, F) @ (F, 4E) -> (B*T, 4E); row k is x[k // T, k % T].
    x2 = x_ref[...].reshape(S, F)
    xp = (
        jnp.dot(x2, enc_w_ih_ref[...], preferred_element_type=jnp.float32)
        + enc_b_ref[...]
    )
    xp3 = xp.reshape(B, T, 4 * E)                      # [b, t, :] = proj(x[b, t])

    h = jnp.zeros((B, E), jnp.float32)
    c = jnp.zeros((B, E), jnp.float32)
    for t in range(T):                                 # fully unrolled (T small)
        gates = xp3[:, t, :] + jnp.dot(
            h, enc_w_hh, preferred_element_type=jnp.float32
        )
        i, f, g, o = gate_split(gates, E)
        c = f * c + i * g
        h = o * jnp.tanh(c)
    h_enc = h                                          # (B, E) == h_n[0]

    # ----------------------- Decoder LSTM (E -> 2E) -----------------------
    # Decoder input row s is h_enc[s % B]: only B distinct rows, so project
    # them once (bias folded in) and index inside the unrolled loop.
    dec_w_hh = dec_w_hh_ref[...]                       # hoisted, loop-invariant
    gproj = (
        jnp.dot(h_enc, dec_w_ih_ref[...], preferred_element_type=jnp.float32)
        + dec_b_ref[...]
    )                                                  # (B, 4H)

    hd = jnp.zeros((1, H), jnp.float32)
    cd = jnp.zeros((1, H), jnp.float32)
    for s in range(S):                                 # fully unrolled (S small)
        b = s % B                                      # static index
        gates = gproj[b:b + 1, :] + jnp.dot(
            hd, dec_w_hh, preferred_element_type=jnp.float32
        )
        i, f, g, o = gate_split(gates, H)
        cd = f * cd + i * g
        hd = o * jnp.tanh(cd)
        hseq_ref[s:s + 1, :] = hd                      # VMEM scratch, static row

    # ----------------------- Output Linear (2E -> F) -----------------------
    # One lane-dense (B*T, F) = (16, 128) matmul + single store to the output.
    y = (
        jnp.dot(hseq_ref[...], out_w_ref[...], preferred_element_type=jnp.float32)
        + out_b_ref[...]
    )
    o_ref[0] = y                                       # (1, B*T, F)


# ---------------------------------------------------------------------------
# Wrapper: one pallas_call, no XLA glue
# ---------------------------------------------------------------------------
@jax.jit
def recurrent_autoencoder_forward(x, params):
    """x: (B, T, F) -> (1, B*T, F), matching the PyTorch module exactly."""
    B, T, F = x.shape
    H = params["dec_w_hh"].shape[0]
    S = B * T
    return pl.pallas_call(
        fused_autoencoder_kernel,
        out_shape=jax.ShapeDtypeStruct((1, S, F), jnp.float32),
        in_specs=[VMEM_SPEC] * 9,
        out_specs=VMEM_SPEC,
        scratch_shapes=[pltpu.VMEM((S, H), jnp.float32)],
    )(
        x,
        params["enc_w_ih"], params["enc_w_hh"], params["enc_b"],
        params["dec_w_ih"], params["dec_w_hh"], params["dec_b"],
        params["out_w"], params["out_b"],
    )


# ---------------------------------------------------------------------------
# Pure-JAX reference (for correctness check)
# ---------------------------------------------------------------------------
def _lstm_ref(xs_tm, w_ih, w_hh, b, hidden):
    B = xs_tm.shape[1]

    def step(carry, x_t):
        h, c = carry
        g = x_t @ w_ih + h @ w_hh + b
        i = jax.nn.sigmoid(g[:, :hidden])
        f = jax.nn.sigmoid(g[:, hidden:2 * hidden])
        gg = jnp.tanh(g[:, 2 * hidden:3 * hidden])
        o = jax.nn.sigmoid(g[:, 3 * hidden:])
        c = f * c + i * gg
        h = o * jnp.tanh(c)
        return (h, c), h

    init = (jnp.zeros((B, hidden), jnp.float32), jnp.zeros((B, hidden), jnp.float32))
    (h_T, _), hs = lax.scan(step, init, xs_tm)
    return h_T, hs


def reference_forward(x, params, E):
    B, T, _ = x.shape
    x_tm = jnp.transpose(x, (1, 0, 2))
    h_enc, _ = _lstm_ref(x_tm, params["enc_w_ih"], params["enc_w_hh"], params["enc_b"], E)
    x_dec = jnp.tile(h_enc, (T, 1))[:, None, :]        # (B*T, 1, E), batch 1
    _, h_seq = _lstm_ref(x_dec, params["dec_w_ih"], params["dec_w_hh"], params["dec_b"], 2 * E)
    h_seq = h_seq[:, 0, :]                             # (B*T, 2E)
    y = h_seq @ params["out_w"] + params["out_b"]
    return y[None, :, :]


# ---------------------------------------------------------------------------
# Params + main
# ---------------------------------------------------------------------------
def init_params(key, n_features, embedding_dim):
    E = embedding_dim
    F = n_features
    H = 2 * E
    ks = jax.random.split(key, 8)

    def u(k, shape, scale):
        return jax.random.uniform(k, shape, jnp.float32, -scale, scale)

    s_enc = 1.0 / (E ** 0.5)
    s_dec = 1.0 / (H ** 0.5)
    return {
        # encoder LSTM: input F -> hidden E (weights stored transposed: (in, 4*hid))
        "enc_w_ih": u(ks[0], (F, 4 * E), s_enc),
        "enc_w_hh": u(ks[1], (E, 4 * E), s_enc),
        "enc_b":    u(ks[2], (1, 4 * E), s_enc),   # b_ih + b_hh folded together
        # decoder LSTM: input E -> hidden 2E
        "dec_w_ih": u(ks[3], (E, 4 * H), s_dec),
        "dec_w_hh": u(ks[4], (H, 4 * H), s_dec),
        "dec_b":    u(ks[5], (1, 4 * H), s_dec),
        # output Linear: 2E -> F
        "out_w":    u(ks[6], (H, F), s_dec),
        "out_b":    u(ks[7], (1, F), s_dec),
    }


if __name__ == "__main__":
    B, T = 2, 8
    n_features = 128
    embedding_dim = 32

    key = jax.random.PRNGKey(0)
    k_x, k_p = jax.random.split(key)
    x = jax.random.normal(k_x, (B, T, n_features), jnp.float32)
    params = init_params(k_p, n_features, embedding_dim)

    out = recurrent_autoencoder_forward(x, params)
    out = jax.block_until_ready(out)

    assert out.shape == (1, B * T, n_features), out.shape

    ref = reference_forward(x, params, embedding_dim)
    assert jnp.allclose(out, ref, atol=2e-4, rtol=2e-4), (
        float(jnp.max(jnp.abs(out - ref)))
    )

    print("KERNEL_OK")
</pallas_src>

<mosaic_0001>
module attributes {stable_mosaic.version = 11 : i64} {
  func.func @fused_autoencoder_kernel(%arg0: memref<2x8x128xf32, #tpu.memory_space<vmem>>, %arg1: memref<128x128xf32, #tpu.memory_space<vmem>>, %arg2: memref<32x128xf32, #tpu.memory_space<vmem>>, %arg3: memref<1x128xf32, #tpu.memory_space<vmem>>, %arg4: memref<32x256xf32, #tpu.memory_space<vmem>>, %arg5: memref<64x256xf32, #tpu.memory_space<vmem>>, %arg6: memref<1x256xf32, #tpu.memory_space<vmem>>, %arg7: memref<64x128xf32, #tpu.memory_space<vmem>>, %arg8: memref<1x128xf32, #tpu.memory_space<vmem>>, %arg9: memref<1x16x128xf32, #tpu.memory_space<vmem>>, %arg10: memref<16x64xf32, #tpu.memory_space<vmem>>) attributes {dimension_semantics = [], scalar_prefetch = 0 : i64, scratch_operands = 1 : i64, tpu.core_type = #tpu.core_type<tc>} {
    %c0 = arith.constant 0 : index
    %c0_0 = arith.constant 0 : index
    %0 = vector.load %arg2[%c0, %c0_0] : memref<32x128xf32, #tpu.memory_space<vmem>>, vector<32x128xf32>
    %c0_1 = arith.constant 0 : index
    %c0_2 = arith.constant 0 : index
    %c0_3 = arith.constant 0 : index
    %1 = vector.load %arg0[%c0_1, %c0_2, %c0_3] : memref<2x8x128xf32, #tpu.memory_space<vmem>>, vector<2x8x128xf32>
    %2 = vector.shape_cast %1 : vector<2x8x128xf32> to vector<16x128xf32>
    %c0_4 = arith.constant 0 : index
    %c0_5 = arith.constant 0 : index
    %3 = vector.load %arg1[%c0_4, %c0_5] : memref<128x128xf32, #tpu.memory_space<vmem>>, vector<128x128xf32>
    %cst = arith.constant dense<0.000000e+00> : vector<16x128xf32>
    %4 = tpu.matmul %2, %3, %cst {dimension_numbers = #tpu.dot_dimension_numbers<[1], [0], [0], [1], [0, 0, 1, 1], [], []>} : vector<16x128xf32>, vector<128x128xf32>, vector<16x128xf32> -> vector<16x128xf32>
    %c0_6 = arith.constant 0 : index
    %c0_7 = arith.constant 0 : index
    %5 = vector.load %arg3[%c0_6, %c0_7] : memref<1x128xf32, #tpu.memory_space<vmem>>, vector<1x128xf32>
    %6 = vector.broadcast %5 : vector<1x128xf32> to vector<16x128xf32>
    %7 = arith.addf %4, %6 : vector<16x128xf32>
    %8 = vector.shape_cast %7 : vector<16x128xf32> to vector<2x8x128xf32>
    %cst_8 = arith.constant 0.000000e+00 : f32
    %9 = vector.broadcast %cst_8 : f32 to vector<2x32xf32>
    %cst_9 = arith.constant 0.000000e+00 : f32
    %10 = vector.broadcast %cst_9 : f32 to vector<2x32xf32>
    %11 = vector.extract_strided_slice %8 {offsets = [0, 0, 0], sizes = [2, 1, 128], strides = [1, 1, 1]} : vector<2x8x128xf32> to vector<2x1x128xf32>
    %12 = vector.shape_cast %11 : vector<2x1x128xf32> to vector<2x128xf32>
    %cst_10 = arith.constant dense<0.000000e+00> : vector<2x128xf32>
    %13 = tpu.matmul %9, %0, %cst_10 {dimension_numbers = #tpu.dot_dimension_numbers<[1], [0], [0], [1], [0, 0, 1, 1], [], []>} : vector<2x32xf32>, vector<32x128xf32>, vector<2x128xf32> -> vector<2x128xf32>
    %14 = arith.addf %12, %13 : vector<2x128xf32>
    %15 = vector.extract_strided_slice %14 {offsets = [0, 0], sizes = [2, 32], strides = [1, 1]} : vector<2x128xf32> to vector<2x32xf32>
    %16 = arith.negf %15 : vector<2x32xf32>
    %17 = math.exp %16 : vector<2x32xf32>
    %cst_11 = arith.constant 1.000000e+00 : f32
    %18 = vector.broadcast %cst_11 : f32 to vector<2x32xf32>
    %19 = arith.addf %18, %17 : vector<2x32xf32>
    %20 = arith.divf %18, %19 : vector<2x32xf32>
    %21 = vector.extract_strided_slice %14 {offsets = [0, 32], sizes = [2, 32], strides = [1, 1]} : vector<2x128xf32> to vector<2x32xf32>
    %22 = arith.negf %21 : vector<2x32xf32>
    %23 = math.exp %22 : vector<2x32xf32>
    %cst_12 = arith.constant 1.000000e+00 : f32
    %24 = vector.broadcast %cst_12 : f32 to vector<2x32xf32>
    %25 = arith.addf %24, %23 : vector<2x32xf32>
    %26 = arith.divf %24, %25 : vector<2x32xf32>
    %27 = vector.extract_strided_slice %14 {offsets = [0, 64], sizes = [2, 32], strides = [1, 1]} : vector<2x128xf32> to vector<2x32xf32>
    %28 = math.tanh %27 : vector<2x32xf32>
    %29 = vector.extract_strided_slice %14 {offsets = [0, 96], sizes = [2, 32], strides = [1, 1]} : vector<2x128xf32> to vector<2x32xf32>
    %30 = arith.negf %29 : vector<2x32xf32>
    %31 = math.exp %30 : vector<2x32xf32>
    %cst_13 = arith.constant 1.000000e+00 : f32
    %32 = vector.broadcast %cst_13 : f32 to vector<2x32xf32>
    %33 = arith.addf %32, %31 : vector<2x32xf32>
    %34 = arith.divf %32, %33 : vector<2x32xf32>
    %35 = arith.mulf %26, %10 : vector<2x32xf32>
    %36 = arith.mulf %20, %28 : vector<2x32xf32>
    %37 = arith.addf %35, %36 : vector<2x32xf32>
    %38 = math.tanh %37 : vector<2x32xf32>
    %39 = arith.mulf %34, %38 : vector<2x32xf32>
    %40 = vector.extract_strided_slice %8 {offsets = [0, 1, 0], sizes = [2, 1, 128], strides = [1, 1, 1]} : vector<2x8x128xf32> to vector<2x1x128xf32>
    %41 = vector.shape_cast %40 : vector<2x1x128xf32> to vector<2x128xf32>
    %cst_14 = arith.constant dense<0.000000e+00> : vector<2x128xf32>
    %42 = tpu.matmul %39, %0, %cst_14 {dimension_numbers = #tpu.dot_dimension_numbers<[1], [0], [0], [1], [0, 0, 1, 1], [], []>} : vector<2x32xf32>, vector<32x128xf32>, vector<2x128xf32> -> vector<2x128xf32>
    %43 = arith.addf %41, %42 : vector<2x128xf32>
    %44 = vector.extract_strided_slice %43 {offsets = [0, 0], sizes = [2, 32], strides = [1, 1]} : vector<2x128xf32> to vector<2x32xf32>
    %45 = arith.negf %44 : vector<2x32xf32>
    %46 = math.exp %45 : vector<2x32xf32>
    %cst_15 = arith.constant 1.000000e+00 : f32
    %47 = vector.broadcast %cst_15 : f32 to vector<2x32xf32>
    %48 = arith.addf %47, %46 : vector<2x32xf32>
    %49 = arith.divf %47, %48 : vector<2x32xf32>
    %50 = vector.extract_strided_slice %43 {offsets = [0, 32], sizes = [2, 32], strides = [1, 1]} : vector<2x128xf32> to vector<2x32xf32>
    %51 = arith.negf %50 : vector<2x32xf32>
    %52 = math.exp %51 : vector<2x32xf32>
    %cst_16 = arith.constant 1.000000e+00 : f32
    %53 = vector.broadcast %cst_16 : f32 to vector<2x32xf32>
    %54 = arith.addf %53, %52 : vector<2x32xf32>
    %55 = arith.divf %53, %54 : vector<2x32xf32>
    %56 = vector.extract_strided_slice %43 {offsets = [0, 64], sizes = [2, 32], strides = [1, 1]} : vector<2x128xf32> to vector<2x32xf32>
    %57 = math.tanh %56 : vector<2x32xf32>
    %58 = vector.extract_strided_slice %43 {offsets = [0, 96], sizes = [2, 32], strides = [1, 1]} : vector<2x128xf32> to vector<2x32xf32>
    %59 = arith.negf %58 : vector<2x32xf32>
    %60 = math.exp %59 : vector<2x32xf32>
    %cst_17 = arith.constant 1.000000e+00 : f32
    %61 = vector.broadcast %cst_17 : f32 to vector<2x32xf32>
    %62 = arith.addf %61, %60 : vector<2x32xf32>
    %63 = arith.divf %61, %62 : vector<2x32xf32>
    %64 = arith.mulf %55, %37 : vector<2x32xf32>
    %65 = arith.mulf %49, %57 : vector<2x32xf32>
    %66 = arith.addf %64, %65 : vector<2x32xf32>
    %67 = math.tanh %66 : vector<2x32xf32>
    %68 = arith.mulf %63, %67 : vector<2x32xf32>
    %69 = vector.extract_strided_slice %8 {offsets = [0, 2, 0], sizes = [2, 1, 128], strides = [1, 1, 1]} : vector<2x8x128xf32> to vector<2x1x128xf32>
    %70 = vector.shape_cast %69 : vector<2x1x128xf32> to vector<2x128xf32>
    %cst_18 = arith.constant dense<0.000000e+00> : vector<2x128xf32>
    %71 = tpu.matmul %68, %0, %cst_18 {dimension_numbers = #tpu.dot_dimension_numbers<[1], [0], [0], [1], [0, 0, 1, 1], [], []>} : vector<2x32xf32>, vector<32x128xf32>, vector<2x128xf32> -> vector<2x128xf32>
    %72 = arith.addf %70, %71 : vector<2x128xf32>
    %73 = vector.extract_strided_slice %72 {offsets = [0, 0], sizes = [2, 32], strides = [1, 1]} : vector<2x128xf32> to vector<2x32xf32>
    %74 = arith.negf %73 : vector<2x32xf32>
    %75 = math.exp %74 : vector<2x32xf32>
    %cst_19 = arith.constant 1.000000e+00 : f32
    %76 = vector.broadcast %cst_19 : f32 to vector<2x32xf32>
    %77 = arith.addf %76, %75 : vector<2x32xf32>
    %78 = arith.divf %76, %77 : vector<2x32xf32>
    %79 = vector.extract_strided_slice %72 {offsets = [0, 32], sizes = [2, 32], strides = [1, 1]} : vector<2x128xf32> to vector<2x32xf32>
    %80 = arith.negf %79 : vector<2x32xf32>
    %81 = math.exp %80 : vector<2x32xf32>
    %cst_20 = arith.constant 1.000000e+00 : f32
    %82 = vector.broadcast %cst_20 : f32 to vector<2x32xf32>
    %83 = arith.addf %82, %81 : vector<2x32xf32>
    %84 = arith.divf %82, %83 : vector<2x32xf32>
    %85 = vector.extract_strided_slice %72 {offsets = [0, 64], sizes = [2, 32], strides = [1, 1]} : vector<2x128xf32> to vector<2x32xf32>
    %86 = math.tanh %85 : vector<2x32xf32>
    %87 = vector.extract_strided_slice %72 {offsets = [0, 96], sizes = [2, 32], strides = [1, 1]} : vector<2x128xf32> to vector<2x32xf32>
    %88 = arith.negf %87 : vector<2x32xf32>
    %89 = math.exp %88 : vector<2x32xf32>
    %cst_21 = arith.constant 1.000000e+00 : f32
    %90 = vector.broadcast %cst_21 : f32 to vector<2x32xf32>
    %91 = arith.addf %90, %89 : vector<2x32xf32>
    %92 = arith.divf %90, %91 : vector<2x32xf32>
    %93 = arith.mulf %84, %66 : vector<2x32xf32>
    %94 = arith.mulf %78, %86 : vector<2x32xf32>
    %95 = arith.addf %93, %94 : vector<2x32xf32>
    %96 = math.tanh %95 : vector<2x32xf32>
    %97 = arith.mulf %92, %96 : vector<2x32xf32>
    %98 = vector.extract_strided_slice %8 {offsets = [0, 3, 0], sizes = [2, 1, 128], strides = [1, 1, 1]} : vector<2x8x128xf32> to vector<2x1x128xf32>
    %99 = vector.shape_cast %98 : vector<2x1x128xf32> to vector<2x128xf32>
    %cst_22 = arith.constant dense<0.000000e+00> : vector<2x128xf32>
    %100 = tpu.matmul %97, %0, %cst_22 {dimension_numbers = #tpu.dot_dimension_numbers<[1], [0], [0], [1], [0, 0, 1, 1], [], []>} : vector<2x32xf32>, vector<32x128xf32>, vector<2x128xf32> -> vector<2x128xf32>
    %101 = arith.addf %99, %100 : vector<2x128xf32>
    %102 = vector.extract_strided_slice %101 {offsets = [0, 0], sizes = [2, 32], strides = [1, 1]} : vector<2x128xf32> to vector<2x32xf32>
    %103 = arith.negf %102 : vector<2x32xf32>
    %104 = math.exp %103 : vector<2x32xf32>
    %cst_23 = arith.constant 1.000000e+00 : f32
    %105 = vector.broadcast %cst_23 : f32 to vector<2x32xf32>
    %106 = arith.addf %105, %104 : vector<2x32xf32>
    %107 = arith.divf %105, %106 : vector<2x32xf32>
    %108 = vector.extract_strided_slice %101 {offsets = [0, 32], sizes = [2, 32], strides = [1, 1]} : vector<2x128xf32> to vector<2x32xf32>
    %109 = arith.negf %108 : vector<2x32xf32>
    %110 = math.exp %109 : vector<2x32xf32>
    %cst_24 = arith.constant 1.000000e+00 : f32
    %111 = vector.broadcast %cst_24 : f32 to vector<2x32xf32>
    %112 = arith.addf %111, %110 : vector<2x32xf32>
    %113 = arith.divf %111, %112 : vector<2x32xf32>
    %114 = vector.extract_strided_slice %101 {offsets = [0, 64], sizes = [2, 32], strides = [1, 1]} : vector<2x128xf32> to vector<2x32xf32>
    %115 = math.tanh %114 : vector<2x32xf32>
    %116 = vector.extract_strided_slice %101 {offsets = [0, 96], sizes = [2, 32], strides = [1, 1]} : vector<2x128xf32> to vector<2x32xf32>
    %117 = arith.negf %116 : vector<2x32xf32>
    %118 = math.exp %117 : vector<2x32xf32>
    %cst_25 = arith.constant 1.000000e+00 : f32
    %119 = vector.broadcast %cst_25 : f32 to vector<2x32xf32>
    %120 = arith.addf %119, %118 : vector<2x32xf32>
    %121 = arith.divf %119, %120 : vector<2x32xf32>
    %122 = arith.mulf %113, %95 : vector<2x32xf32>
    %123 = arith.mulf %107, %115 : vector<2x32xf32>
    %124 = arith.addf %122, %123 : vector<2x32xf32>
    %125 = math.tanh %124 : vector<2x32xf32>
    %126 = arith.mulf %121, %125 : vector<2x32xf32>
    %127 = vector.extract_strided_slice %8 {offsets = [0, 4, 0], sizes = [2, 1, 128], strides = [1, 1, 1]} : vector<2x8x128xf32> to vector<2x1x128xf32>
    %128 = vector.shape_cast %127 : vector<2x1x128xf32> to vector<2x128xf32>
    %cst_26 = arith.constant dense<0.000000e+00> : vector<2x128xf32>
    %129 = tpu.matmul %126, %0, %cst_26 {dimension_numbers = #tpu.dot_dimension_numbers<[1], [0], [0], [1], [0, 0, 1, 1], [], []>} : vector<2x32xf32>, vector<32x128xf32>, vector<2x128xf32> -> vector<2x128xf32>
    %130 = arith.addf %128, %129 : vector<2x128xf32>
    %131 = vector.extract_strided_slice %130 {offsets = [0, 0], sizes = [2, 32], strides = [1, 1]} : vector<2x128xf32> to vector<2x32xf32>
    %132 = arith.negf %131 : vector<2x32xf32>
    %133 = math.exp %132 : vector<2x32xf32>
    %cst_27 = arith.constant 1.000000e+00 : f32
    %134 = vector.broadcast %cst_27 : f32 to vector<2x32xf32>
    %135 = arith.addf %134, %133 : vector<2x32xf32>
    %136 = arith.divf %134, %135 : vector<2x32xf32>
    %137 = vector.extract_strided_slice %130 {offsets = [0, 32], sizes = [2, 32], strides = [1, 1]} : vector<2x128xf32> to vector<2x32xf32>
    %138 = arith.negf %137 : vector<2x32xf32>
    %139 = math.exp %138 : vector<2x32xf32>
    %cst_28 = arith.constant 1.000000e+00 : f32
    %140 = vector.broadcast %cst_28 : f32 to vector<2x32xf32>
    %141 = arith.addf %140, %139 : vector<2x32xf32>
    %142 = arith.divf %140, %141 : vector<2x32xf32>
    %143 = vector.extract_strided_slice %130 {offsets = [0, 64], sizes = [2, 32], strides = [1, 1]} : vector<2x128xf32> to vector<2x32xf32>
    %144 = math.tanh %143 : vector<2x32xf32>
    %145 = vector.extract_strided_slice %130 {offsets = [0, 96], sizes = [2, 32], strides = [1, 1]} : vector<2x128xf32> to vector<2x32xf32>
    %146 = arith.negf %145 : vector<2x32xf32>
    %147 = math.exp %146 : vector<2x32xf32>
    %cst_29 = arith.constant 1.000000e+00 : f32
    %148 = vector.broadcast %cst_29 : f32 to vector<2x32xf32>
    %149 = arith.addf %148, %147 : vector<2x32xf32>
    %150 = arith.divf %148, %149 : vector<2x32xf32>
    %151 = arith.mulf %142, %124 : vector<2x32xf32>
    %152 = arith.mulf %136, %144 : vector<2x32xf32>
    %153 = arith.addf %151, %152 : vector<2x32xf32>
    %154 = math.tanh %153 : vector<2x32xf32>
    %155 = arith.mulf %150, %154 : vector<2x32xf32>
    %156 = vector.extract_strided_slice %8 {offsets = [0, 5, 0], sizes = [2, 1, 128], strides = [1, 1, 1]} : vector<2x8x128xf32> to vector<2x1x128xf32>
    %157 = vector.shape_cast %156 : vector<2x1x128xf32> to vector<2x128xf32>
    %cst_30 = arith.constant dense<0.000000e+00> : vector<2x128xf32>
    %158 = tpu.matmul %155, %0, %cst_30 {dimension_numbers = #tpu.dot_dimension_numbers<[1], [0], [0], [1], [0, 0, 1, 1], [], []>} : vector<2x32xf32>, vector<32x128xf32>, vector<2x128xf32> -> vector<2x128xf32>
    %159 = arith.addf %157, %158 : vector<2x128xf32>
    %160 = vector.extract_strided_slice %159 {offsets = [0, 0], sizes = [2, 32], strides = [1, 1]} : vector<2x128xf32> to vector<2x32xf32>
    %161 = arith.negf %160 : vector<2x32xf32>
    %162 = math.exp %161 : vector<2x32xf32>
    %cst_31 = arith.constant 1.000000e+00 : f32
    %163 = vector.broadcast %cst_31 : f32 to vector<2x32xf32>
    %164 = arith.addf %163, %162 : vector<2x32xf32>
    %165 = arith.divf %163, %164 : vector<2x32xf32>
    %166 = vector.extract_strided_slice %159 {offsets = [0, 32], sizes = [2, 32], strides = [1, 1]} : vector<2x128xf32> to vector<2x32xf32>
    %167 = arith.negf %166 : vector<2x32xf32>
    %168 = math.exp %167 : vector<2x32xf32>
    %cst_32 = arith.constant 1.000000e+00 : f32
    %169 = vector.broadcast %cst_32 : f32 to vector<2x32xf32>
    %170 = arith.addf %169, %168 : vector<2x32xf32>
    %171 = arith.divf %169, %170 : vector<2x32xf32>
    %172 = vector.extract_strided_slice %159 {offsets = [0, 64], sizes = [2, 32], strides = [1, 1]} : vector<2x128xf32> to vector<2x32xf32>
    %173 = math.tanh %172 : vector<2x32xf32>
    %174 = vector.extract_strided_slice %159 {offsets = [0, 96], sizes = [2, 32], strides = [1, 1]} : vector<2x128xf32> to vector<2x32xf32>
    %175 = arith.negf %174 : vector<2x32xf32>
    %176 = math.exp %175 : vector<2x32xf32>
    %cst_33 = arith.constant 1.000000e+00 : f32
    %177 = vector.broadcast %cst_33 : f32 to vector<2x32xf32>
    %178 = arith.addf %177, %176 : vector<2x32xf32>
    %179 = arith.divf %177, %178 : vector<2x32xf32>
    %180 = arith.mulf %171, %153 : vector<2x32xf32>
    %181 = arith.mulf %165, %173 : vector<2x32xf32>
    %182 = arith.addf %180, %181 : vector<2x32xf32>
    %183 = math.tanh %182 : vector<2x32xf32>
    %184 = arith.mulf %179, %183 : vector<2x32xf32>
    %185 = vector.extract_strided_slice %8 {offsets = [0, 6, 0], sizes = [2, 1, 128], strides = [1, 1, 1]} : vector<2x8x128xf32> to vector<2x1x128xf32>
    %186 = vector.shape_cast %185 : vector<2x1x128xf32> to vector<2x128xf32>
    %cst_34 = arith.constant dense<0.000000e+00> : vector<2x128xf32>
    %187 = tpu.matmul %184, %0, %cst_34 {dimension_numbers = #tpu.dot_dimension_numbers<[1], [0], [0], [1], [0, 0, 1, 1], [], []>} : vector<2x32xf32>, vector<32x128xf32>, vector<2x128xf32> -> vector<2x128xf32>
    %188 = arith.addf %186, %187 : vector<2x128xf32>
    %189 = vector.extract_strided_slice %188 {offsets = [0, 0], sizes = [2, 32], strides = [1, 1]} : vector<2x128xf32> to vector<2x32xf32>
    %190 = arith.negf %189 : vector<2x32xf32>
    %191 = math.exp %190 : vector<2x32xf32>
    %cst_35 = arith.constant 1.000000e+00 : f32
    %192 = vector.broadcast %cst_35 : f32 to vector<2x32xf32>
    %193 = arith.addf %192, %191 : vector<2x32xf32>
    %194 = arith.divf %192, %193 : vector<2x32xf32>
    %195 = vector.extract_strided_slice %188 {offsets = [0, 32], sizes = [2, 32], strides = [1, 1]} : vector<2x128xf32> to vector<2x32xf32>
    %196 = arith.negf %195 : vector<2x32xf32>
    %197 = math.exp %196 : vector<2x32xf32>
    %cst_36 = arith.constant 1.000000e+00 : f32
    %198 = vector.broadcast %cst_36 : f32 to vector<2x32xf32>
    %199 = arith.addf %198, %197 : vector<2x32xf32>
    %200 = arith.divf %198, %199 : vector<2x32xf32>
    %201 = vector.extract_strided_slice %188 {offsets = [0, 64], sizes = [2, 32], strides = [1, 1]} : vector<2x128xf32> to vector<2x32xf32>
    %202 = math.tanh %201 : vector<2x32xf32>
    %203 = vector.extract_strided_slice %188 {offsets = [0, 96], sizes = [2, 32], strides = [1, 1]} : vector<2x128xf32> to vector<2x32xf32>
    %204 = arith.negf %203 : vector<2x32xf32>
    %205 = math.exp %204 : vector<2x32xf32>
    %cst_37 = arith.constant 1.000000e+00 : f32
    %206 = vector.broadcast %cst_37 : f32 to vector<2x32xf32>
    %207 = arith.addf %206, %205 : vector<2x32xf32>
    %208 = arith.divf %206, %207 : vector<2x32xf32>
    %209 = arith.mulf %200, %182 : vector<2x32xf32>
    %210 = arith.mulf %194, %202 : vector<2x32xf32>
    %211 = arith.addf %209, %210 : vector<2x32xf32>
    %212 = math.tanh %211 : vector<2x32xf32>
    %213 = arith.mulf %208, %212 : vector<2x32xf32>
    %214 = vector.extract_strided_slice %8 {offsets = [0, 7, 0], sizes = [2, 1, 128], strides = [1, 1, 1]} : vector<2x8x128xf32> to vector<2x1x128xf32>
    %215 = vector.shape_cast %214 : vector<2x1x128xf32> to vector<2x128xf32>
    %cst_38 = arith.constant dense<0.000000e+00> : vector<2x128xf32>
    %216 = tpu.matmul %213, %0, %cst_38 {dimension_numbers = #tpu.dot_dimension_numbers<[1], [0], [0], [1], [0, 0, 1, 1], [], []>} : vector<2x32xf32>, vector<32x128xf32>, vector<2x128xf32> -> vector<2x128xf32>
    %217 = arith.addf %215, %216 : vector<2x128xf32>
    %218 = vector.extract_strided_slice %217 {offsets = [0, 0], sizes = [2, 32], strides = [1, 1]} : vector<2x128xf32> to vector<2x32xf32>
    %219 = arith.negf %218 : vector<2x32xf32>
    %220 = math.exp %219 : vector<2x32xf32>
    %cst_39 = arith.constant 1.000000e+00 : f32
    %221 = vector.broadcast %cst_39 : f32 to vector<2x32xf32>
    %222 = arith.addf %221, %220 : vector<2x32xf32>
    %223 = arith.divf %221, %222 : vector<2x32xf32>
    %224 = vector.extract_strided_slice %217 {offsets = [0, 32], sizes = [2, 32], strides = [1, 1]} : vector<2x128xf32> to vector<2x32xf32>
    %225 = arith.negf %224 : vector<2x32xf32>
    %226 = math.exp %225 : vector<2x32xf32>
    %cst_40 = arith.constant 1.000000e+00 : f32
    %227 = vector.broadcast %cst_40 : f32 to vector<2x32xf32>
    %228 = arith.addf %227, %226 : vector<2x32xf32>
    %229 = arith.divf %227, %228 : vector<2x32xf32>
    %230 = vector.extract_strided_slice %217 {offsets = [0, 64], sizes = [2, 32], strides = [1, 1]} : vector<2x128xf32> to vector<2x32xf32>
    %231 = math.tanh %230 : vector<2x32xf32>
    %232 = vector.extract_strided_slice %217 {offsets = [0, 96], sizes = [2, 32], strides = [1, 1]} : vector<2x128xf32> to vector<2x32xf32>
    %233 = arith.negf %232 : vector<2x32xf32>
    %234 = math.exp %233 : vector<2x32xf32>
    %cst_41 = arith.constant 1.000000e+00 : f32
    %235 = vector.broadcast %cst_41 : f32 to vector<2x32xf32>
    %236 = arith.addf %235, %234 : vector<2x32xf32>
    %237 = arith.divf %235, %236 : vector<2x32xf32>
    %238 = arith.mulf %229, %211 : vector<2x32xf32>
    %239 = arith.mulf %223, %231 : vector<2x32xf32>
    %240 = arith.addf %238, %239 : vector<2x32xf32>
    %241 = math.tanh %240 : vector<2x32xf32>
    %242 = arith.mulf %237, %241 : vector<2x32xf32>
    %c0_42 = arith.constant 0 : index
    %c0_43 = arith.constant 0 : index
    %243 = vector.load %arg5[%c0_42, %c0_43] : memref<64x256xf32, #tpu.memory_space<vmem>>, vector<64x256xf32>
    %c0_44 = arith.constant 0 : index
    %c0_45 = arith.constant 0 : index
    %244 = vector.load %arg4[%c0_44, %c0_45] : memref<32x256xf32, #tpu.memory_space<vmem>>, vector<32x256xf32>
    %cst_46 = arith.constant dense<0.000000e+00> : vector<2x256xf32>
    %245 = tpu.matmul %242, %244, %cst_46 {dimension_numbers = #tpu.dot_dimension_numbers<[1], [0], [0], [1], [0, 0, 1, 1], [], []>} : vector<2x32xf32>, vector<32x256xf32>, vector<2x256xf32> -> vector<2x256xf32>
    %c0_47 = arith.constant 0 : index
    %c0_48 = arith.constant 0 : index
    %246 = vector.load %arg6[%c0_47, %c0_48] : memref<1x256xf32, #tpu.memory_space<vmem>>, vector<1x256xf32>
    %247 = vector.broadcast %246 : vector<1x256xf32> to vector<2x256xf32>
    %248 = arith.addf %245, %247 : vector<2x256xf32>
    %cst_49 = arith.constant 0.000000e+00 : f32
    %249 = vector.broadcast %cst_49 : f32 to vector<1x64xf32>
    %cst_50 = arith.constant 0.000000e+00 : f32
    %250 = vector.broadcast %cst_50 : f32 to vector<1x64xf32>
    %251 = vector.extract_strided_slice %248 {offsets = [0, 0], sizes = [1, 256], strides = [1, 1]} : vector<2x256xf32> to vector<1x256xf32>
    %cst_51 = arith.constant dense<0.000000e+00> : vector<1x256xf32>
    %252 = tpu.matmul %249, %243, %cst_51 {dimension_numbers = #tpu.dot_dimension_numbers<[1], [0], [0], [1], [0, 0, 1, 1], [], []>} : vector<1x64xf32>, vector<64x256xf32>, vector<1x256xf32> -> vector<1x256xf32>
    %253 = arith.addf %251, %252 : vector<1x256xf32>
    %254 = vector.extract_strided_slice %253 {offsets = [0, 0], sizes = [1, 64], strides = [1, 1]} : vector<1x256xf32> to vector<1x64xf32>
    %255 = arith.negf %254 : vector<1x64xf32>
    %256 = math.exp %255 : vector<1x64xf32>
    %cst_52 = arith.constant 1.000000e+00 : f32
    %257 = vector.broadcast %cst_52 : f32 to vector<1x64xf32>
    %258 = arith.addf %257, %256 : vector<1x64xf32>
    %259 = arith.divf %257, %258 : vector<1x64xf32>
    %260 = vector.extract_strided_slice %253 {offsets = [0, 64], sizes = [1, 64], strides = [1, 1]} : vector<1x256xf32> to vector<1x64xf32>
    %261 = arith.negf %260 : vector<1x64xf32>
    %262 = math.exp %261 : vector<1x64xf32>
    %cst_53 = arith.constant 1.000000e+00 : f32
    %263 = vector.broadcast %cst_53 : f32 to vector<1x64xf32>
    %264 = arith.addf %263, %262 : vector<1x64xf32>
    %265 = arith.divf %263, %264 : vector<1x64xf32>
    %266 = vector.extract_strided_slice %253 {offsets = [0, 128], sizes = [1, 64], strides = [1, 1]} : vector<1x256xf32> to vector<1x64xf32>
    %267 = math.tanh %266 : vector<1x64xf32>
    %268 = vector.extract_strided_slice %253 {offsets = [0, 192], sizes = [1, 64], strides = [1, 1]} : vector<1x256xf32> to vector<1x64xf32>
    %269 = arith.negf %268 : vector<1x64xf32>
    %270 = math.exp %269 : vector<1x64xf32>
    %cst_54 = arith.constant 1.000000e+00 : f32
    %271 = vector.broadcast %cst_54 : f32 to vector<1x64xf32>
    %272 = arith.addf %271, %270 : vector<1x64xf32>
    %273 = arith.divf %271, %272 : vector<1x64xf32>
    %274 = arith.mulf %265, %250 : vector<1x64xf32>
    %275 = arith.mulf %259, %267 : vector<1x64xf32>
    %276 = arith.addf %274, %275 : vector<1x64xf32>
    %277 = math.tanh %276 : vector<1x64xf32>
    %278 = arith.mulf %273, %277 : vector<1x64xf32>
    %c0_55 = arith.constant 0 : index
    %c0_56 = arith.constant 0 : index
    %279 = vector.load %arg10[%c0_55, %c0_56] : memref<16x64xf32, #tpu.memory_space<vmem>>, vector<1x64xf32>
    tpu.vector_store %arg10[%c0_55, %c0_56], %278 {strides = array<i32>} : memref<16x64xf32, #tpu.memory_space<vmem>>, vector<1x64xf32>,
    %280 = vector.extract_strided_slice %248 {offsets = [1, 0], sizes = [1, 256], strides = [1, 1]} : vector<2x256xf32> to vector<1x256xf32>
    %cst_57 = arith.constant dense<0.000000e+00> : vector<1x256xf32>
    %281 = tpu.matmul %278, %243, %cst_57 {dimension_numbers = #tpu.dot_dimension_numbers<[1], [0], [0], [1], [0, 0, 1, 1], [], []>} : vector<1x64xf32>, vector<64x256xf32>, vector<1x256xf32> -> vector<1x256xf32>
    %282 = arith.addf %280, %281 : vector<1x256xf32>
    %283 = vector.extract_strided_slice %282 {offsets = [0, 0], sizes = [1, 64], strides = [1, 1]} : vector<1x256xf32> to vector<1x64xf32>
    %284 = arith.negf %283 : vector<1x64xf32>
    %285 = math.exp %284 : vector<1x64xf32>
    %cst_58 = arith.constant 1.000000e+00 : f32
    %286 = vector.broadcast %cst_58 : f32 to vector<1x64xf32>
    %287 = arith.addf %286, %285 : vector<1x64xf32>
    %288 = arith.divf %286, %287 : vector<1x64xf32>
    %289 = vector.extract_strided_slice %282 {offsets = [0, 64], sizes = [1, 64], strides = [1, 1]} : vector<1x256xf32> to vector<1x64xf32>
    %290 = arith.negf %289 : vector<1x64xf32>
    %291 = math.exp %290 : vector<1x64xf32>
    %cst_59 = arith.constant 1.000000e+00 : f32
    %292 = vector.broadcast %cst_59 : f32 to vector<1x64xf32>
    %293 = arith.addf %292, %291 : vector<1x64xf32>
    %294 = arith.divf %292, %293 : vector<1x64xf32>
    %295 = vector.extract_strided_slice %282 {offsets = [0, 128], sizes = [1, 64], strides = [1, 1]} : vector<1x256xf32> to vector<1x64xf32>
    %296 = math.tanh %295 : vector<1x64xf32>
    %297 = vector.extract_strided_slice %282 {offsets = [0, 192], sizes = [1, 64], strides = [1, 1]} : vector<1x256xf32> to vector<1x64xf32>
    %298 = arith.negf %297 : vector<1x64xf32>
    %299 = math.exp %298 : vector<1x64xf32>
    %cst_60 = arith.constant 1.000000e+00 : f32
    %300 = vector.broadcast %cst_60 : f32 to vector<1x64xf32>
    %301 = arith.addf %300, %299 : vector<1x64xf32>
    %302 = arith.divf %300, %301 : vector<1x64xf32>
    %303 = arith.mulf %294, %276 : vector<1x64xf32>
    %304 = arith.mulf %288, %296 : vector<1x64xf32>
    %305 = arith.addf %303, %304 : vector<1x64xf32>
    %306 = math.tanh %305 : vector<1x64xf32>
    %307 = arith.mulf %302, %306 : vector<1x64xf32>
    %c1 = arith.constant 1 : index
    %c0_61 = arith.constant 0 : index
    %308 = vector.load %arg10[%c1, %c0_61] : memref<16x64xf32, #tpu.memory_space<vmem>>, vector<1x64xf32>
    tpu.vector_store %arg10[%c1, %c0_61], %307 {strides = array<i32>} : memref<16x64xf32, #tpu.memory_space<vmem>>, vector<1x64xf32>,
    %309 = vector.extract_strided_slice %248 {offsets = [0, 0], sizes = [1, 256], strides = [1, 1]} : vector<2x256xf32> to vector<1x256xf32>
    %cst_62 = arith.constant dense<0.000000e+00> : vector<1x256xf32>
    %310 = tpu.matmul %307, %243, %cst_62 {dimension_numbers = #tpu.dot_dimension_numbers<[1], [0], [0], [1], [0, 0, 1, 1], [], []>} : vector<1x64xf32>, vector<64x256xf32>, vector<1x256xf32> -> vector<1x256xf32>
    %311 = arith.addf %309, %310 : vector<1x256xf32>
    %312 = vector.extract_strided_slice %311 {offsets = [0, 0], sizes = [1, 64], strides = [1, 1]} : vector<1x256xf32> to vector<1x64xf32>
    %313 = arith.negf %312 : vector<1x64xf32>
    %314 = math.exp %313 : vector<1x64xf32>
    %cst_63 = arith.constant 1.000000e+00 : f32
    %315 = vector.broadcast %cst_63 : f32 to vector<1x64xf32>
    %316 = arith.addf %315, %314 : vector<1x64xf32>
    %317 = arith.divf %315, %316 : vector<1x64xf32>
    %318 = vector.extract_strided_slice %311 {offsets = [0, 64], sizes = [1, 64], strides = [1, 1]} : vector<1x256xf32> to vector<1x64xf32>
    %319 = arith.negf %318 : vector<1x64xf32>
    %320 = math.exp %319 : vector<1x64xf32>
    %cst_64 = arith.constant 1.000000e+00 : f32
    %321 = vector.broadcast %cst_64 : f32 to vector<1x64xf32>
    %322 = arith.addf %321, %320 : vector<1x64xf32>
    %323 = arith.divf %321, %322 : vector<1x64xf32>
    %324 = vector.extract_strided_slice %311 {offsets = [0, 128], sizes = [1, 64], strides = [1, 1]} : vector<1x256xf32> to vector<1x64xf32>
    %325 = math.tanh %324 : vector<1x64xf32>
    %326 = vector.extract_strided_slice %311 {offsets = [0, 192], sizes = [1, 64], strides = [1, 1]} : vector<1x256xf32> to vector<1x64xf32>
    %327 = arith.negf %326 : vector<1x64xf32>
    %328 = math.exp %327 : vector<1x64xf32>
    %cst_65 = arith.constant 1.000000e+00 : f32
    %329 = vector.broadcast %cst_65 : f32 to vector<1x64xf32>
    %330 = arith.addf %329, %328 : vector<1x64xf32>
    %331 = arith.divf %329, %330 : vector<1x64xf32>
    %332 = arith.mulf %323, %305 : vector<1x64xf32>
    %333 = arith.mulf %317, %325 : vector<1x64xf32>
    %334 = arith.addf %332, %333 : vector<1x64xf32>
    %335 = math.tanh %334 : vector<1x64xf32>
    %336 = arith.mulf %331, %335 : vector<1x64xf32>
    %c2 = arith.constant 2 : index
    %c0_66 = arith.constant 0 : index
    %337 = vector.load %arg10[%c2, %c0_66] : memref<16x64xf32, #tpu.memory_space<vmem>>, vector<1x64xf32>
    tpu.vector_store %arg10[%c2, %c0_66], %336 {strides = array<i32>} : memref<16x64xf32, #tpu.memory_space<vmem>>, vector<1x64xf32>,
    %338 = vector.extract_strided_slice %248 {offsets = [1, 0], sizes = [1, 256], strides = [1, 1]} : vector<2x256xf32> to vector<1x256xf32>
    %cst_67 = arith.constant dense<0.000000e+00> : vector<1x256xf32>
    %339 = tpu.matmul %336, %243, %cst_67 {dimension_numbers = #tpu.dot_dimension_numbers<[1], [0], [0], [1], [0, 0, 1, 1], [], []>} : vector<1x64xf32>, vector<64x256xf32>, vector<1x256xf32> -> vector<1x256xf32>
    %340 = arith.addf %338, %339 : vector<1x256xf32>
    %341 = vector.extract_strided_slice %340 {offsets = [0, 0], sizes = [1, 64], strides = [1, 1]} : vector<1x256xf32> to vector<1x64xf32>
    %342 = arith.negf %341 : vector<1x64xf32>
    %343 = math.exp %342 : vector<1x64xf32>
    %cst_68 = arith.constant 1.000000e+00 : f32
    %344 = vector.broadcast %cst_68 : f32 to vector<1x64xf32>
    %345 = arith.addf %344, %343 : vector<1x64xf32>
    %346 = arith.divf %344, %345 : vector<1x64xf32>
    %347 = vector.extract_strided_slice %340 {offsets = [0, 64], sizes = [1, 64], strides = [1, 1]} : vector<1x256xf32> to vector<1x64xf32>
    %348 = arith.negf %347 : vector<1x64xf32>
    %349 = math.exp %348 : vector<1x64xf32>
    %cst_69 = arith.constant 1.000000e+00 : f32
    %350 = vector.broadcast %cst_69 : f32 to vector<1x64xf32>
    %351 = arith.addf %350, %349 : vector<1x64xf32>
    %352 = arith.divf %350, %351 : vector<1x64xf32>
    %353 = vector.extract_strided_slice %340 {offsets = [0, 128], sizes = [1, 64], strides = [1, 1]} : vector<1x256xf32> to vector<1x64xf32>
    %354 = math.tanh %353 : vector<1x64xf32>
    %355 = vector.extract_strided_slice %340 {offsets = [0, 192], sizes = [1, 64], strides = [1, 1]} : vector<1x256xf32> to vector<1x64xf32>
    %356 = arith.negf %355 : vector<1x64xf32>
    %357 = math.exp %356 : vector<1x64xf32>
    %cst_70 = arith.constant 1.000000e+00 : f32
    %358 = vector.broadcast %cst_70 : f32 to vector<1x64xf32>
    %359 = arith.addf %358, %357 : vector<1x64xf32>
    %360 = arith.divf %358, %359 : vector<1x64xf32>
    %361 = arith.mulf %352, %334 : vector<1x64xf32>
    %362 = arith.mulf %346, %354 : vector<1x64xf32>
    %363 = arith.addf %361, %362 : vector<1x64xf32>
    %364 = math.tanh %363 : vector<1x64xf32>
    %365 = arith.mulf %360, %364 : vector<1x64xf32>
    %c3 = arith.constant 3 : index
    %c0_71 = arith.constant 0 : index
    %366 = vector.load %arg10[%c3, %c0_71] : memref<16x64xf32, #tpu.memory_space<vmem>>, vector<1x64xf32>
    tpu.vector_store %arg10[%c3, %c0_71], %365 {strides = array<i32>} : memref<16x64xf32, #tpu.memory_space<vmem>>, vector<1x64xf32>,
    %367 = vector.extract_strided_slice %248 {offsets = [0, 0], sizes = [1, 256], strides = [1, 1]} : vector<2x256xf32> to vector<1x256xf32>
    %cst_72 = arith.constant dense<0.000000e+00> : vector<1x256xf32>
    %368 = tpu.matmul %365, %243, %cst_72 {dimension_numbers = #tpu.dot_dimension_numbers<[1], [0], [0], [1], [0, 0, 1, 1], [], []>} : vector<1x64xf32>, vector<64x256xf32>, vector<1x256xf32> -> vector<1x256xf32>
    %369 = arith.addf %367, %368 : vector<1x256xf32>
    %370 = vector.extract_strided_slice %369 {offsets = [0, 0], sizes = [1, 64], strides = [1, 1]} : vector<1x256xf32> to vector<1x64xf32>
    %371 = arith.negf %370 : vector<1x64xf32>
    %372 = math.exp %371 : vector<1x64xf32>
    %cst_73 = arith.constant 1.000000e+00 : f32
    %373 = vector.broadcast %cst_73 : f32 to vector<1x64xf32>
    %374 = arith.addf %373, %372 : vector<1x64xf32>
    %375 = arith.divf %373, %374 : vector<1x64xf32>
    %376 = vector.extract_strided_slice %369 {offsets = [0, 64], sizes = [1, 64], strides = [1, 1]} : vector<1x256xf32> to vector<1x64xf32>
    %377 = arith.negf %376 : vector<1x64xf32>
    %378 = math.exp %377 : vector<1x64xf32>
    %cst_74 = arith.constant 1.000000e+00 : f32
    %379 = vector.broadcast %cst_74 : f32 to vector<1x64xf32>
    %380 = arith.addf %379, %378 : vector<1x64xf32>
    %381 = arith.divf %379, %380 : vector<1x64xf32>
    %382 = vector.extract_strided_slice %369 {offsets = [0, 128], sizes = [1, 64], strides = [1, 1]} : vector<1x256xf32> to vector<1x64xf32>
    %383 = math.tanh %382 : vector<1x64xf32>
    %384 = vector.extract_strided_slice %369 {offsets = [0, 192], sizes = [1, 64], strides = [1, 1]} : vector<1x256xf32> to vector<1x64xf32>
    %385 = arith.negf %384 : vector<1x64xf32>
    %386 = math.exp %385 : vector<1x64xf32>
    %cst_75 = arith.constant 1.000000e+00 : f32
    %387 = vector.broadcast %cst_75 : f32 to vector<1x64xf32>
    %388 = arith.addf %387, %386 : vector<1x64xf32>
    %389 = arith.divf %387, %388 : vector<1x64xf32>
    %390 = arith.mulf %381, %363 : vector<1x64xf32>
    %391 = arith.mulf %375, %383 : vector<1x64xf32>
    %392 = arith.addf %390, %391 : vector<1x64xf32>
    %393 = math.tanh %392 : vector<1x64xf32>
    %394 = arith.mulf %389, %393 : vector<1x64xf32>
    %c4 = arith.constant 4 : index
    %c0_76 = arith.constant 0 : index
    %395 = vector.load %arg10[%c4, %c0_76] : memref<16x64xf32, #tpu.memory_space<vmem>>, vector<1x64xf32>
    tpu.vector_store %arg10[%c4, %c0_76], %394 {strides = array<i32>} : memref<16x64xf32, #tpu.memory_space<vmem>>, vector<1x64xf32>,
    %396 = vector.extract_strided_slice %248 {offsets = [1, 0], sizes = [1, 256], strides = [1, 1]} : vector<2x256xf32> to vector<1x256xf32>
    %cst_77 = arith.constant dense<0.000000e+00> : vector<1x256xf32>
    %397 = tpu.matmul %394, %243, %cst_77 {dimension_numbers = #tpu.dot_dimension_numbers<[1], [0], [0], [1], [0, 0, 1, 1], [], []>} : vector<1x64xf32>, vector<64x256xf32>, vector<1x256xf32> -> vector<1x256xf32>
    %398 = arith.addf %396, %397 : vector<1x256xf32>
    %399 = vector.extract_strided_slice %398 {offsets = [0, 0], sizes = [1, 64], strides = [1, 1]} : vector<1x256xf32> to vector<1x64xf32>
    %400 = arith.negf %399 : vector<1x64xf32>
    %401 = math.exp %400 : vector<1x64xf32>
    %cst_78 = arith.constant 1.000000e+00 : f32
    %402 = vector.broadcast %cst_78 : f32 to vector<1x64xf32>
    %403 = arith.addf %402, %401 : vector<1x64xf32>
    %404 = arith.divf %402, %403 : vector<1x64xf32>
    %405 = vector.extract_strided_slice %398 {offsets = [0, 64], sizes = [1, 64], strides = [1, 1]} : vector<1x256xf32> to vector<1x64xf32>
    %406 = arith.negf %405 : vector<1x64xf32>
    %407 = math.exp %406 : vector<1x64xf32>
    %cst_79 = arith.constant 1.000000e+00 : f32
    %408 = vector.broadcast %cst_79 : f32 to vector<1x64xf32>
    %409 = arith.addf %408, %407 : vector<1x64xf32>
    %410 = arith.divf %408, %409 : vector<1x64xf32>
    %411 = vector.extract_strided_slice %398 {offsets = [0, 128], sizes = [1, 64], strides = [1, 1]} : vector<1x256xf32> to vector<1x64xf32>
    %412 = math.tanh %411 : vector<1x64xf32>
    %413 = vector.extract_strided_slice %398 {offsets = [0, 192], sizes = [1, 64], strides = [1, 1]} : vector<1x256xf32> to vector<1x64xf32>
    %414 = arith.negf %413 : vector<1x64xf32>
    %415 = math.exp %414 : vector<1x64xf32>
    %cst_80 = arith.constant 1.000000e+00 : f32
    %416 = vector.broadcast %cst_80 : f32 to vector<1x64xf32>
    %417 = arith.addf %416, %415 : vector<1x64xf32>
    %418 = arith.divf %416, %417 : vector<1x64xf32>
    %419 = arith.mulf %410, %392 : vector<1x64xf32>
    %420 = arith.mulf %404, %412 : vector<1x64xf32>
    %421 = arith.addf %419, %420 : vector<1x64xf32>
    %422 = math.tanh %421 : vector<1x64xf32>
    %423 = arith.mulf %418, %422 : vector<1x64xf32>
    %c5 = arith.constant 5 : index
    %c0_81 = arith.constant 0 : index
    %424 = vector.load %arg10[%c5, %c0_81] : memref<16x64xf32, #tpu.memory_space<vmem>>, vector<1x64xf32>
    tpu.vector_store %arg10[%c5, %c0_81], %423 {strides = array<i32>} : memref<16x64xf32, #tpu.memory_space<vmem>>, vector<1x64xf32>,
    %425 = vector.extract_strided_slice %248 {offsets = [0, 0], sizes = [1, 256], strides = [1, 1]} : vector<2x256xf32> to vector<1x256xf32>
    %cst_82 = arith.constant dense<0.000000e+00> : vector<1x256xf32>
    %426 = tpu.matmul %423, %243, %cst_82 {dimension_numbers = #tpu.dot_dimension_numbers<[1], [0], [0], [1], [0, 0, 1, 1], [], []>} : vector<1x64xf32>, vector<64x256xf32>, vector<1x256xf32> -> vector<1x256xf32>
    %427 = arith.addf %425, %426 : vector<1x256xf32>
    %428 = vector.extract_strided_slice %427 {offsets = [0, 0], sizes = [1, 64], strides = [1, 1]} : vector<1x256xf32> to vector<1x64xf32>
    %429 = arith.negf %428 : vector<1x64xf32>
    %430 = math.exp %429 : vector<1x64xf32>
    %cst_83 = arith.constant 1.000000e+00 : f32
    %431 = vector.broadcast %cst_83 : f32 to vector<1x64xf32>
    %432 = arith.addf %431, %430 : vector<1x64xf32>
    %433 = arith.divf %431, %432 : vector<1x64xf32>
    %434 = vector.extract_strided_slice %427 {offsets = [0, 64], sizes = [1, 64], strides = [1, 1]} : vector<1x256xf32> to vector<1x64xf32>
    %435 = arith.negf %434 : vector<1x64xf32>
    %436 = math.exp %435 : vector<1x64xf32>
    %cst_84 = arith.constant 1.000000e+00 : f32
    %437 = vector.broadcast %cst_84 : f32 to vector<1x64xf32>
    %438 = arith.addf %437, %436 : vector<1x64xf32>
    %439 = arith.divf %437, %438 : vector<1x64xf32>
    %440 = vector.extract_strided_slice %427 {offsets = [0, 128], sizes = [1, 64], strides = [1, 1]} : vector<1x256xf32> to vector<1x64xf32>
    %441 = math.tanh %440 : vector<1x64xf32>
    %442 = vector.extract_strided_slice %427 {offsets = [0, 192], sizes = [1, 64], strides = [1, 1]} : vector<1x256xf32> to vector<1x64xf32>
    %443 = arith.negf %442 : vector<1x64xf32>
    %444 = math.exp %443 : vector<1x64xf32>
    %cst_85 = arith.constant 1.000000e+00 : f32
    %445 = vector.broadcast %cst_85 : f32 to vector<1x64xf32>
    %446 = arith.addf %445, %444 : vector<1x64xf32>
    %447 = arith.divf %445, %446 : vector<1x64xf32>
    %448 = arith.mulf %439, %421 : vector<1x64xf32>
    %449 = arith.mulf %433, %441 : vector<1x64xf32>
    %450 = arith.addf %448, %449 : vector<1x64xf32>
    %451 = math.tanh %450 : vector<1x64xf32>
    %452 = arith.mulf %447, %451 : vector<1x64xf32>
    %c6 = arith.constant 6 : index
    %c0_86 = arith.constant 0 : index
    %453 = vector.load %arg10[%c6, %c0_86] : memref<16x64xf32, #tpu.memory_space<vmem>>, vector<1x64xf32>
    tpu.vector_store %arg10[%c6, %c0_86], %452 {strides = array<i32>} : memref<16x64xf32, #tpu.memory_space<vmem>>, vector<1x64xf32>,
    %454 = vector.extract_strided_slice %248 {offsets = [1, 0], sizes = [1, 256], strides = [1, 1]} : vector<2x256xf32> to vector<1x256xf32>
    %cst_87 = arith.constant dense<0.000000e+00> : vector<1x256xf32>
    %455 = tpu.matmul %452, %243, %cst_87 {dimension_numbers = #tpu.dot_dimension_numbers<[1], [0], [0], [1], [0, 0, 1, 1], [], []>} : vector<1x64xf32>, vector<64x256xf32>, vector<1x256xf32> -> vector<1x256xf32>
    %456 = arith.addf %454, %455 : vector<1x256xf32>
    %457 = vector.extract_strided_slice %456 {offsets = [0, 0], sizes = [1, 64], strides = [1, 1]} : vector<1x256xf32> to vector<1x64xf32>
    %458 = arith.negf %457 : vector<1x64xf32>
    %459 = math.exp %458 : vector<1x64xf32>
    %cst_88 = arith.constant 1.000000e+00 : f32
    %460 = vector.broadcast %cst_88 : f32 to vector<1x64xf32>
    %461 = arith.addf %460, %459 : vector<1x64xf32>
    %462 = arith.divf %460, %461 : vector<1x64xf32>
    %463 = vector.extract_strided_slice %456 {offsets = [0, 64], sizes = [1, 64], strides = [1, 1]} : vector<1x256xf32> to vector<1x64xf32>
    %464 = arith.negf %463 : vector<1x64xf32>
    %465 = math.exp %464 : vector<1x64xf32>
    %cst_89 = arith.constant 1.000000e+00 : f32
    %466 = vector.broadcast %cst_89 : f32 to vector<1x64xf32>
    %467 = arith.addf %466, %465 : vector<1x64xf32>
    %468 = arith.divf %466, %467 : vector<1x64xf32>
    %469 = vector.extract_strided_slice %456 {offsets = [0, 128], sizes = [1, 64], strides = [1, 1]} : vector<1x256xf32> to vector<1x64xf32>
    %470 = math.tanh %469 : vector<1x64xf32>
    %471 = vector.extract_strided_slice %456 {offsets = [0, 192], sizes = [1, 64], strides = [1, 1]} : vector<1x256xf32> to vector<1x64xf32>
    %472 = arith.negf %471 : vector<1x64xf32>
    %473 = math.exp %472 : vector<1x64xf32>
    %cst_90 = arith.constant 1.000000e+00 : f32
    %474 = vector.broadcast %cst_90 : f32 to vector<1x64xf32>
    %475 = arith.addf %474, %473 : vector<1x64xf32>
    %476 = arith.divf %474, %475 : vector<1x64xf32>
    %477 = arith.mulf %468, %450 : vector<1x64xf32>
    %478 = arith.mulf %462, %470 : vector<1x64xf32>
    %479 = arith.addf %477, %478 : vector<1x64xf32>
    %480 = math.tanh %479 : vector<1x64xf32>
    %481 = arith.mulf %476, %480 : vector<1x64xf32>
    %c7 = arith.constant 7 : index
    %c0_91 = arith.constant 0 : index
    %482 = vector.load %arg10[%c7, %c0_91] : memref<16x64xf32, #tpu.memory_space<vmem>>, vector<1x64xf32>
    tpu.vector_store %arg10[%c7, %c0_91], %481 {strides = array<i32>} : memref<16x64xf32, #tpu.memory_space<vmem>>, vector<1x64xf32>,
    %483 = vector.extract_strided_slice %248 {offsets = [0, 0], sizes = [1, 256], strides = [1, 1]} : vector<2x256xf32> to vector<1x256xf32>
    %cst_92 = arith.constant dense<0.000000e+00> : vector<1x256xf32>
    %484 = tpu.matmul %481, %243, %cst_92 {dimension_numbers = #tpu.dot_dimension_numbers<[1], [0], [0], [1], [0, 0, 1, 1], [], []>} : vector<1x64xf32>, vector<64x256xf32>, vector<1x256xf32> -> vector<1x256xf32>
    %485 = arith.addf %483, %484 : vector<1x256xf32>
    %486 = vector.extract_strided_slice %485 {offsets = [0, 0], sizes = [1, 64], strides = [1, 1]} : vector<1x256xf32> to vector<1x64xf32>
    %487 = arith.negf %486 : vector<1x64xf32>
    %488 = math.exp %487 : vector<1x64xf32>
    %cst_93 = arith.constant 1.000000e+00 : f32
    %489 = vector.broadcast %cst_93 : f32 to vector<1x64xf32>
    %490 = arith.addf %489, %488 : vector<1x64xf32>
    %491 = arith.divf %489, %490 : vector<1x64xf32>
    %492 = vector.extract_strided_slice %485 {offsets = [0, 64], sizes = [1, 64], strides = [1, 1]} : vector<1x256xf32> to vector<1x64xf32>
    %493 = arith.negf %492 : vector<1x64xf32>
    %494 = math.exp %493 : vector<1x64xf32>
    %cst_94 = arith.constant 1.000000e+00 : f32
    %495 = vector.broadcast %cst_94 : f32 to vector<1x64xf32>
    %496 = arith.addf %495, %494 : vector<1x64xf32>
    %497 = arith.divf %495, %496 : vector<1x64xf32>
    %498 = vector.extract_strided_slice %485 {offsets = [0, 128], sizes = [1, 64], strides = [1, 1]} : vector<1x256xf32> to vector<1x64xf32>
    %499 = math.tanh %498 : vector<1x64xf32>
    %500 = vector.extract_strided_slice %485 {offsets = [0, 192], sizes = [1, 64], strides = [1, 1]} : vector<1x256xf32> to vector<1x64xf32>
    %501 = arith.negf %500 : vector<1x64xf32>
    %502 = math.exp %501 : vector<1x64xf32>
    %cst_95 = arith.constant 1.000000e+00 : f32
    %503 = vector.broadcast %cst_95 : f32 to vector<1x64xf32>
    %504 = arith.addf %503, %502 : vector<1x64xf32>
    %505 = arith.divf %503, %504 : vector<1x64xf32>
    %506 = arith.mulf %497, %479 : vector<1x64xf32>
    %507 = arith.mulf %491, %499 : vector<1x64xf32>
    %508 = arith.addf %506, %507 : vector<1x64xf32>
    %509 = math.tanh %508 : vector<1x64xf32>
    %510 = arith.mulf %505, %509 : vector<1x64xf32>
    %c8 = arith.constant 8 : index
    %c0_96 = arith.constant 0 : index
    %511 = vector.load %arg10[%c8, %c0_96] : memref<16x64xf32, #tpu.memory_space<vmem>>, vector<1x64xf32>
    tpu.vector_store %arg10[%c8, %c0_96], %510 {strides = array<i32>} : memref<16x64xf32, #tpu.memory_space<vmem>>, vector<1x64xf32>,
    %512 = vector.extract_strided_slice %248 {offsets = [1, 0], sizes = [1, 256], strides = [1, 1]} : vector<2x256xf32> to vector<1x256xf32>
    %cst_97 = arith.constant dense<0.000000e+00> : vector<1x256xf32>
    %513 = tpu.matmul %510, %243, %cst_97 {dimension_numbers = #tpu.dot_dimension_numbers<[1], [0], [0], [1], [0, 0, 1, 1], [], []>} : vector<1x64xf32>, vector<64x256xf32>, vector<1x256xf32> -> vector<1x256xf32>
    %514 = arith.addf %512, %513 : vector<1x256xf32>
    %515 = vector.extract_strided_slice %514 {offsets = [0, 0], sizes = [1, 64], strides = [1, 1]} : vector<1x256xf32> to vector<1x64xf32>
    %516 = arith.negf %515 : vector<1x64xf32>
    %517 = math.exp %516 : vector<1x64xf32>
    %cst_98 = arith.constant 1.000000e+00 : f32
    %518 = vector.broadcast %cst_98 : f32 to vector<1x64xf32>
    %519 = arith.addf %518, %517 : vector<1x64xf32>
    %520 = arith.divf %518, %519 : vector<1x64xf32>
    %521 = vector.extract_strided_slice %514 {offsets = [0, 64], sizes = [1, 64], strides = [1, 1]} : vector<1x256xf32> to vector<1x64xf32>
    %522 = arith.negf %521 : vector<1x64xf32>
    %523 = math.exp %522 : vector<1x64xf32>
    %cst_99 = arith.constant 1.000000e+00 : f32
    %524 = vector.broadcast %cst_99 : f32 to vector<1x64xf32>
    %525 = arith.addf %524, %523 : vector<1x64xf32>
    %526 = arith.divf %524, %525 : vector<1x64xf32>
    %527 = vector.extract_strided_slice %514 {offsets = [0, 128], sizes = [1, 64], strides = [1, 1]} : vector<1x256xf32> to vector<1x64xf32>
    %528 = math.tanh %527 : vector<1x64xf32>
    %529 = vector.extract_strided_slice %514 {offsets = [0, 192], sizes = [1, 64], strides = [1, 1]} : vector<1x256xf32> to vector<1x64xf32>
    %530 = arith.negf %529 : vector<1x64xf32>
    %531 = math.exp %530 : vector<1x64xf32>
    %cst_100 = arith.constant 1.000000e+00 : f32
    %532 = vector.broadcast %cst_100 : f32 to vector<1x64xf32>
    %533 = arith.addf %532, %531 : vector<1x64xf32>
    %534 = arith.divf %532, %533 : vector<1x64xf32>
    %535 = arith.mulf %526, %508 : vector<1x64xf32>
    %536 = arith.mulf %520, %528 : vector<1x64xf32>
    %537 = arith.addf %535, %536 : vector<1x64xf32>
    %538 = math.tanh %537 : vector<1x64xf32>
    %539 = arith.mulf %534, %538 : vector<1x64xf32>
    %c9 = arith.constant 9 : index
    %c0_101 = arith.constant 0 : index
    %540 = vector.load %arg10[%c9, %c0_101] : memref<16x64xf32, #tpu.memory_space<vmem>>, vector<1x64xf32>
    tpu.vector_store %arg10[%c9, %c0_101], %539 {strides = array<i32>} : memref<16x64xf32, #tpu.memory_space<vmem>>, vector<1x64xf32>,
    %541 = vector.extract_strided_slice %248 {offsets = [0, 0], sizes = [1, 256], strides = [1, 1]} : vector<2x256xf32> to vector<1x256xf32>
    %cst_102 = arith.constant dense<0.000000e+00> : vector<1x256xf32>
    %542 = tpu.matmul %539, %243, %cst_102 {dimension_numbers = #tpu.dot_dimension_numbers<[1], [0], [0], [1], [0, 0, 1, 1], [], []>} : vector<1x64xf32>, vector<64x256xf32>, vector<1x256xf32> -> vector<1x256xf32>
    %543 = arith.addf %541, %542 : vector<1x256xf32>
    %544 = vector.extract_strided_slice %543 {offsets = [0, 0], sizes = [1, 64], strides = [1, 1]} : vector<1x256xf32> to vector<1x64xf32>
    %545 = arith.negf %544 : vector<1x64xf32>
    %546 = math.exp %545 : vector<1x64xf32>
    %cst_103 = arith.constant 1.000000e+00 : f32
    %547 = vector.broadcast %cst_103 : f32 to vector<1x64xf32>
    %548 = arith.addf %547, %546 : vector<1x64xf32>
    %549 = arith.divf %547, %548 : vector<1x64xf32>
    %550 = vector.extract_strided_slice %543 {offsets = [0, 64], sizes = [1, 64], strides = [1, 1]} : vector<1x256xf32> to vector<1x64xf32>
    %551 = arith.negf %550 : vector<1x64xf32>
    %552 = math.exp %551 : vector<1x64xf32>
    %cst_104 = arith.constant 1.000000e+00 : f32
    %553 = vector.broadcast %cst_104 : f32 to vector<1x64xf32>
    %554 = arith.addf %553, %552 : vector<1x64xf32>
    %555 = arith.divf %553, %554 : vector<1x64xf32>
    %556 = vector.extract_strided_slice %543 {offsets = [0, 128], sizes = [1, 64], strides = [1, 1]} : vector<1x256xf32> to vector<1x64xf32>
    %557 = math.tanh %556 : vector<1x64xf32>
    %558 = vector.extract_strided_slice %543 {offsets = [0, 192], sizes = [1, 64], strides = [1, 1]} : vector<1x256xf32> to vector<1x64xf32>
    %559 = arith.negf %558 : vector<1x64xf32>
    %560 = math.exp %559 : vector<1x64xf32>
    %cst_105 = arith.constant 1.000000e+00 : f32
    %561 = vector.broadcast %cst_105 : f32 to vector<1x64xf32>
    %562 = arith.addf %561, %560 : vector<1x64xf32>
    %563 = arith.divf %561, %562 : vector<1x64xf32>
    %564 = arith.mulf %555, %537 : vector<1x64xf32>
    %565 = arith.mulf %549, %557 : vector<1x64xf32>
    %566 = arith.addf %564, %565 : vector<1x64xf32>
    %567 = math.tanh %566 : vector<1x64xf32>
    %568 = arith.mulf %563, %567 : vector<1x64xf32>
    %c10 = arith.constant 10 : index
    %c0_106 = arith.constant 0 : index
    %569 = vector.load %arg10[%c10, %c0_106] : memref<16x64xf32, #tpu.memory_space<vmem>>, vector<1x64xf32>
    tpu.vector_store %arg10[%c10, %c0_106], %568 {strides = array<i32>} : memref<16x64xf32, #tpu.memory_space<vmem>>, vector<1x64xf32>,
    %570 = vector.extract_strided_slice %248 {offsets = [1, 0], sizes = [1, 256], strides = [1, 1]} : vector<2x256xf32> to vector<1x256xf32>
    %cst_107 = arith.constant dense<0.000000e+00> : vector<1x256xf32>
    %571 = tpu.matmul %568, %243, %cst_107 {dimension_numbers = #tpu.dot_dimension_numbers<[1], [0], [0], [1], [0, 0, 1, 1], [], []>} : vector<1x64xf32>, vector<64x256xf32>, vector<1x256xf32> -> vector<1x256xf32>
    %572 = arith.addf %570, %571 : vector<1x256xf32>
    %573 = vector.extract_strided_slice %572 {offsets = [0, 0], sizes = [1, 64], strides = [1, 1]} : vector<1x256xf32> to vector<1x64xf32>
    %574 = arith.negf %573 : vector<1x64xf32>
    %575 = math.exp %574 : vector<1x64xf32>
    %cst_108 = arith.constant 1.000000e+00 : f32
    %576 = vector.broadcast %cst_108 : f32 to vector<1x64xf32>
    %577 = arith.addf %576, %575 : vector<1x64xf32>
    %578 = arith.divf %576, %577 : vector<1x64xf32>
    %579 = vector.extract_strided_slice %572 {offsets = [0, 64], sizes = [1, 64], strides = [1, 1]} : vector<1x256xf32> to vector<1x64xf32>
    %580 = arith.negf %579 : vector<1x64xf32>
    %581 = math.exp %580 : vector<1x64xf32>
    %cst_109 = arith.constant 1.000000e+00 : f32
    %582 = vector.broadcast %cst_109 : f32 to vector<1x64xf32>
    %583 = arith.addf %582, %581 : vector<1x64xf32>
    %584 = arith.divf %582, %583 : vector<1x64xf32>
    %585 = vector.extract_strided_slice %572 {offsets = [0, 128], sizes = [1, 64], strides = [1, 1]} : vector<1x256xf32> to vector<1x64xf32>
    %586 = math.tanh %585 : vector<1x64xf32>
    %587 = vector.extract_strided_slice %572 {offsets = [0, 192], sizes = [1, 64], strides = [1, 1]} : vector<1x256xf32> to vector<1x64xf32>
    %588 = arith.negf %587 : vector<1x64xf32>
    %589 = math.exp %588 : vector<1x64xf32>
    %cst_110 = arith.constant 1.000000e+00 : f32
    %590 = vector.broadcast %cst_110 : f32 to vector<1x64xf32>
    %591 = arith.addf %590, %589 : vector<1x64xf32>
    %592 = arith.divf %590, %591 : vector<1x64xf32>
    %593 = arith.mulf %584, %566 : vector<1x64xf32>
    %594 = arith.mulf %578, %586 : vector<1x64xf32>
    %595 = arith.addf %593, %594 : vector<1x64xf32>
    %596 = math.tanh %595 : vector<1x64xf32>
    %597 = arith.mulf %592, %596 : vector<1x64xf32>
    %c11 = arith.constant 11 : index
    %c0_111 = arith.constant 0 : index
    %598 = vector.load %arg10[%c11, %c0_111] : memref<16x64xf32, #tpu.memory_space<vmem>>, vector<1x64xf32>
    tpu.vector_store %arg10[%c11, %c0_111], %597 {strides = array<i32>} : memref<16x64xf32, #tpu.memory_space<vmem>>, vector<1x64xf32>,
    %599 = vector.extract_strided_slice %248 {offsets = [0, 0], sizes = [1, 256], strides = [1, 1]} : vector<2x256xf32> to vector<1x256xf32>
    %cst_112 = arith.constant dense<0.000000e+00> : vector<1x256xf32>
    %600 = tpu.matmul %597, %243, %cst_112 {dimension_numbers = #tpu.dot_dimension_numbers<[1], [0], [0], [1], [0, 0, 1, 1], [], []>} : vector<1x64xf32>, vector<64x256xf32>, vector<1x256xf32> -> vector<1x256xf32>
    %601 = arith.addf %599, %600 : vector<1x256xf32>
    %602 = vector.extract_strided_slice %601 {offsets = [0, 0], sizes = [1, 64], strides = [1, 1]} : vector<1x256xf32> to vector<1x64xf32>
    %603 = arith.negf %602 : vector<1x64xf32>
    %604 = math.exp %603 : vector<1x64xf32>
    %cst_113 = arith.constant 1.000000e+00 : f32
    %605 = vector.broadcast %cst_113 : f32 to vector<1x64xf32>
    %606 = arith.addf %605, %604 : vector<1x64xf32>
    %607 = arith.divf %605, %606 : vector<1x64xf32>
    %608 = vector.extract_strided_slice %601 {offsets = [0, 64], sizes = [1, 64], strides = [1, 1]} : vector<1x256xf32> to vector<1x64xf32>
    %609 = arith.negf %608 : vector<1x64xf32>
    %610 = math.exp %609 : vector<1x64xf32>
    %cst_114 = arith.constant 1.000000e+00 : f32
    %611 = vector.broadcast %cst_114 : f32 to vector<1x64xf32>
    %612 = arith.addf %611, %610 : vector<1x64xf32>
    %613 = arith.divf %611, %612 : vector<1x64xf32>
    %614 = vector.extract_strided_slice %601 {offsets = [0, 128], sizes = [1, 64], strides = [1, 1]} : vector<1x256xf32> to vector<1x64xf32>
    %615 = math.tanh %614 : vector<1x64xf32>
    %616 = vector.extract_strided_slice %601 {offsets = [0, 192], sizes = [1, 64], strides = [1, 1]} : vector<1x256xf32> to vector<1x64xf32>
    %617 = arith.negf %616 : vector<1x64xf32>
    %618 = math.exp %617 : vector<1x64xf32>
    %cst_115 = arith.constant 1.000000e+00 : f32
    %619 = vector.broadcast %cst_115 : f32 to vector<1x64xf32>
    %620 = arith.addf %619, %618 : vector<1x64xf32>
    %621 = arith.divf %619, %620 : vector<1x64xf32>
    %622 = arith.mulf %613, %595 : vector<1x64xf32>
    %623 = arith.mulf %607, %615 : vector<1x64xf32>
    %624 = arith.addf %622, %623 : vector<1x64xf32>
    %625 = math.tanh %624 : vector<1x64xf32>
    %626 = arith.mulf %621, %625 : vector<1x64xf32>
    %c12 = arith.constant 12 : index
    %c0_116 = arith.constant 0 : index
    %627 = vector.load %arg10[%c12, %c0_116] : memref<16x64xf32, #tpu.memory_space<vmem>>, vector<1x64xf32>
    tpu.vector_store %arg10[%c12, %c0_116], %626 {strides = array<i32>} : memref<16x64xf32, #tpu.memory_space<vmem>>, vector<1x64xf32>,
    %628 = vector.extract_strided_slice %248 {offsets = [1, 0], sizes = [1, 256], strides = [1, 1]} : vector<2x256xf32> to vector<1x256xf32>
    %cst_117 = arith.constant dense<0.000000e+00> : vector<1x256xf32>
    %629 = tpu.matmul %626, %243, %cst_117 {dimension_numbers = #tpu.dot_dimension_numbers<[1], [0], [0], [1], [0, 0, 1, 1], [], []>} : vector<1x64xf32>, vector<64x256xf32>, vector<1x256xf32> -> vector<1x256xf32>
    %630 = arith.addf %628, %629 : vector<1x256xf32>
    %631 = vector.extract_strided_slice %630 {offsets = [0, 0], sizes = [1, 64], strides = [1, 1]} : vector<1x256xf32> to vector<1x64xf32>
    %632 = arith.negf %631 : vector<1x64xf32>
    %633 = math.exp %632 : vector<1x64xf32>
    %cst_118 = arith.constant 1.000000e+00 : f32
    %634 = vector.broadcast %cst_118 : f32 to vector<1x64xf32>
    %635 = arith.addf %634, %633 : vector<1x64xf32>
    %636 = arith.divf %634, %635 : vector<1x64xf32>
    %637 = vector.extract_strided_slice %630 {offsets = [0, 64], sizes = [1, 64], strides = [1, 1]} : vector<1x256xf32> to vector<1x64xf32>
    %638 = arith.negf %637 : vector<1x64xf32>
    %639 = math.exp %638 : vector<1x64xf32>
    %cst_119 = arith.constant 1.000000e+00 : f32
    %640 = vector.broadcast %cst_119 : f32 to vector<1x64xf32>
    %641 = arith.addf %640, %639 : vector<1x64xf32>
    %642 = arith.divf %640, %641 : vector<1x64xf32>
    %643 = vector.extract_strided_slice %630 {offsets = [0, 128], sizes = [1, 64], strides = [1, 1]} : vector<1x256xf32> to vector<1x64xf32>
    %644 = math.tanh %643 : vector<1x64xf32>
    %645 = vector.extract_strided_slice %630 {offsets = [0, 192], sizes = [1, 64], strides = [1, 1]} : vector<1x256xf32> to vector<1x64xf32>
    %646 = arith.negf %645 : vector<1x64xf32>
    %647 = math.exp %646 : vector<1x64xf32>
    %cst_120 = arith.constant 1.000000e+00 : f32
    %648 = vector.broadcast %cst_120 : f32 to vector<1x64xf32>
    %649 = arith.addf %648, %647 : vector<1x64xf32>
    %650 = arith.divf %648, %649 : vector<1x64xf32>
    %651 = arith.mulf %642, %624 : vector<1x64xf32>
    %652 = arith.mulf %636, %644 : vector<1x64xf32>
    %653 = arith.addf %651, %652 : vector<1x64xf32>
    %654 = math.tanh %653 : vector<1x64xf32>
    %655 = arith.mulf %650, %654 : vector<1x64xf32>
    %c13 = arith.constant 13 : index
    %c0_121 = arith.constant 0 : index
    %656 = vector.load %arg10[%c13, %c0_121] : memref<16x64xf32, #tpu.memory_space<vmem>>, vector<1x64xf32>
    tpu.vector_store %arg10[%c13, %c0_121], %655 {strides = array<i32>} : memref<16x64xf32, #tpu.memory_space<vmem>>, vector<1x64xf32>,
    %657 = vector.extract_strided_slice %248 {offsets = [0, 0], sizes = [1, 256], strides = [1, 1]} : vector<2x256xf32> to vector<1x256xf32>
    %cst_122 = arith.constant dense<0.000000e+00> : vector<1x256xf32>
    %658 = tpu.matmul %655, %243, %cst_122 {dimension_numbers = #tpu.dot_dimension_numbers<[1], [0], [0], [1], [0, 0, 1, 1], [], []>} : vector<1x64xf32>, vector<64x256xf32>, vector<1x256xf32> -> vector<1x256xf32>
    %659 = arith.addf %657, %658 : vector<1x256xf32>
    %660 = vector.extract_strided_slice %659 {offsets = [0, 0], sizes = [1, 64], strides = [1, 1]} : vector<1x256xf32> to vector<1x64xf32>
    %661 = arith.negf %660 : vector<1x64xf32>
    %662 = math.exp %661 : vector<1x64xf32>
    %cst_123 = arith.constant 1.000000e+00 : f32
    %663 = vector.broadcast %cst_123 : f32 to vector<1x64xf32>
    %664 = arith.addf %663, %662 : vector<1x64xf32>
    %665 = arith.divf %663, %664 : vector<1x64xf32>
    %666 = vector.extract_strided_slice %659 {offsets = [0, 64], sizes = [1, 64], strides = [1, 1]} : vector<1x256xf32> to vector<1x64xf32>
    %667 = arith.negf %666 : vector<1x64xf32>
    %668 = math.exp %667 : vector<1x64xf32>
    %cst_124 = arith.constant 1.000000e+00 : f32
    %669 = vector.broadcast %cst_124 : f32 to vector<1x64xf32>
    %670 = arith.addf %669, %668 : vector<1x64xf32>
    %671 = arith.divf %669, %670 : vector<1x64xf32>
    %672 = vector.extract_strided_slice %659 {offsets = [0, 128], sizes = [1, 64], strides = [1, 1]} : vector<1x256xf32> to vector<1x64xf32>
    %673 = math.tanh %672 : vector<1x64xf32>
    %674 = vector.extract_strided_slice %659 {offsets = [0, 192], sizes = [1, 64], strides = [1, 1]} : vector<1x256xf32> to vector<1x64xf32>
    %675 = arith.negf %674 : vector<1x64xf32>
    %676 = math.exp %675 : vector<1x64xf32>
    %cst_125 = arith.constant 1.000000e+00 : f32
    %677 = vector.broadcast %cst_125 : f32 to vector<1x64xf32>
    %678 = arith.addf %677, %676 : vector<1x64xf32>
    %679 = arith.divf %677, %678 : vector<1x64xf32>
    %680 = arith.mulf %671, %653 : vector<1x64xf32>
    %681 = arith.mulf %665, %673 : vector<1x64xf32>
    %682 = arith.addf %680, %681 : vector<1x64xf32>
    %683 = math.tanh %682 : vector<1x64xf32>
    %684 = arith.mulf %679, %683 : vector<1x64xf32>
    %c14 = arith.constant 14 : index
    %c0_126 = arith.constant 0 : index
    %685 = vector.load %arg10[%c14, %c0_126] : memref<16x64xf32, #tpu.memory_space<vmem>>, vector<1x64xf32>
    tpu.vector_store %arg10[%c14, %c0_126], %684 {strides = array<i32>} : memref<16x64xf32, #tpu.memory_space<vmem>>, vector<1x64xf32>,
    %686 = vector.extract_strided_slice %248 {offsets = [1, 0], sizes = [1, 256], strides = [1, 1]} : vector<2x256xf32> to vector<1x256xf32>
    %cst_127 = arith.constant dense<0.000000e+00> : vector<1x256xf32>
    %687 = tpu.matmul %684, %243, %cst_127 {dimension_numbers = #tpu.dot_dimension_numbers<[1], [0], [0], [1], [0, 0, 1, 1], [], []>} : vector<1x64xf32>, vector<64x256xf32>, vector<1x256xf32> -> vector<1x256xf32>
    %688 = arith.addf %686, %687 : vector<1x256xf32>
    %689 = vector.extract_strided_slice %688 {offsets = [0, 0], sizes = [1, 64], strides = [1, 1]} : vector<1x256xf32> to vector<1x64xf32>
    %690 = arith.negf %689 : vector<1x64xf32>
    %691 = math.exp %690 : vector<1x64xf32>
    %cst_128 = arith.constant 1.000000e+00 : f32
    %692 = vector.broadcast %cst_128 : f32 to vector<1x64xf32>
    %693 = arith.addf %692, %691 : vector<1x64xf32>
    %694 = arith.divf %692, %693 : vector<1x64xf32>
    %695 = vector.extract_strided_slice %688 {offsets = [0, 64], sizes = [1, 64], strides = [1, 1]} : vector<1x256xf32> to vector<1x64xf32>
    %696 = arith.negf %695 : vector<1x64xf32>
    %697 = math.exp %696 : vector<1x64xf32>
    %cst_129 = arith.constant 1.000000e+00 : f32
    %698 = vector.broadcast %cst_129 : f32 to vector<1x64xf32>
    %699 = arith.addf %698, %697 : vector<1x64xf32>
    %700 = arith.divf %698, %699 : vector<1x64xf32>
    %701 = vector.extract_strided_slice %688 {offsets = [0, 128], sizes = [1, 64], strides = [1, 1]} : vector<1x256xf32> to vector<1x64xf32>
    %702 = math.tanh %701 : vector<1x64xf32>
    %703 = vector.extract_strided_slice %688 {offsets = [0, 192], sizes = [1, 64], strides = [1, 1]} : vector<1x256xf32> to vector<1x64xf32>
    %704 = arith.negf %703 : vector<1x64xf32>
    %705 = math.exp %704 : vector<1x64xf32>
    %cst_130 = arith.constant 1.000000e+00 : f32
    %706 = vector.broadcast %cst_130 : f32 to vector<1x64xf32>
    %707 = arith.addf %706, %705 : vector<1x64xf32>
    %708 = arith.divf %706, %707 : vector<1x64xf32>
    %709 = arith.mulf %700, %682 : vector<1x64xf32>
    %710 = arith.mulf %694, %702 : vector<1x64xf32>
    %711 = arith.addf %709, %710 : vector<1x64xf32>
    %712 = math.tanh %711 : vector<1x64xf32>
    %713 = arith.mulf %708, %712 : vector<1x64xf32>
    %c15 = arith.constant 15 : index
    %c0_131 = arith.constant 0 : index
    %714 = vector.load %arg10[%c15, %c0_131] : memref<16x64xf32, #tpu.memory_space<vmem>>, vector<1x64xf32>
    tpu.vector_store %arg10[%c15, %c0_131], %713 {strides = array<i32>} : memref<16x64xf32, #tpu.memory_space<vmem>>, vector<1x64xf32>,
    %c0_132 = arith.constant 0 : index
    %c0_133 = arith.constant 0 : index
    %715 = vector.load %arg10[%c0_132, %c0_133] : memref<16x64xf32, #tpu.memory_space<vmem>>, vector<16x64xf32>
    %c0_134 = arith.constant 0 : index
    %c0_135 = arith.constant 0 : index
    %716 = vector.load %arg7[%c0_134, %c0_135] : memref<64x128xf32, #tpu.memory_space<vmem>>, vector<64x128xf32>
    %cst_136 = arith.constant dense<0.000000e+00> : vector<16x128xf32>
    %717 = tpu.matmul %715, %716, %cst_136 {dimension_numbers = #tpu.dot_dimension_numbers<[1], [0], [0], [1], [0, 0, 1, 1], [], []>} : vector<16x64xf32>, vector<64x128xf32>, vector<16x128xf32> -> vector<16x128xf32>
    %c0_137 = arith.constant 0 : index
    %c0_138 = arith.constant 0 : index
    %718 = vector.load %arg8[%c0_137, %c0_138] : memref<1x128xf32, #tpu.memory_space<vmem>>, vector<1x128xf32>
    %719 = vector.broadcast %718 : vector<1x128xf32> to vector<16x128xf32>
    %720 = arith.addf %717, %719 : vector<16x128xf32>
    %c0_139 = arith.constant 0 : index
    %c0_140 = arith.constant 0 : index
    %c0_141 = arith.constant 0 : index
    %721 = vector.load %arg9[%c0_139, %c0_140, %c0_141] : memref<1x16x128xf32, #tpu.memory_space<vmem>>, vector<1x16x128xf32>
    %722 = vector.shape_cast %721 : vector<1x16x128xf32> to vector<16x128xf32>
    %723 = vector.shape_cast %720 : vector<16x128xf32> to vector<1x16x128xf32>
    tpu.vector_store %arg9[%c0_139, %c0_140, %c0_141], %723 {strides = array<i32>} : memref<1x16x128xf32, #tpu.memory_space<vmem>>, vector<1x16x128xf32>,
    return
  }
}

</mosaic_0001>

<llo_original>
// kernel: recurrent_autoencoder_forward.1
$region0: #{recurrent_autoencoder_forward.1}
  #allocation0 [shape = 'u32[]', space=smem, size = 0x4, offset = 0x4, fixed_abs, tag = 'smem constant byte address 0x4 - core index']
  #allocation1 [shape = 'u32[144,128]{1,0:T(1,128)}', space=vmem, size = 0x12000, scoped, tag = 'internal scratch']
  #allocation2 [shape = 'f32[16,64]{1,0:T(8,128)}', space=vmem, size = 0x2000, scoped, tag = 'scratch operand']
  %s0 = inlined_call_operand.hbm [shape: f32[2,8,128], index: 0, kind: input, shape index: {}]
  %s1 = inlined_call_operand.hbm [shape: f32[128,128], index: 1, kind: input, shape index: {}]
  %s2 = inlined_call_operand.hbm [shape: f32[32,128], index: 2, kind: input, shape index: {}]
  %s3 = inlined_call_operand.vmem [shape: f32[1,128], index: 3, kind: input, shape index: {}]
  %s4 = inlined_call_operand.hbm [shape: f32[32,256], index: 4, kind: input, shape index: {}]
  %s5 = inlined_call_operand.hbm [shape: f32[64,256], index: 5, kind: input, shape index: {}]
  %s6 = inlined_call_operand.hbm [shape: f32[1,256], index: 6, kind: input, shape index: {}]
  %s7 = inlined_call_operand.hbm [shape: f32[64,128], index: 7, kind: input, shape index: {}]
  %s8 = inlined_call_operand.vmem [shape: f32[1,128], index: 8, kind: input, shape index: {}]
  %s9 = inlined_call_operand.hbm [shape: f32[1,16,128], index: 9, kind: output, shape index: {}]
  %s10 = sld [smem:[#allocation0]]
  $region74: #{recurrent_autoencoder_forward.1} parent=0
    _
  %s12 = ssub.s32 1, %s10
  %s13 = scalar_select 0, %s12, %s10
  $region1: #{recurrent_autoencoder_forward.1} parent=0
    #allocation3 [shape = 'u8[8192]{0}', space=vmem, size = 0x2000, scoped, tag = 'input window, operand 0, single buffered']
    #allocation4 [shape = 's32[1]{0}', space=sflag, size = 0x4, scoped, tag = 'scoped memory for recurrent_autoencoder_forward.1']
    #allocation5 [shape = 's32[1]{0}', space=sflag, size = 0x4, scoped, tag = 'scoped memory for recurrent_autoencoder_forward.1']
    #allocation6 [shape = 'u8[65536]{0}', space=vmem, size = 0x10000, scoped, tag = 'input window, operand 1, single buffered']
    #allocation7 [shape = 's32[1]{0}', space=sflag, size = 0x4, scoped, tag = 'scoped memory for recurrent_autoencoder_forward.1']
    #allocation8 [shape = 'u8[16384]{0}', space=vmem, size = 0x4000, scoped, tag = 'input window, operand 2, single buffered']
    #allocation9 [shape = 'u8[32768]{0}', space=vmem, size = 0x8000, scoped, tag = 'input window, operand 4, single buffered']
    #allocation10 [shape = 's32[1]{0}', space=sflag, size = 0x4, scoped, tag = 'scoped memory for recurrent_autoencoder_forward.1']
    #allocation11 [shape = 'u8[65536]{0}', space=vmem, size = 0x10000, scoped, tag = 'input window, operand 5, single buffered']
    #allocation12 [shape = 'u8[1024]{0}', space=vmem, size = 0x400, scoped, tag = 'input window, operand 6, single buffered']
    #allocation13 [shape = 's32[1]{0}', space=sflag, size = 0x4, scoped, tag = 'scoped memory for recurrent_autoencoder_forward.1']
    #allocation14 [shape = 'u8[32768]{0}', space=vmem, size = 0x8000, scoped, tag = 'input window, operand 7, single buffered']
    #allocation15 [shape = 'u8[8192]{0}', space=vmem, size = 0x2000, scoped, tag = 'output window, operand 0, single buffered']
    %14 = vsyncpa [#allocation4], 0
    %15 = vsyncpa [#allocation7], 0
    %16 = vsyncpa [#allocation10], 0
    %17 = vsyncpa [#allocation13], 0
    %18 = vsyncpa [#allocation5], 0
    // Predicated region
    $region2: #{recurrent_autoencoder_forward.1} parent=1 // pred_check
      _
    $region3: #{recurrent_autoencoder_forward.1} parent=1 // pred_check_branch
      %20 = sbr.rel (0) target = $region5
    $region4: #{recurrent_autoencoder_forward.1} parent=1 // pred_region
      %s22 = ssub.s32 256, 256
      %23 = vsyncadd [#allocation4], %s22
      %s24 = sshll.u32 [#allocation3], 4
      %s25 = int_to_ptr.vmem [resolvable:$true] %s24
      %30 = dma.hbm_to_vmem [thread:$0]  %s0, 256, %s25, [#allocation4], 128, 128, 8
    $region5: #{recurrent_autoencoder_forward.1} parent=1 // pred_fallthru
      _
    // Predicated region
    $region6: #{recurrent_autoencoder_forward.1} parent=1 // pred_check
      _
    $region7: #{recurrent_autoencoder_forward.1} parent=1 // pred_check_branch
      %32 = sbr.rel (0) target = $region9
    $region8: #{recurrent_autoencoder_forward.1} parent=1 // pred_region
      %s34 = ssub.s32 2048, 2048
      %35 = vsyncadd [#allocation7], %s34
      %s36 = sshll.u32 [#allocation6], 4
      %s37 = int_to_ptr.vmem [resolvable:$true] %s36
      %42 = dma.hbm_to_vmem [thread:$0]  %s1, 2048, %s37, [#allocation7], 128, 128, 8
    $region9: #{recurrent_autoencoder_forward.1} parent=1 // pred_fallthru
      _
    // Predicated region
    $region10: #{recurrent_autoencoder_forward.1} parent=1 // pred_check
      _
    $region11: #{recurrent_autoencoder_forward.1} parent=1 // pred_check_branch
      %44 = sbr.rel (0) target = $region13
    $region12: #{recurrent_autoencoder_forward.1} parent=1 // pred_region
      %s46 = ssub.s32 512, 512
      %47 = vsyncadd [#allocation7], %s46
      %s48 = sshll.u32 [#allocation8], 4
      %s49 = int_to_ptr.vmem [resolvable:$true] %s48
      %54 = dma.hbm_to_vmem [thread:$0]  %s2, 512, %s49, [#allocation7], 128, 128, 8
    $region13: #{recurrent_autoencoder_forward.1} parent=1 // pred_fallthru
      _
    // Predicated region
    $region14: #{recurrent_autoencoder_forward.1} parent=1 // pred_check
      _
    $region15: #{recurrent_autoencoder_forward.1} parent=1 // pred_check_branch
      %56 = sbr.rel (0) target = $region17
    $region16: #{recurrent_autoencoder_forward.1} parent=1 // pred_region
      _
    $region17: #{recurrent_autoencoder_forward.1} parent=1 // pred_fallthru
      _
    // Predicated region
    $region18: #{recurrent_autoencoder_forward.1} parent=1 // pred_check
      _
    $region19: #{recurrent_autoencoder_forward.1} parent=1 // pred_check_branch
      %58 = sbr.rel (0) target = $region21
    $region20: #{recurrent_autoencoder_forward.1} parent=1 // pred_region
      %s60 = ssub.s32 1024, 1024
      %61 = vsyncadd [#allocation10], %s60
      %s62 = sshll.u32 [#allocation9], 4
      %s63 = int_to_ptr.vmem [resolvable:$true] %s62
      %68 = dma.hbm_to_vmem [thread:$0]  %s4, 1024, %s63, [#allocation10], 256, 256, 16
    $region21: #{recurrent_autoencoder_forward.1} parent=1 // pred_fallthru
      _
    // Predicated region
    $region22: #{recurrent_autoencoder_forward.1} parent=1 // pred_check
      _
    $region23: #{recurrent_autoencoder_forward.1} parent=1 // pred_check_branch
      %70 = sbr.rel (0) target = $region25
    $region24: #{recurrent_autoencoder_forward.1} parent=1 // pred_region
      %s72 = ssub.s32 2048, 2048
      %73 = vsyncadd [#allocation10], %s72
      %s74 = sshll.u32 [#allocation11], 4
      %s75 = int_to_ptr.vmem [resolvable:$true] %s74
      %80 = dma.hbm_to_vmem [thread:$0]  %s5, 2048, %s75, [#allocation10], 256, 256, 16
    $region25: #{recurrent_autoencoder_forward.1} parent=1 // pred_fallthru
      _
    // Predicated region
    $region26: #{recurrent_autoencoder_forward.1} parent=1 // pred_check
      _
    $region27: #{recurrent_autoencoder_forward.1} parent=1 // pred_check_branch
      %82 = sbr.rel (0) target = $region29
    $region28: #{recurrent_autoencoder_forward.1} parent=1 // pred_region
      %s84 = ssub.s32 32, 32
      %85 = vsyncadd [#allocation13], %s84
      %s87 = sshll.u32 [#allocation12], 4
      %s88 = int_to_ptr.vmem [resolvable:$true] %s87
      %90 = dma.hbm_to_vmem [thread:$0]  %s6, 32, %s88, [#allocation13]
    $region29: #{recurrent_autoencoder_forward.1} parent=1 // pred_fallthru
      _
    // Predicated region
    $region30: #{recurrent_autoencoder_forward.1} parent=1 // pred_check
      _
    $region31: #{recurrent_autoencoder_forward.1} parent=1 // pred_check_branch
      %92 = sbr.rel (0) target = $region33
    $region32: #{recurrent_autoencoder_forward.1} parent=1 // pred_region
      %s94 = ssub.s32 1024, 1024
      %95 = vsyncadd [#allocation13], %s94
      %s96 = sshll.u32 [#allocation14], 4
      %s97 = int_to_ptr.vmem [resolvable:$true] %s96
      %102 = dma.hbm_to_vmem [thread:$0]  %s7, 1024, %s97, [#allocation13], 128, 128, 8
    $region33: #{recurrent_autoencoder_forward.1} parent=1 // pred_fallthru
      _
    // Predicated region
    $region34: #{recurrent_autoencoder_forward.1} parent=1 // pred_check
      _
    $region35: #{recurrent_autoencoder_forward.1} parent=1 // pred_check_branch
      %104 = sbr.rel (0) target = $region37
    $region36: #{recurrent_autoencoder_forward.1} parent=1 // pred_region
      _
    $region37: #{recurrent_autoencoder_forward.1} parent=1 // pred_fallthru
      _
    // Predicated region
    $region38: #{recurrent_autoencoder_forward.1} parent=1 // pred_check
      _
    $region39: #{recurrent_autoencoder_forward.1} parent=1 // pred_check_branch
      %106 = sbr.rel (0) target = $region41
    $region40: #{recurrent_autoencoder_forward.1} parent=1 // pred_region
      %107 = dma.done [#allocation4], 256
    $region41: #{recurrent_autoencoder_forward.1} parent=1 // pred_fallthru
      _
    // Predicated region
    $region42: #{recurrent_autoencoder_forward.1} parent=1 // pred_check
      _
    $region43: #{recurrent_autoencoder_forward.1} parent=1 // pred_check_branch
      %109 = sbr.rel (0) target = $region45
    $region44: #{recurrent_autoencoder_forward.1} parent=1 // pred_region
      %110 = dma.done [#allocation7], 2048
    $region45: #{recurrent_autoencoder_forward.1} parent=1 // pred_fallthru
      _
    // Predicated region
    $region46: #{recurrent_autoencoder_forward.1} parent=1 // pred_check
      _
    $region47: #{recurrent_autoencoder_forward.1} parent=1 // pred_check_branch
      %112 = sbr.rel (0) target = $region49
    $region48: #{recurrent_autoencoder_forward.1} parent=1 // pred_region
      %113 = dma.done [#allocation7], 512
    $region49: #{recurrent_autoencoder_forward.1} parent=1 // pred_fallthru
      _
    // Predicated region
    $region50: #{recurrent_autoencoder_forward.1} parent=1 // pred_check
      _
    $region51: #{recurrent_autoencoder_forward.1} parent=1 // pred_check_branch
      %115 = sbr.rel (0) target = $region53
    $region52: #{recurrent_autoencoder_forward.1} parent=1 // pred_region
      %116 = dma.done [#allocation10], 1024
    $region53: #{recurrent_autoencoder_forward.1} parent=1 // pred_fallthru
      _
    // Predicated region
    $region54: #{recurrent_autoencoder_forward.1} parent=1 // pred_check
      _
    $region55: #{recurrent_autoencoder_forward.1} parent=1 // pred_check_branch
      %118 = sbr.rel (0) target = $region57
    $region56: #{recurrent_autoencoder_forward.1} parent=1 // pred_region
      %119 = dma.done [#allocation10], 2048
    $region57: #{recurrent_autoencoder_forward.1} parent=1 // pred_fallthru
      _
    // Predicated region
    $region58: #{recurrent_autoencoder_forward.1} parent=1 // pred_check
      _
    $region59: #{recurrent_autoencoder_forward.1} parent=1 // pred_check_branch
      %121 = sbr.rel (0) target = $region61
    $region60: #{recurrent_autoencoder_forward.1} parent=1 // pred_region
      %122 = dma.done [#allocation13], 32
    $region61: #{recurrent_autoencoder_forward.1} parent=1 // pred_fallthru
      _
    // Predicated region
    $region62: #{recurrent_autoencoder_forward.1} parent=1 // pred_check
      _
    $region63: #{recurrent_autoencoder_forward.1} parent=1 // pred_check_branch
      %124 = sbr.rel (0) target = $region65
    $region64: #{recurrent_autoencoder_forward.1} parent=1 // pred_region
      %125 = dma.done [#allocation13], 1024
    $region65: #{recurrent_autoencoder_forward.1} parent=1 // pred_fallthru
      _
    %v126 = vld [vmem:[#allocation8] sm:$0xff]
    %v127 = vld [vmem:[#allocation8 + $0x8] sm:$0xff]
    %v128 = vld [vmem:[#allocation8 + $0x10] sm:$0xff]
    %v129 = vld [vmem:[#allocation8 + $0x18] sm:$0xff]
    %v130 = vld [vmem:[#allocation3] sm:$0xff]
    %v131 = vld [vmem:[#allocation3 + $0x8] sm:$0xff]
    %v132 = vld [vmem:[#allocation6] sm:$0xff]
    %v133 = vld [vmem:[#allocation6 + $0x8] sm:$0xff]
    %v134 = vld [vmem:[#allocation6 + $0x10] sm:$0xff]
    %v135 = vld [vmem:[#allocation6 + $0x18] sm:$0xff]
    %v136 = vld [vmem:[#allocation6 + $0x20] sm:$0xff]
    %v137 = vld [vmem:[#allocation6 + $0x28] sm:$0xff]
    %v138 = vld [vmem:[#allocation6 + $0x30] sm:$0xff]
    %v139 = vld [vmem:[#allocation6 + $0x38] sm:$0xff]
    %v140 = vld [vmem:[#allocation6 + $0x40] sm:$0xff]
    %v141 = vld [vmem:[#allocation6 + $0x48] sm:$0xff]
    %v142 = vld [vmem:[#allocation6 + $0x50] sm:$0xff]
    %v143 = vld [vmem:[#allocation6 + $0x58] sm:$0xff]
    %v144 = vld [vmem:[#allocation6 + $0x60] sm:$0xff]
    %v145 = vld [vmem:[#allocation6 + $0x68] sm:$0xff]
    %v146 = vld [vmem:[#allocation6 + $0x70] sm:$0xff]
    %v147 = vld [vmem:[#allocation6 + $0x78] sm:$0xff]
    %v148 = vld [vmem:[%s3] sm:$0x1]
    %v150 = vlaneseq
    %v151 = vshrl.u32 %v150, 7
    %v152 = vsub.s32 0, %v151
    %v153 = vrot.slane %v148, %v152
    %155 = vmatprep.subr.mxu0 0.0
    %156 = vmatpush1.msra.mxu0 %v147
    %157 = vmatprep.subr.mxu0 0.0
    %158 = vmatpush1.msra.mxu0 %v146
    %159 = vmatprep.subr.mxu0 0.0
    %160 = vmatpush1.msra.mxu0 %v145
    %161 = vmatprep.subr.mxu0 0.0
    %162 = vmatpush1.msra.mxu0 %v144
    %163 = vmatprep.subr.mxu0 0.0
    %164 = vmatpush1.msra.mxu0 %v143
    %165 = vmatprep.subr.mxu0 0.0
    %166 = vmatpush1.msra.mxu0 %v142
    %167 = vmatprep.subr.mxu0 0.0
    %168 = vmatpush1.msra.mxu0 %v141
    %169 = vmatprep.subr.mxu0 0.0
    %170 = vmatpush1.msra.mxu0 %v140
    %171 = vmatprep.subr.mxu0 0.0
    %172 = vmatpush1.msra.mxu0 %v139
    %173 = vmatprep.subr.mxu0 0.0
    %174 = vmatpush1.msra.mxu0 %v138
    %175 = vmatprep.subr.mxu0 0.0
    %176 = vmatpush1.msra.mxu0 %v137
    %177 = vmatprep.subr.mxu0 0.0
    %178 = vmatpush1.msra.mxu0 %v136
    %179 = vmatprep.subr.mxu0 0.0
    %180 = vmatpush1.msra.mxu0 %v135
    %181 = vmatprep.subr.mxu0 0.0
    %182 = vmatpush1.msra.mxu0 %v134
    %183 = vmatprep.subr.mxu0 0.0
    %184 = vmatpush1.msra.mxu0 %v133
    %185 = vmatprep.subr.mxu0 0.0
    %186 = vmatpush1.msra.mxu0 %v132
    %187 = vmatprep.subr.mxu0 0.0
    %188 = vmatpush2.msra.mxu0 0.0
    %189 = vmatprep.subr.mxu0 0.0
    %190 = vmatpush2.msra.mxu0 0.0
    %191 = vmatprep.subr.mxu0 0.0
    %192 = vmatpush2.msra.mxu0 0.0
    %193 = vmatprep.subr.mxu0 0.0
    %194 = vmatpush2.msra.mxu0 0.0
    %195 = vmatprep.subr.mxu0 0.0
    %196 = vmatpush2.msra.mxu0 0.0
    %197 = vmatprep.subr.mxu0 0.0
    %198 = vmatpush2.msra.mxu0 0.0
    %199 = vmatprep.subr.mxu0 0.0
    %200 = vmatpush2.msra.mxu0 0.0
    %201 = vmatprep.subr.mxu0 0.0
    %202 = vmatpush2.msra.mxu0 0.0
    %203 = vmatprep.subr.mxu0 0.0
    %204 = vmatpush2.msra.mxu0 0.0
    %205 = vmatprep.subr.mxu0 0.0
    %206 = vmatpush2.msra.mxu0 0.0
    %207 = vmatprep.subr.mxu0 0.0
    %208 = vmatpush2.msra.mxu0 0.0
    %209 = vmatprep.subr.mxu0 0.0
    %210 = vmatpush2.msra.mxu0 0.0
    %211 = vmatprep.subr.mxu0 0.0
    %212 = vmatpush2.msra.mxu0 0.0
    %213 = vmatprep.subr.mxu0 0.0
    %214 = vmatpush2.msra.mxu0 0.0
    %215 = vmatprep.subr.mxu0 0.0
    %216 = vmatpush2.msra.mxu0 0.0
    %217 = vmatprep.subr.mxu0 0.0
    %218 = vmatpush2.msra.mxu0 0.0
    %219 = vmatprep.mubr.f32.mxu0 0.0
    %220 = vmatmul.mubr.f32.gmra.mxu0 %v130
    %v221 = vpop.f32.mrf.mxu0
    %v222 = vadd.f32 %v153, %v221
    %v223 = vpop.f32.mrf.mxu0
    %224 = vmatprep.mubr.f32.mxu0 0.0
    %225 = vmatmul.mubr.f32.gmra.mxu0 %v131
    %v226 = vpop.f32.mrf.mxu0
    %v227 = vadd.f32 %v153, %v226
    %v228 = vpop.f32.mrf.mxu0
    %229 = vdwg.mxu0
    %vm230 = vcmask 261120
    %v232 = vsel %vm230, 0.0, 0
    %234 = vmatprep.subr.mxu0 0.0
    %235 = vmatpush1.msra.mxu0 0.0
    %236 = vmatprep.subr.mxu0 0.0
    %237 = vmatpush1.msra.mxu0 0.0
    %238 = vmatprep.subr.mxu0 0.0
    %239 = vmatpush1.msra.mxu0 0.0
    %240 = vmatprep.subr.mxu0 0.0
    %241 = vmatpush1.msra.mxu0 0.0
    %242 = vmatprep.subr.mxu0 0.0
    %243 = vmatpush1.msra.mxu0 0.0
    %244 = vmatprep.subr.mxu0 0.0
    %245 = vmatpush1.msra.mxu0 0.0
    %246 = vmatprep.subr.mxu0 0.0
    %247 = vmatpush1.msra.mxu0 0.0
    %248 = vmatprep.subr.mxu0 0.0
    %249 = vmatpush1.msra.mxu0 0.0
    %250 = vmatprep.subr.mxu0 0.0
    %251 = vmatpush1.msra.mxu0 0.0
    %252 = vmatprep.subr.mxu0 0.0
    %253 = vmatpush1.msra.mxu0 0.0
    %254 = vmatprep.subr.mxu0 0.0
    %255 = vmatpush1.msra.mxu0 0.0
    %256 = vmatprep.subr.mxu0 0.0
    %257 = vmatpush1.msra.mxu0 0.0
    %258 = vmatprep.subr.mxu0 0.0
    %259 = vmatpush1.msra.mxu0 %v129
    %260 = vmatprep.subr.mxu0 0.0
    %261 = vmatpush1.msra.mxu0 %v128
    %262 = vmatprep.subr.mxu0 0.0
    %263 = vmatpush1.msra.mxu0 %v127
    %264 = vmatprep.subr.mxu0 0.0
    %265 = vmatpush1.msra.mxu0 %v126
    %266 = vmatprep.subr.mxu0 0.0
    %267 = vmatpush2.msra.mxu0 0.0
    %268 = vmatprep.subr.mxu0 0.0
    %269 = vmatpush2.msra.mxu0 0.0
    %270 = vmatprep.subr.mxu0 0.0
    %271 = vmatpush2.msra.mxu0 0.0
    %272 = vmatprep.subr.mxu0 0.0
    %273 = vmatpush2.msra.mxu0 0.0
    %274 = vmatprep.subr.mxu0 0.0
    %275 = vmatpush2.msra.mxu0 0.0
    %276 = vmatprep.subr.mxu0 0.0
    %277 = vmatpush2.msra.mxu0 0.0
    %278 = vmatprep.subr.mxu0 0.0
    %279 = vmatpush2.msra.mxu0 0.0
    %280 = vmatprep.subr.mxu0 0.0
    %281 = vmatpush2.msra.mxu0 0.0
    %282 = vmatprep.subr.mxu0 0.0
    %283 = vmatpush2.msra.mxu0 0.0
    %284 = vmatprep.subr.mxu0 0.0
    %285 = vmatpush2.msra.mxu0 0.0
    %286 = vmatprep.subr.mxu0 0.0
    %287 = vmatpush2.msra.mxu0 0.0
    %288 = vmatprep.subr.mxu0 0.0
    %289 = vmatpush2.msra.mxu0 0.0
    %290 = vmatprep.subr.mxu0 0.0
    %291 = vmatpush2.msra.mxu0 0.0
    %292 = vmatprep.subr.mxu0 0.0
    %293 = vmatpush2.msra.mxu0 0.0
    %294 = vmatprep.subr.mxu0 0.0
    %295 = vmatpush2.msra.mxu0 0.0
    %296 = vmatprep.subr.mxu0 0.0
    %297 = vmatpush2.msra.mxu0 0.0
    %298 = vmatprep.mubr.f32.mxu0 0.0
    %299 = vmatmul.mubr.f32.gmra.mxu0 %v232
    %v300 = vpop.f32.mrf.mxu0
    %v301 = vadd.f32 0.0, %v300
    %v302 = vpop.f32.mrf.mxu0
    %303 = vdwg.mxu0
    %v305 = vrot.slane %v301, 1
    %v308 = vadd.f32 %v222, %v301
    %v309 = vadd.f32 %v227, %v305
    %v310 = vxor.u32 %v308, 2147483648
    %v311 = vxor.u32 %v309, 2147483648
    %v312 = vmul.f32 %v310, 1.442695
    %v313 = vpow.pop %v312
    %v314 = vmul.f32 %v311, 1.442695
    %v315 = vpow.pop %v314
    %v316 = vadd.f32 %v313, 1.0
    %v317 = vadd.f32 %v315, 1.0
    %v318 = vrcp.pop %v316
    %v319 = vmul.f32 1.0, %v318
    %v320 = vrcp.pop %v317
    %v321 = vmul.f32 1.0, %v320
    %v322 = vtanh.pop %v308
    %v323 = vtanh.pop %v309
    %v324 = vmul.f32 %v319, 0.0
    %v325 = vmul.f32 %v321, 0.0
    %328 = vrot.lane.b32.xlu0 %v322, 64
    %v329 = vpop.permute.xlu0 %328
    %330 = vrot.lane.b32.xlu0 %v323, 64
    %v331 = vpop.permute.xlu0 %330
    %v334 = vmul.f32 %v319, %v329
    %v335 = vmul.f32 %v321, %v331
    %338 = vrot.lane.b32.xlu0 %v334, 32
    %v339 = vpop.permute.xlu0 %338
    %340 = vrot.lane.b32.xlu0 %v335, 32
    %v341 = vpop.permute.xlu0 %340
    %v344 = vadd.f32 %v324, %v339
    %v345 = vadd.f32 %v325, %v341
    %v346 = vtanh.pop %v344
    %v347 = vtanh.pop %v345
    %350 = vrot.lane.b32.xlu0 %v346, 64
    %v351 = vpop.permute.xlu0 %350
    %352 = vrot.lane.b32.xlu0 %v347, 64
    %v353 = vpop.permute.xlu0 %352
    %v356 = vmul.f32 %v319, %v351
    %v357 = vmul.f32 %v321, %v353
    %v360 = vrot.slane %v357, 7
    %vm361 = vcmask 1041409
    %v362 = vsel %vm361, %v360, %v356
    %363 = vrot.lane.b32.xlu0 %v362, 32
    %v364 = vpop.permute.xlu0 %363
    %v365 = vsel %vm230, %v364, 0
    %367 = vmatprep.subr.mxu0 0.0
    %368 = vmatpush1.msra.mxu0 0.0
    %369 = vmatprep.subr.mxu0 0.0
    %370 = vmatpush1.msra.mxu0 0.0
    %371 = vmatprep.subr.mxu0 0.0
    %372 = vmatpush1.msra.mxu0 0.0
    %373 = vmatprep.subr.mxu0 0.0
    %374 = vmatpush1.msra.mxu0 0.0
    %375 = vmatprep.subr.mxu0 0.0
    %376 = vmatpush1.msra.mxu0 0.0
    %377 = vmatprep.subr.mxu0 0.0
    %378 = vmatpush1.msra.mxu0 0.0
    %379 = vmatprep.subr.mxu0 0.0
    %380 = vmatpush1.msra.mxu0 0.0
    %381 = vmatprep.subr.mxu0 0.0
    %382 = vmatpush1.msra.mxu0 0.0
    %383 = vmatprep.subr.mxu0 0.0
    %384 = vmatpush1.msra.mxu0 0.0
    %385 = vmatprep.subr.mxu0 0.0
    %386 = vmatpush1.msra.mxu0 0.0
    %387 = vmatprep.subr.mxu0 0.0
    %388 = vmatpush1.msra.mxu0 0.0
    %389 = vmatprep.subr.mxu0 0.0
    %390 = vmatpush1.msra.mxu0 0.0
    %391 = vmatprep.subr.mxu0 0.0
    %392 = vmatpush1.msra.mxu0 %v129
    %393 = vmatprep.subr.mxu0 0.0
    %394 = vmatpush1.msra.mxu0 %v128
    %395 = vmatprep.subr.mxu0 0.0
    %396 = vmatpush1.msra.mxu0 %v127
    %397 = vmatprep.subr.mxu0 0.0
    %398 = vmatpush1.msra.mxu0 %v126
    %399 = vmatprep.subr.mxu0 0.0
    %400 = vmatpush2.msra.mxu0 0.0
    %401 = vmatprep.subr.mxu0 0.0
    %402 = vmatpush2.msra.mxu0 0.0
    %403 = vmatprep.subr.mxu0 0.0
    %404 = vmatpush2.msra.mxu0 0.0
    %405 = vmatprep.subr.mxu0 0.0
    %406 = vmatpush2.msra.mxu0 0.0
    %407 = vmatprep.subr.mxu0 0.0
    %408 = vmatpush2.msra.mxu0 0.0
    %409 = vmatprep.subr.mxu0 0.0
    %410 = vmatpush2.msra.mxu0 0.0
    %411 = vmatprep.subr.mxu0 0.0
    %412 = vmatpush2.msra.mxu0 0.0
    %413 = vmatprep.subr.mxu0 0.0
    %414 = vmatpush2.msra.mxu0 0.0
    %415 = vmatprep.subr.mxu0 0.0
    %416 = vmatpush2.msra.mxu0 0.0
    %417 = vmatprep.subr.mxu0 0.0
    %418 = vmatpush2.msra.mxu0 0.0
    %419 = vmatprep.subr.mxu0 0.0
    %420 = vmatpush2.msra.mxu0 0.0
    %421 = vmatprep.subr.mxu0 0.0
    %422 = vmatpush2.msra.mxu0 0.0
    %423 = vmatprep.subr.mxu0 0.0
    %424 = vmatpush2.msra.mxu0 0.0
    %425 = vmatprep.subr.mxu0 0.0
    %426 = vmatpush2.msra.mxu0 0.0
    %427 = vmatprep.subr.mxu0 0.0
    %428 = vmatpush2.msra.mxu0 0.0
    %429 = vmatprep.subr.mxu0 0.0
    %430 = vmatpush2.msra.mxu0 0.0
    %431 = vmatprep.mubr.f32.mxu0 0.0
    %432 = vmatmul.mubr.f32.gmra.mxu0 %v365
    %v433 = vpop.f32.mrf.mxu0
    %v434 = vadd.f32 0.0, %v433
    %v435 = vpop.f32.mrf.mxu0
    %436 = vdwg.mxu0
    %v438 = vrot.slane %v434, 7
    %v441 = vadd.f32 %v222, %v438
    %v442 = vadd.f32 %v227, %v434
    %v443 = vxor.u32 %v441, 2147483648
    %v444 = vxor.u32 %v442, 2147483648
    %v445 = vmul.f32 %v443, 1.442695
    %v446 = vpow.pop %v445
    %v447 = vmul.f32 %v444, 1.442695
    %v448 = vpow.pop %v447
    %v449 = vadd.f32 %v446, 1.0
    %v450 = vadd.f32 %v448, 1.0
    %v451 = vrcp.pop %v449
    %v452 = vmul.f32 1.0, %v451
    %v453 = vrcp.pop %v450
    %v454 = vmul.f32 1.0, %v453
    %v455 = vtanh.pop %v441
    %v456 = vtanh.pop %v442
    %v459 = vrot.slane %v344, 7
    %v460 = vrot.slane %v345, 7
    %v463 = vmul.f32 %v452, %v459
    %v464 = vmul.f32 %v454, %v460
    %467 = vrot.lane.b32.xlu0 %v455, 64
    %v468 = vpop.permute.xlu0 %467
    %469 = vrot.lane.b32.xlu0 %v456, 64
    %v470 = vpop.permute.xlu0 %469
    %v473 = vmul.f32 %v452, %v468
    %v474 = vmul.f32 %v454, %v470
    %477 = vrot.lane.b32.xlu0 %v473, 32
    %v478 = vpop.permute.xlu0 %477
    %479 = vrot.lane.b32.xlu0 %v474, 32
    %v480 = vpop.permute.xlu0 %479
    %v483 = vadd.f32 %v463, %v478
    %v484 = vadd.f32 %v464, %v480
    %v485 = vtanh.pop %v483
    %v486 = vtanh.pop %v484
    %489 = vrot.lane.b32.xlu0 %v485, 64
    %v490 = vpop.permute.xlu0 %489
    %491 = vrot.lane.b32.xlu0 %v486, 64
    %v492 = vpop.permute.xlu0 %491
    %v495 = vmul.f32 %v452, %v490
    %v496 = vmul.f32 %v454, %v492
    %v499 = vrot.slane %v495, 1
    %v500 = vsel %vm361, %v496, %v499
    %501 = vrot.lane.b32.xlu0 %v500, 32
    %v502 = vpop.permute.xlu0 %501
    %v503 = vsel %vm230, %v502, 0
    %505 = vmatprep.subr.mxu0 0.0
    %506 = vmatpush1.msra.mxu0 0.0
    %507 = vmatprep.subr.mxu0 0.0
    %508 = vmatpush1.msra.mxu0 0.0
    %509 = vmatprep.subr.mxu0 0.0
    %510 = vmatpush1.msra.mxu0 0.0
    %511 = vmatprep.subr.mxu0 0.0
    %512 = vmatpush1.msra.mxu0 0.0
    %513 = vmatprep.subr.mxu0 0.0
    %514 = vmatpush1.msra.mxu0 0.0
    %515 = vmatprep.subr.mxu0 0.0
    %516 = vmatpush1.msra.mxu0 0.0
    %517 = vmatprep.subr.mxu0 0.0
    %518 = vmatpush1.msra.mxu0 0.0
    %519 = vmatprep.subr.mxu0 0.0
    %520 = vmatpush1.msra.mxu0 0.0
    %521 = vmatprep.subr.mxu0 0.0
    %522 = vmatpush1.msra.mxu0 0.0
    %523 = vmatprep.subr.mxu0 0.0
    %524 = vmatpush1.msra.mxu0 0.0
    %525 = vmatprep.subr.mxu0 0.0
    %526 = vmatpush1.msra.mxu0 0.0
    %527 = vmatprep.subr.mxu0 0.0
    %528 = vmatpush1.msra.mxu0 0.0
    %529 = vmatprep.subr.mxu0 0.0
    %530 = vmatpush1.msra.mxu0 %v129
    %531 = vmatprep.subr.mxu0 0.0
    %532 = vmatpush1.msra.mxu0 %v128
    %533 = vmatprep.subr.mxu0 0.0
    %534 = vmatpush1.msra.mxu0 %v127
    %535 = vmatprep.subr.mxu0 0.0
    %536 = vmatpush1.msra.mxu0 %v126
    %537 = vmatprep.subr.mxu0 0.0
    %538 = vmatpush2.msra.mxu0 0.0
    %539 = vmatprep.subr.mxu0 0.0
    %540 = vmatpush2.msra.mxu0 0.0
    %541 = vmatprep.subr.mxu0 0.0
    %542 = vmatpush2.msra.mxu0 0.0
    %543 = vmatprep.subr.mxu0 0.0
    %544 = vmatpush2.msra.mxu0 0.0
    %545 = vmatprep.subr.mxu0 0.0
    %546 = vmatpush2.msra.mxu0 0.0
    %547 = vmatprep.subr.mxu0 0.0
    %548 = vmatpush2.msra.mxu0 0.0
    %549 = vmatprep.subr.mxu0 0.0
    %550 = vmatpush2.msra.mxu0 0.0
    %551 = vmatprep.subr.mxu0 0.0
    %552 = vmatpush2.msra.mxu0 0.0
    %553 = vmatprep.subr.mxu0 0.0
    %554 = vmatpush2.msra.mxu0 0.0
    %555 = vmatprep.subr.mxu0 0.0
    %556 = vmatpush2.msra.mxu0 0.0
    %557 = vmatprep.subr.mxu0 0.0
    %558 = vmatpush2.msra.mxu0 0.0
    %559 = vmatprep.subr.mxu0 0.0
    %560 = vmatpush2.msra.mxu0 0.0
    %561 = vmatprep.subr.mxu0 0.0
    %562 = vmatpush2.msra.mxu0 0.0
    %563 = vmatprep.subr.mxu0 0.0
    %564 = vmatpush2.msra.mxu0 0.0
    %565 = vmatprep.subr.mxu0 0.0
    %566 = vmatpush2.msra.mxu0 0.0
    %567 = vmatprep.subr.mxu0 0.0
    %568 = vmatpush2.msra.mxu0 0.0
    %569 = vmatprep.mubr.f32.mxu0 0.0
    %570 = vmatmul.mubr.f32.gmra.mxu0 %v503
    %v571 = vpop.f32.mrf.mxu0
    %v572 = vadd.f32 0.0, %v571
    %v573 = vpop.f32.mrf.mxu0
    %574 = vdwg.mxu0
    %v576 = vrot.slane %v572, 6
    %v577 = vrot.slane %v572, 7
    %v580 = vadd.f32 %v222, %v576
    %v581 = vadd.f32 %v227, %v577
    %v582 = vxor.u32 %v580, 2147483648
    %v583 = vxor.u32 %v581, 2147483648
    %v584 = vmul.f32 %v582, 1.442695
    %v585 = vpow.pop %v584
    %v586 = vmul.f32 %v583, 1.442695
    %v587 = vpow.pop %v586
    %v588 = vadd.f32 %v585, 1.0
    %v589 = vadd.f32 %v587, 1.0
    %v590 = vrcp.pop %v588
    %v591 = vmul.f32 1.0, %v590
    %v592 = vrcp.pop %v589
    %v593 = vmul.f32 1.0, %v592
    %v594 = vtanh.pop %v580
    %v595 = vtanh.pop %v581
    %v598 = vrot.slane %v483, 7
    %v599 = vrot.slane %v484, 7
    %v602 = vmul.f32 %v591, %v598
    %v603 = vmul.f32 %v593, %v599
    %606 = vrot.lane.b32.xlu0 %v594, 64
    %v607 = vpop.permute.xlu0 %606
    %608 = vrot.lane.b32.xlu0 %v595, 64
    %v609 = vpop.permute.xlu0 %608
    %v612 = vmul.f32 %v591, %v607
    %v613 = vmul.f32 %v593, %v609
    %616 = vrot.lane.b32.xlu0 %v612, 32
    %v617 = vpop.permute.xlu0 %616
    %618 = vrot.lane.b32.xlu0 %v613, 32
    %v619 = vpop.permute.xlu0 %618
    %v622 = vadd.f32 %v602, %v617
    %v623 = vadd.f32 %v603, %v619
    %v624 = vtanh.pop %v622
    %v625 = vtanh.pop %v623
    %628 = vrot.lane.b32.xlu0 %v624, 64
    %v629 = vpop.permute.xlu0 %628
    %630 = vrot.lane.b32.xlu0 %v625, 64
    %v631 = vpop.permute.xlu0 %630
    %v634 = vmul.f32 %v591, %v629
    %v635 = vmul.f32 %v593, %v631
    %v638 = vrot.slane %v634, 2
    %v639 = vrot.slane %v635, 1
    %v640 = vsel %vm361, %v639, %v638
    %641 = vrot.lane.b32.xlu0 %v640, 32
    %v642 = vpop.permute.xlu0 %641
    %v643 = vsel %vm230, %v642, 0
    %645 = vmatprep.subr.mxu0 0.0
    %646 = vmatpush1.msra.mxu0 0.0
    %647 = vmatprep.subr.mxu0 0.0
    %648 = vmatpush1.msra.mxu0 0.0
    %649 = vmatprep.subr.mxu0 0.0
    %650 = vmatpush1.msra.mxu0 0.0
    %651 = vmatprep.subr.mxu0 0.0
    %652 = vmatpush1.msra.mxu0 0.0
    %653 = vmatprep.subr.mxu0 0.0
    %654 = vmatpush1.msra.mxu0 0.0
    %655 = vmatprep.subr.mxu0 0.0
    %656 = vmatpush1.msra.mxu0 0.0
    %657 = vmatprep.subr.mxu0 0.0
    %658 = vmatpush1.msra.mxu0 0.0
    %659 = vmatprep.subr.mxu0 0.0
    %660 = vmatpush1.msra.mxu0 0.0
    %661 = vmatprep.subr.mxu0 0.0
    %662 = vmatpush1.msra.mxu0 0.0
    %663 = vmatprep.subr.mxu0 0.0
    %664 = vmatpush1.msra.mxu0 0.0
    %665 = vmatprep.subr.mxu0 0.0
    %666 = vmatpush1.msra.mxu0 0.0
    %667 = vmatprep.subr.mxu0 0.0
    %668 = vmatpush1.msra.mxu0 0.0
    %669 = vmatprep.subr.mxu0 0.0
    %670 = vmatpush1.msra.mxu0 %v129
    %671 = vmatprep.subr.mxu0 0.0
    %672 = vmatpush1.msra.mxu0 %v128
    %673 = vmatprep.subr.mxu0 0.0
    %674 = vmatpush1.msra.mxu0 %v127
    %675 = vmatprep.subr.mxu0 0.0
    %676 = vmatpush1.msra.mxu0 %v126
    %677 = vmatprep.subr.mxu0 0.0
    %678 = vmatpush2.msra.mxu0 0.0
    %679 = vmatprep.subr.mxu0 0.0
    %680 = vmatpush2.msra.mxu0 0.0
    %681 = vmatprep.subr.mxu0 0.0
    %682 = vmatpush2.msra.mxu0 0.0
    %683 = vmatprep.subr.mxu0 0.0
    %684 = vmatpush2.msra.mxu0 0.0
    %685 = vmatprep.subr.mxu0 0.0
    %686 = vmatpush2.msra.mxu0 0.0
    %687 = vmatprep.subr.mxu0 0.0
    %688 = vmatpush2.msra.mxu0 0.0
    %689 = vmatprep.subr.mxu0 0.0
    %690 = vmatpush2.msra.mxu0 0.0
    %691 = vmatprep.subr.mxu0 0.0
    %692 = vmatpush2.msra.mxu0 0.0
    %693 = vmatprep.subr.mxu0 0.0
    %694 = vmatpush2.msra.mxu0 0.0
    %695 = vmatprep.subr.mxu0 0.0
    %696 = vmatpush2.msra.mxu0 0.0
    %697 = vmatprep.subr.mxu0 0.0
    %698 = vmatpush2.msra.mxu0 0.0
    %699 = vmatprep.subr.mxu0 0.0
    %700 = vmatpush2.msra.mxu0 0.0
    %701 = vmatprep.subr.mxu0 0.0
    %702 = vmatpush2.msra.mxu0 0.0
    %703 = vmatprep.subr.mxu0 0.0
    %704 = vmatpush2.msra.mxu0 0.0
    %705 = vmatprep.subr.mxu0 0.0
    %706 = vmatpush2.msra.mxu0 0.0
    %707 = vmatprep.subr.mxu0 0.0
    %708 = vmatpush2.msra.mxu0 0.0
    %709 = vmatprep.mubr.f32.mxu0 0.0
    %710 = vmatmul.mubr.f32.gmra.mxu0 %v643
    %v711 = vpop.f32.mrf.mxu0
    %v712 = vadd.f32 0.0, %v711
    %v713 = vpop.f32.mrf.mxu0
    %714 = vdwg.mxu0
    %v716 = vrot.slane %v712, 5
    %v717 = vrot.slane %v712, 6
    %v720 = vadd.f32 %v222, %v716
    %v721 = vadd.f32 %v227, %v717
    %v722 = vxor.u32 %v720, 2147483648
    %v723 = vxor.u32 %v721, 2147483648
    %v724 = vmul.f32 %v722, 1.442695
    %v725 = vpow.pop %v724
    %v726 = vmul.f32 %v723, 1.442695
    %v727 = vpow.pop %v726
    %v728 = vadd.f32 %v725, 1.0
    %v729 = vadd.f32 %v727, 1.0
    %v730 = vrcp.pop %v728
    %v731 = vmul.f32 1.0, %v730
    %v732 = vrcp.pop %v729
    %v733 = vmul.f32 1.0, %v732
    %v734 = vtanh.pop %v720
    %v735 = vtanh.pop %v721
    %v738 = vrot.slane %v622, 7
    %v739 = vrot.slane %v623, 7
    %v742 = vmul.f32 %v731, %v738
    %v743 = vmul.f32 %v733, %v739
    %746 = vrot.lane.b32.xlu0 %v734, 64
    %v747 = vpop.permute.xlu0 %746
    %748 = vrot.lane.b32.xlu0 %v735, 64
    %v749 = vpop.permute.xlu0 %748
    %v752 = vmul.f32 %v731, %v747
    %v753 = vmul.f32 %v733, %v749
    %756 = vrot.lane.b32.xlu0 %v752, 32
    %v757 = vpop.permute.xlu0 %756
    %758 = vrot.lane.b32.xlu0 %v753, 32
    %v759 = vpop.permute.xlu0 %758
    %v762 = vadd.f32 %v742, %v757
    %v763 = vadd.f32 %v743, %v759
    %v764 = vtanh.pop %v762
    %v765 = vtanh.pop %v763
    %768 = vrot.lane.b32.xlu0 %v764, 64
    %v769 = vpop.permute.xlu0 %768
    %770 = vrot.lane.b32.xlu0 %v765, 64
    %v771 = vpop.permute.xlu0 %770
    %v774 = vmul.f32 %v731, %v769
    %v775 = vmul.f32 %v733, %v771
    %v778 = vrot.slane %v774, 3
    %v779 = vrot.slane %v775, 2
    %v780 = vsel %vm361, %v779, %v778
    %781 = vrot.lane.b32.xlu0 %v780, 32
    %v782 = vpop.permute.xlu0 %781
    %v783 = vsel %vm230, %v782, 0
    %785 = vmatprep.subr.mxu0 0.0
    %786 = vmatpush1.msra.mxu0 0.0
    %787 = vmatprep.subr.mxu0 0.0
    %788 = vmatpush1.msra.mxu0 0.0
    %789 = vmatprep.subr.mxu0 0.0
    %790 = vmatpush1.msra.mxu0 0.0
    %791 = vmatprep.subr.mxu0 0.0
    %792 = vmatpush1.msra.mxu0 0.0
    %793 = vmatprep.subr.mxu0 0.0
    %794 = vmatpush1.msra.mxu0 0.0
    %795 = vmatprep.subr.mxu0 0.0
    %796 = vmatpush1.msra.mxu0 0.0
    %797 = vmatprep.subr.mxu0 0.0
    %798 = vmatpush1.msra.mxu0 0.0
    %799 = vmatprep.subr.mxu0 0.0
    %800 = vmatpush1.msra.mxu0 0.0
    %801 = vmatprep.subr.mxu0 0.0
    %802 = vmatpush1.msra.mxu0 0.0
    %803 = vmatprep.subr.mxu0 0.0
    %804 = vmatpush1.msra.mxu0 0.0
    %805 = vmatprep.subr.mxu0 0.0
    %806 = vmatpush1.msra.mxu0 0.0
    %807 = vmatprep.subr.mxu0 0.0
    %808 = vmatpush1.msra.mxu0 0.0
    %809 = vmatprep.subr.mxu0 0.0
    %810 = vmatpush1.msra.mxu0 %v129
    %811 = vmatprep.subr.mxu0 0.0
    %812 = vmatpush1.msra.mxu0 %v128
    %813 = vmatprep.subr.mxu0 0.0
    %814 = vmatpush1.msra.mxu0 %v127
    %815 = vmatprep.subr.mxu0 0.0
    %816 = vmatpush1.msra.mxu0 %v126
    %817 = vmatprep.subr.mxu0 0.0
    %818 = vmatpush2.msra.mxu0 0.0
    %819 = vmatprep.subr.mxu0 0.0
    %820 = vmatpush2.msra.mxu0 0.0
    %821 = vmatprep.subr.mxu0 0.0
    %822 = vmatpush2.msra.mxu0 0.0
    %823 = vmatprep.subr.mxu0 0.0
    %824 = vmatpush2.msra.mxu0 0.0
    %825 = vmatprep.subr.mxu0 0.0
    %826 = vmatpush2.msra.mxu0 0.0
    %827 = vmatprep.subr.mxu0 0.0
    %828 = vmatpush2.msra.mxu0 0.0
    %829 = vmatprep.subr.mxu0 0.0
    %830 = vmatpush2.msra.mxu0 0.0
    %831 = vmatprep.subr.mxu0 0.0
    %832 = vmatpush2.msra.mxu0 0.0
    %833 = vmatprep.subr.mxu0 0.0
    %834 = vmatpush2.msra.mxu0 0.0
    %835 = vmatprep.subr.mxu0 0.0
    %836 = vmatpush2.msra.mxu0 0.0
    %837 = vmatprep.subr.mxu0 0.0
    %838 = vmatpush2.msra.mxu0 0.0
    %839 = vmatprep.subr.mxu0 0.0
    %840 = vmatpush2.msra.mxu0 0.0
    %841 = vmatprep.subr.mxu0 0.0
    %842 = vmatpush2.msra.mxu0 0.0
    %843 = vmatprep.subr.mxu0 0.0
    %844 = vmatpush2.msra.mxu0 0.0
    %845 = vmatprep.subr.mxu0 0.0
    %846 = vmatpush2.msra.mxu0 0.0
    %847 = vmatprep.subr.mxu0 0.0
    %848 = vmatpush2.msra.mxu0 0.0
    %849 = vmatprep.mubr.f32.mxu0 0.0
    %850 = vmatmul.mubr.f32.gmra.mxu0 %v783
    %v851 = vpop.f32.mrf.mxu0
    %v852 = vadd.f32 0.0, %v851
    %v853 = vpop.f32.mrf.mxu0
    %854 = vdwg.mxu0
    %v856 = vrot.slane %v852, 4
    %v857 = vrot.slane %v852, 5
    %v860 = vadd.f32 %v222, %v856
    %v861 = vadd.f32 %v227, %v857
    %v862 = vxor.u32 %v860, 2147483648
    %v863 = vxor.u32 %v861, 2147483648
    %v864 = vmul.f32 %v862, 1.442695
    %v865 = vpow.pop %v864
    %v866 = vmul.f32 %v863, 1.442695
    %v867 = vpow.pop %v866
    %v868 = vadd.f32 %v865, 1.0
    %v869 = vadd.f32 %v867, 1.0
    %v870 = vrcp.pop %v868
    %v871 = vmul.f32 1.0, %v870
    %v872 = vrcp.pop %v869
    %v873 = vmul.f32 1.0, %v872
    %v874 = vtanh.pop %v860
    %v875 = vtanh.pop %v861
    %v878 = vrot.slane %v762, 7
    %v879 = vrot.slane %v763, 7
    %v882 = vmul.f32 %v871, %v878
    %v883 = vmul.f32 %v873, %v879
    %886 = vrot.lane.b32.xlu0 %v874, 64
    %v887 = vpop.permute.xlu0 %886
    %888 = vrot.lane.b32.xlu0 %v875, 64
    %v889 = vpop.permute.xlu0 %888
    %v892 = vmul.f32 %v871, %v887
    %v893 = vmul.f32 %v873, %v889
    %896 = vrot.lane.b32.xlu0 %v892, 32
    %v897 = vpop.permute.xlu0 %896
    %898 = vrot.lane.b32.xlu0 %v893, 32
    %v899 = vpop.permute.xlu0 %898
    %v902 = vadd.f32 %v882, %v897
    %v903 = vadd.f32 %v883, %v899
    %v904 = vtanh.pop %v902
    %v905 = vtanh.pop %v903
    %908 = vrot.lane.b32.xlu0 %v904, 64
    %v909 = vpop.permute.xlu0 %908
    %910 = vrot.lane.b32.xlu0 %v905, 64
    %v911 = vpop.permute.xlu0 %910
    %v914 = vmul.f32 %v871, %v909
    %v915 = vmul.f32 %v873, %v911
    %v918 = vrot.slane %v914, 4
    %v919 = vrot.slane %v915, 3
    %v920 = vsel %vm361, %v919, %v918
    %921 = vrot.lane.b32.xlu0 %v920, 32
    %v922 = vpop.permute.xlu0 %921
    %v923 = vsel %vm230, %v922, 0
    %925 = vmatprep.subr.mxu0 0.0
    %926 = vmatpush1.msra.mxu0 0.0
    %927 = vmatprep.subr.mxu0 0.0
    %928 = vmatpush1.msra.mxu0 0.0
    %929 = vmatprep.subr.mxu0 0.0
    %930 = vmatpush1.msra.mxu0 0.0
    %931 = vmatprep.subr.mxu0 0.0
    %932 = vmatpush1.msra.mxu0 0.0
    %933 = vmatprep.subr.mxu0 0.0
    %934 = vmatpush1.msra.mxu0 0.0
    %935 = vmatprep.subr.mxu0 0.0
    %936 = vmatpush1.msra.mxu0 0.0
    %937 = vmatprep.subr.mxu0 0.0
    %938 = vmatpush1.msra.mxu0 0.0
    %939 = vmatprep.subr.mxu0 0.0
    %940 = vmatpush1.msra.mxu0 0.0
    %941 = vmatprep.subr.mxu0 0.0
    %942 = vmatpush1.msra.mxu0 0.0
    %943 = vmatprep.subr.mxu0 0.0
    %944 = vmatpush1.msra.mxu0 0.0
    %945 = vmatprep.subr.mxu0 0.0
    %946 = vmatpush1.msra.mxu0 0.0
    %947 = vmatprep.subr.mxu0 0.0
    %948 = vmatpush1.msra.mxu0 0.0
    %949 = vmatprep.subr.mxu0 0.0
    %950 = vmatpush1.msra.mxu0 %v129
    %951 = vmatprep.subr.mxu0 0.0
    %952 = vmatpush1.msra.mxu0 %v128
    %953 = vmatprep.subr.mxu0 0.0
    %954 = vmatpush1.msra.mxu0 %v127
    %955 = vmatprep.subr.mxu0 0.0
    %956 = vmatpush1.msra.mxu0 %v126
    %957 = vmatprep.subr.mxu0 0.0
    %958 = vmatpush2.msra.mxu0 0.0
    %959 = vmatprep.subr.mxu0 0.0
    %960 = vmatpush2.msra.mxu0 0.0
    %961 = vmatprep.subr.mxu0 0.0
    %962 = vmatpush2.msra.mxu0 0.0
    %963 = vmatprep.subr.mxu0 0.0
    %964 = vmatpush2.msra.mxu0 0.0
    %965 = vmatprep.subr.mxu0 0.0
    %966 = vmatpush2.msra.mxu0 0.0
    %967 = vmatprep.subr.mxu0 0.0
    %968 = vmatpush2.msra.mxu0 0.0
    %969 = vmatprep.subr.mxu0 0.0
    %970 = vmatpush2.msra.mxu0 0.0
    %971 = vmatprep.subr.mxu0 0.0
    %972 = vmatpush2.msra.mxu0 0.0
    %973 = vmatprep.subr.mxu0 0.0
    %974 = vmatpush2.msra.mxu0 0.0
    %975 = vmatprep.subr.mxu0 0.0
    %976 = vmatpush2.msra.mxu0 0.0
    %977 = vmatprep.subr.mxu0 0.0
    %978 = vmatpush2.msra.mxu0 0.0
    %979 = vmatprep.subr.mxu0 0.0
    %980 = vmatpush2.msra.mxu0 0.0
    %981 = vmatprep.subr.mxu0 0.0
    %982 = vmatpush2.msra.mxu0 0.0
    %983 = vmatprep.subr.mxu0 0.0
    %984 = vmatpush2.msra.mxu0 0.0
    %985 = vmatprep.subr.mxu0 0.0
    %986 = vmatpush2.msra.mxu0 0.0
    %987 = vmatprep.subr.mxu0 0.0
    %988 = vmatpush2.msra.mxu0 0.0
    %989 = vmatprep.mubr.f32.mxu0 0.0
    %990 = vmatmul.mubr.f32.gmra.mxu0 %v923
    %v991 = vpop.f32.mrf.mxu0
    %v992 = vadd.f32 0.0, %v991
    %v993 = vpop.f32.mrf.mxu0
    %994 = vdwg.mxu0
    %v996 = vrot.slane %v992, 3
    %v997 = vrot.slane %v992, 4
    %v1000 = vadd.f32 %v222, %v996
    %v1001 = vadd.f32 %v227, %v997
    %v1002 = vxor.u32 %v1000, 2147483648
    %v1003 = vxor.u32 %v1001, 2147483648
    %v1004 = vmul.f32 %v1002, 1.442695
    %v1005 = vpow.pop %v1004
    %v1006 = vmul.f32 %v1003, 1.442695
    %v1007 = vpow.pop %v1006
    %v1008 = vadd.f32 %v1005, 1.0
    %v1009 = vadd.f32 %v1007, 1.0
    %v1010 = vrcp.pop %v1008
    %v1011 = vmul.f32 1.0, %v1010
    %v1012 = vrcp.pop %v1009
    %v1013 = vmul.f32 1.0, %v1012
    %v1014 = vtanh.pop %v1000
    %v1015 = vtanh.pop %v1001
    %v1018 = vrot.slane %v902, 7
    %v1019 = vrot.slane %v903, 7
    %v1022 = vmul.f32 %v1011, %v1018
    %v1023 = vmul.f32 %v1013, %v1019
    %1026 = vrot.lane.b32.xlu0 %v1014, 64
    %v1027 = vpop.permute.xlu0 %1026
    %1028 = vrot.lane.b32.xlu0 %v1015, 64
    %v1029 = vpop.permute.xlu0 %1028
    %v1032 = vmul.f32 %v1011, %v1027
    %v1033 = vmul.f32 %v1013, %v1029
    %1036 = vrot.lane.b32.xlu0 %v1032, 32
    %v1037 = vpop.permute.xlu0 %1036
    %1038 = vrot.lane.b32.xlu0 %v1033, 32
    %v1039 = vpop.permute.xlu0 %1038
    %v1042 = vadd.f32 %v1022, %v1037
    %v1043 = vadd.f32 %v1023, %v1039
    %v1044 = vtanh.pop %v1042
    %v1045 = vtanh.pop %v1043
    %1048 = vrot.lane.b32.xlu0 %v1044, 64
    %v1049 = vpop.permute.xlu0 %1048
    %1050 = vrot.lane.b32.xlu0 %v1045, 64
    %v1051 = vpop.permute.xlu0 %1050
    %v1054 = vmul.f32 %v1011, %v1049
    %v1055 = vmul.f32 %v1013, %v1051
    %v1058 = vrot.slane %v1054, 5
    %v1059 = vrot.slane %v1055, 4
    %v1060 = vsel %vm361, %v1059, %v1058
    %1061 = vrot.lane.b32.xlu0 %v1060, 32
    %v1062 = vpop.permute.xlu0 %1061
    %v1063 = vsel %vm230, %v1062, 0
    %1065 = vmatprep.subr.mxu0 0.0
    %1066 = vmatpush1.msra.mxu0 0.0
    %1067 = vmatprep.subr.mxu0 0.0
    %1068 = vmatpush1.msra.mxu0 0.0
    %1069 = vmatprep.subr.mxu0 0.0
    %1070 = vmatpush1.msra.mxu0 0.0
    %1071 = vmatprep.subr.mxu0 0.0
    %1072 = vmatpush1.msra.mxu0 0.0
    %1073 = vmatprep.subr.mxu0 0.0
    %1074 = vmatpush1.msra.mxu0 0.0
    %1075 = vmatprep.subr.mxu0 0.0
    %1076 = vmatpush1.msra.mxu0 0.0
    %1077 = vmatprep.subr.mxu0 0.0
    %1078 = vmatpush1.msra.mxu0 0.0
    %1079 = vmatprep.subr.mxu0 0.0
    %1080 = vmatpush1.msra.mxu0 0.0
    %1081 = vmatprep.subr.mxu0 0.0
    %1082 = vmatpush1.msra.mxu0 0.0
    %1083 = vmatprep.subr.mxu0 0.0
    %1084 = vmatpush1.msra.mxu0 0.0
    %1085 = vmatprep.subr.mxu0 0.0
    %1086 = vmatpush1.msra.mxu0 0.0
    %1087 = vmatprep.subr.mxu0 0.0
    %1088 = vmatpush1.msra.mxu0 0.0
    %1089 = vmatprep.subr.mxu0 0.0
    %1090 = vmatpush1.msra.mxu0 %v129
    %1091 = vmatprep.subr.mxu0 0.0
    %1092 = vmatpush1.msra.mxu0 %v128
    %1093 = vmatprep.subr.mxu0 0.0
    %1094 = vmatpush1.msra.mxu0 %v127
    %1095 = vmatprep.subr.mxu0 0.0
    %1096 = vmatpush1.msra.mxu0 %v126
    %1097 = vmatprep.subr.mxu0 0.0
    %1098 = vmatpush2.msra.mxu0 0.0
    %1099 = vmatprep.subr.mxu0 0.0
    %1100 = vmatpush2.msra.mxu0 0.0
    %1101 = vmatprep.subr.mxu0 0.0
    %1102 = vmatpush2.msra.mxu0 0.0
    %1103 = vmatprep.subr.mxu0 0.0
    %1104 = vmatpush2.msra.mxu0 0.0
    %1105 = vmatprep.subr.mxu0 0.0
    %1106 = vmatpush2.msra.mxu0 0.0
    %1107 = vmatprep.subr.mxu0 0.0
    %1108 = vmatpush2.msra.mxu0 0.0
    %1109 = vmatprep.subr.mxu0 0.0
    %1110 = vmatpush2.msra.mxu0 0.0
    %1111 = vmatprep.subr.mxu0 0.0
    %1112 = vmatpush2.msra.mxu0 0.0
    %1113 = vmatprep.subr.mxu0 0.0
    %1114 = vmatpush2.msra.mxu0 0.0
    %1115 = vmatprep.subr.mxu0 0.0
    %1116 = vmatpush2.msra.mxu0 0.0
    %1117 = vmatprep.subr.mxu0 0.0
    %1118 = vmatpush2.msra.mxu0 0.0
    %1119 = vmatprep.subr.mxu0 0.0
    %1120 = vmatpush2.msra.mxu0 0.0
    %1121 = vmatprep.subr.mxu0 0.0
    %1122 = vmatpush2.msra.mxu0 0.0
    %1123 = vmatprep.subr.mxu0 0.0
    %1124 = vmatpush2.msra.mxu0 0.0
    %1125 = vmatprep.subr.mxu0 0.0
    %1126 = vmatpush2.msra.mxu0 0.0
    %1127 = vmatprep.subr.mxu0 0.0
    %1128 = vmatpush2.msra.mxu0 0.0
    %1129 = vmatprep.mubr.f32.mxu0 0.0
    %1130 = vmatmul.mubr.f32.gmra.mxu0 %v1063
    %v1131 = vpop.f32.mrf.mxu0
    %v1132 = vadd.f32 0.0, %v1131
    %v1133 = vpop.f32.mrf.mxu0
    %1134 = vdwg.mxu0
    %v1136 = vrot.slane %v1132, 2
    %v1137 = vrot.slane %v1132, 3
    %v1140 = vadd.f32 %v222, %v1136
    %v1141 = vadd.f32 %v227, %v1137
    %v1142 = vxor.u32 %v1140, 2147483648
    %v1143 = vxor.u32 %v1141, 2147483648
    %v1144 = vmul.f32 %v1142, 1.442695
    %v1145 = vpow.pop %v1144
    %v1146 = vmul.f32 %v1143, 1.442695
    %v1147 = vpow.pop %v1146
    %v1148 = vadd.f32 %v1145, 1.0
    %v1149 = vadd.f32 %v1147, 1.0
    %v1150 = vrcp.pop %v1148
    %v1151 = vmul.f32 1.0, %v1150
    %v1152 = vrcp.pop %v1149
    %v1153 = vmul.f32 1.0, %v1152
    %v1154 = vtanh.pop %v1140
    %v1155 = vtanh.pop %v1141
    %v1158 = vrot.slane %v1042, 7
    %v1159 = vrot.slane %v1043, 7
    %v1162 = vmul.f32 %v1151, %v1158
    %v1163 = vmul.f32 %v1153, %v1159
    %1166 = vrot.lane.b32.xlu0 %v1154, 64
    %v1167 = vpop.permute.xlu0 %1166
    %1168 = vrot.lane.b32.xlu0 %v1155, 64
    %v1169 = vpop.permute.xlu0 %1168
    %v1172 = vmul.f32 %v1151, %v1167
    %v1173 = vmul.f32 %v1153, %v1169
    %1176 = vrot.lane.b32.xlu0 %v1172, 32
    %v1177 = vpop.permute.xlu0 %1176
    %1178 = vrot.lane.b32.xlu0 %v1173, 32
    %v1179 = vpop.permute.xlu0 %1178
    %v1182 = vadd.f32 %v1162, %v1177
    %v1183 = vadd.f32 %v1163, %v1179
    %v1184 = vtanh.pop %v1182
    %v1185 = vtanh.pop %v1183
    %1188 = vrot.lane.b32.xlu0 %v1184, 64
    %v1189 = vpop.permute.xlu0 %1188
    %1190 = vrot.lane.b32.xlu0 %v1185, 64
    %v1191 = vpop.permute.xlu0 %1190
    %v1194 = vmul.f32 %v1151, %v1189
    %v1195 = vmul.f32 %v1153, %v1191
    %v1198 = vrot.slane %v1194, 6
    %v1199 = vrot.slane %v1195, 5
    %v1200 = vsel %vm361, %v1199, %v1198
    %1201 = vrot.lane.b32.xlu0 %v1200, 32
    %v1202 = vpop.permute.xlu0 %1201
    %v1203 = vsel %vm230, %v1202, 0
    %1205 = vmatprep.subr.mxu0 0.0
    %1206 = vmatpush1.msra.mxu0 0.0
    %1207 = vmatprep.subr.mxu0 0.0
    %1208 = vmatpush1.msra.mxu0 0.0
    %1209 = vmatprep.subr.mxu0 0.0
    %1210 = vmatpush1.msra.mxu0 0.0
    %1211 = vmatprep.subr.mxu0 0.0
    %1212 = vmatpush1.msra.mxu0 0.0
    %1213 = vmatprep.subr.mxu0 0.0
    %1214 = vmatpush1.msra.mxu0 0.0
    %1215 = vmatprep.subr.mxu0 0.0
    %1216 = vmatpush1.msra.mxu0 0.0
    %1217 = vmatprep.subr.mxu0 0.0
    %1218 = vmatpush1.msra.mxu0 0.0
    %1219 = vmatprep.subr.mxu0 0.0
    %1220 = vmatpush1.msra.mxu0 0.0
    %1221 = vmatprep.subr.mxu0 0.0
    %1222 = vmatpush1.msra.mxu0 0.0
    %1223 = vmatprep.subr.mxu0 0.0
    %1224 = vmatpush1.msra.mxu0 0.0
    %1225 = vmatprep.subr.mxu0 0.0
    %1226 = vmatpush1.msra.mxu0 0.0
    %1227 = vmatprep.subr.mxu0 0.0
    %1228 = vmatpush1.msra.mxu0 0.0
    %1229 = vmatprep.subr.mxu0 0.0
    %1230 = vmatpush1.msra.mxu0 %v129
    %1231 = vmatprep.subr.mxu0 0.0
    %1232 = vmatpush1.msra.mxu0 %v128
    %1233 = vmatprep.subr.mxu0 0.0
    %1234 = vmatpush1.msra.mxu0 %v127
    %1235 = vmatprep.subr.mxu0 0.0
    %1236 = vmatpush1.msra.mxu0 %v126
    %1237 = vmatprep.subr.mxu0 0.0
    %1238 = vmatpush2.msra.mxu0 0.0
    %1239 = vmatprep.subr.mxu0 0.0
    %1240 = vmatpush2.msra.mxu0 0.0
    %1241 = vmatprep.subr.mxu0 0.0
    %1242 = vmatpush2.msra.mxu0 0.0
    %1243 = vmatprep.subr.mxu0 0.0
    %1244 = vmatpush2.msra.mxu0 0.0
    %1245 = vmatprep.subr.mxu0 0.0
    %1246 = vmatpush2.msra.mxu0 0.0
    %1247 = vmatprep.subr.mxu0 0.0
    %1248 = vmatpush2.msra.mxu0 0.0
    %1249 = vmatprep.subr.mxu0 0.0
    %1250 = vmatpush2.msra.mxu0 0.0
    %1251 = vmatprep.subr.mxu0 0.0
    %1252 = vmatpush2.msra.mxu0 0.0
    %1253 = vmatprep.subr.mxu0 0.0
    %1254 = vmatpush2.msra.mxu0 0.0
    %1255 = vmatprep.subr.mxu0 0.0
    %1256 = vmatpush2.msra.mxu0 0.0
    %1257 = vmatprep.subr.mxu0 0.0
    %1258 = vmatpush2.msra.mxu0 0.0
    %1259 = vmatprep.subr.mxu0 0.0
    %1260 = vmatpush2.msra.mxu0 0.0
    %1261 = vmatprep.subr.mxu0 0.0
    %1262 = vmatpush2.msra.mxu0 0.0
    %1263 = vmatprep.subr.mxu0 0.0
    %1264 = vmatpush2.msra.mxu0 0.0
    %1265 = vmatprep.subr.mxu0 0.0
    %1266 = vmatpush2.msra.mxu0 0.0
    %1267 = vmatprep.subr.mxu0 0.0
    %1268 = vmatpush2.msra.mxu0 0.0
    %1269 = vmatprep.mubr.f32.mxu0 0.0
    %1270 = vmatmul.mubr.f32.gmra.mxu0 %v1203
    %v1271 = vpop.f32.mrf.mxu0
    %v1272 = vadd.f32 0.0, %v1271
    %v1273 = vpop.f32.mrf.mxu0
    %1274 = vdwg.mxu0
    %v1276 = vrot.slane %v1272, 1
    %v1277 = vrot.slane %v1272, 2
    %v1280 = vadd.f32 %v222, %v1276
    %v1281 = vadd.f32 %v227, %v1277
    %v1282 = vxor.u32 %v1280, 2147483648
    %v1283 = vxor.u32 %v1281, 2147483648
    %v1284 = vmul.f32 %v1282, 1.442695
    %v1285 = vpow.pop %v1284
    %v1286 = vmul.f32 %v1283, 1.442695
    %v1287 = vpow.pop %v1286
    %v1288 = vadd.f32 %v1285, 1.0
    %v1289 = vadd.f32 %v1287, 1.0
    %v1290 = vrcp.pop %v1288
    %v1291 = vmul.f32 1.0, %v1290
    %v1292 = vrcp.pop %v1289
    %v1293 = vmul.f32 1.0, %v1292
    %v1294 = vtanh.pop %v1280
    %v1295 = vtanh.pop %v1281
    %v1298 = vrot.slane %v1182, 7
    %v1299 = vrot.slane %v1183, 7
    %v1302 = vmul.f32 %v1291, %v1298
    %v1303 = vmul.f32 %v1293, %v1299
    %1306 = vrot.lane.b32.xlu0 %v1294, 64
    %v1307 = vpop.permute.xlu0 %1306
    %1308 = vrot.lane.b32.xlu0 %v1295, 64
    %v1309 = vpop.permute.xlu0 %1308
    %v1312 = vmul.f32 %v1291, %v1307
    %v1313 = vmul.f32 %v1293, %v1309
    %1316 = vrot.lane.b32.xlu0 %v1312, 32
    %v1317 = vpop.permute.xlu0 %1316
    %1318 = vrot.lane.b32.xlu0 %v1313, 32
    %v1319 = vpop.permute.xlu0 %1318
    %v1322 = vadd.f32 %v1302, %v1317
    %v1323 = vadd.f32 %v1303, %v1319
    %v1324 = vtanh.pop %v1322
    %v1325 = vtanh.pop %v1323
    %1328 = vrot.lane.b32.xlu0 %v1324, 64
    %v1329 = vpop.permute.xlu0 %1328
    %1330 = vrot.lane.b32.xlu0 %v1325, 64
    %v1331 = vpop.permute.xlu0 %1330
    %v1334 = vmul.f32 %v1291, %v1329
    %v1335 = vmul.f32 %v1293, %v1331
    %v1336 = vld [vmem:[#allocation11] sm:$0xff]
    %v1337 = vld [vmem:[#allocation11 + $0x8] sm:$0xff]
    %v1338 = vld [vmem:[#allocation11 + $0x10] sm:$0xff]
    %v1339 = vld [vmem:[#allocation11 + $0x18] sm:$0xff]
    %v1340 = vld [vmem:[#allocation11 + $0x20] sm:$0xff]
    %v1341 = vld [vmem:[#allocation11 + $0x28] sm:$0xff]
    %v1342 = vld [vmem:[#allocation11 + $0x30] sm:$0xff]
    %v1343 = vld [vmem:[#allocation11 + $0x38] sm:$0xff]
    %v1344 = vld [vmem:[#allocation11 + $0x40] sm:$0xff]
    %v1345 = vld [vmem:[#allocation11 + $0x48] sm:$0xff]
    %v1346 = vld [vmem:[#allocation11 + $0x50] sm:$0xff]
    %v1347 = vld [vmem:[#allocation11 + $0x58] sm:$0xff]
    %v1348 = vld [vmem:[#allocation11 + $0x60] sm:$0xff]
    %v1349 = vld [vmem:[#allocation11 + $0x68] sm:$0xff]
    %v1350 = vld [vmem:[#allocation11 + $0x70] sm:$0xff]
    %v1351 = vld [vmem:[#allocation11 + $0x78] sm:$0xff]
    %v1352 = vld [vmem:[#allocation9] sm:$0xff]
    %v1353 = vld [vmem:[#allocation9 + $0x8] sm:$0xff]
    %v1354 = vld [vmem:[#allocation9 + $0x10] sm:$0xff]
    %v1355 = vld [vmem:[#allocation9 + $0x18] sm:$0xff]
    %v1356 = vld [vmem:[#allocation9 + $0x20] sm:$0xff]
    %v1357 = vld [vmem:[#allocation9 + $0x28] sm:$0xff]
    %v1358 = vld [vmem:[#allocation9 + $0x30] sm:$0xff]
    %v1359 = vld [vmem:[#allocation9 + $0x38] sm:$0xff]
    %v1360 = vld [vmem:[#allocation12] sm:$0x3]
    %v1362 = vlaneseq
    %v1363 = vshrl.u32 %v1362, 7
    %v1364 = vsub.s32 0, %v1363
    %v1365 = vrot.slane %v1360, %v1364
    %v1366 = vlaneseq
    %v1367 = vshrl.u32 %v1366, 7
    %v1368 = vsub.s32 1, %v1367
    %v1369 = vrot.slane %v1360, %v1368
    %v1374 = vrot.slane %v1334, 7
    %v1375 = vrot.slane %v1335, 6
    %v1376 = vsel %vm361, %v1375, %v1374
    %1377 = vrot.lane.b32.xlu0 %v1376, 32
    %v1378 = vpop.permute.xlu0 %1377
    %v1379 = vsel %vm230, %v1378, 0
    %1381 = vmatprep.subr.mxu0 0.0
    %1382 = vmatpush1.msra.mxu0 0.0
    %1383 = vmatprep.subr.mxu0 0.0
    %1384 = vmatpush1.msra.mxu0 0.0
    %1385 = vmatprep.subr.mxu0 0.0
    %1386 = vmatpush1.msra.mxu0 0.0
    %1387 = vmatprep.subr.mxu0 0.0
    %1388 = vmatpush1.msra.mxu0 0.0
    %1389 = vmatprep.subr.mxu0 0.0
    %1390 = vmatpush1.msra.mxu0 0.0
    %1391 = vmatprep.subr.mxu0 0.0
    %1392 = vmatpush1.msra.mxu0 0.0
    %1393 = vmatprep.subr.mxu0 0.0
    %1394 = vmatpush1.msra.mxu0 0.0
    %1395 = vmatprep.subr.mxu0 0.0
    %1396 = vmatpush1.msra.mxu0 0.0
    %1397 = vmatprep.subr.mxu0 0.0
    %1398 = vmatpush1.msra.mxu0 0.0
    %1399 = vmatprep.subr.mxu0 0.0
    %1400 = vmatpush1.msra.mxu0 0.0
    %1401 = vmatprep.subr.mxu0 0.0
    %1402 = vmatpush1.msra.mxu0 0.0
    %1403 = vmatprep.subr.mxu0 0.0
    %1404 = vmatpush1.msra.mxu0 0.0
    %1405 = vmatprep.subr.mxu0 %v1359
    %1406 = vmatpush1.msra.mxu0 %v1358
    %1407 = vmatprep.subr.mxu0 %v1357
    %1408 = vmatpush1.msra.mxu0 %v1356
    %1409 = vmatprep.subr.mxu0 %v1355
    %1410 = vmatpush1.msra.mxu0 %v1354
    %1411 = vmatprep.subr.mxu0 %v1353
    %1412 = vmatpush1.msra.mxu0 %v1352
    %1413 = vmatprep.subr.mxu0 0.0
    %1414 = vmatpush2.msra.mxu0 0.0
    %1415 = vmatprep.subr.mxu0 0.0
    %1416 = vmatpush2.msra.mxu0 0.0
    %1417 = vmatprep.subr.mxu0 0.0
    %1418 = vmatpush2.msra.mxu0 0.0
    %1419 = vmatprep.subr.mxu0 0.0
    %1420 = vmatpush2.msra.mxu0 0.0
    %1421 = vmatprep.subr.mxu0 0.0
    %1422 = vmatpush2.msra.mxu0 0.0
    %1423 = vmatprep.subr.mxu0 0.0
    %1424 = vmatpush2.msra.mxu0 0.0
    %1425 = vmatprep.subr.mxu0 0.0
    %1426 = vmatpush2.msra.mxu0 0.0
    %1427 = vmatprep.subr.mxu0 0.0
    %1428 = vmatpush2.msra.mxu0 0.0
    %1429 = vmatprep.subr.mxu0 0.0
    %1430 = vmatpush2.msra.mxu0 0.0
    %1431 = vmatprep.subr.mxu0 0.0
    %1432 = vmatpush2.msra.mxu0 0.0
    %1433 = vmatprep.subr.mxu0 0.0
    %1434 = vmatpush2.msra.mxu0 0.0
    %1435 = vmatprep.subr.mxu0 0.0
    %1436 = vmatpush2.msra.mxu0 0.0
    %1437 = vmatprep.subr.mxu0 0.0
    %1438 = vmatpush2.msra.mxu0 0.0
    %1439 = vmatprep.subr.mxu0 0.0
    %1440 = vmatpush2.msra.mxu0 0.0
    %1441 = vmatprep.subr.mxu0 0.0
    %1442 = vmatpush2.msra.mxu0 0.0
    %1443 = vmatprep.subr.mxu0 0.0
    %1444 = vmatpush2.msra.mxu0 0.0
    %1445 = vmatprep.mubr.f32.mxu0 0.0
    %1446 = vmatmul.mubr.f32.gmra.mxu0 %v1379
    %v1447 = vpop.f32.mrf.mxu0
    %v1448 = vadd.f32 %v1365, %v1447
    %v1449 = vpop.f32.mrf.mxu0
    %v1450 = vadd.f32 %v1369, %v1449
    %1451 = vdwg.mxu0
    %vm1452 = vcmask 523264
    %v1453 = vsel %vm1452, 0.0, 0
    %1455 = vmatprep.subr.mxu0 0.0
    %1456 = vmatpush1.msra.mxu0 0.0
    %1457 = vmatprep.subr.mxu0 0.0
    %1458 = vmatpush1.msra.mxu0 0.0
    %1459 = vmatprep.subr.mxu0 0.0
    %1460 = vmatpush1.msra.mxu0 0.0
    %1461 = vmatprep.subr.mxu0 0.0
    %1462 = vmatpush1.msra.mxu0 0.0
    %1463 = vmatprep.subr.mxu0 0.0
    %1464 = vmatpush1.msra.mxu0 0.0
    %1465 = vmatprep.subr.mxu0 0.0
    %1466 = vmatpush1.msra.mxu0 0.0
    %1467 = vmatprep.subr.mxu0 0.0
    %1468 = vmatpush1.msra.mxu0 0.0
    %1469 = vmatprep.subr.mxu0 0.0
    %1470 = vmatpush1.msra.mxu0 0.0
    %1471 = vmatprep.subr.mxu0 %v1351
    %1472 = vmatpush1.msra.mxu0 %v1350
    %1473 = vmatprep.subr.mxu0 %v1349
    %1474 = vmatpush1.msra.mxu0 %v1348
    %1475 = vmatprep.subr.mxu0 %v1347
    %1476 = vmatpush1.msra.mxu0 %v1346
    %1477 = vmatprep.subr.mxu0 %v1345
    %1478 = vmatpush1.msra.mxu0 %v1344
    %1479 = vmatprep.subr.mxu0 %v1343
    %1480 = vmatpush1.msra.mxu0 %v1342
    %1481 = vmatprep.subr.mxu0 %v1341
    %1482 = vmatpush1.msra.mxu0 %v1340
    %1483 = vmatprep.subr.mxu0 %v1339
    %1484 = vmatpush1.msra.mxu0 %v1338
    %1485 = vmatprep.subr.mxu0 %v1337
    %1486 = vmatpush1.msra.mxu0 %v1336
    %1487 = vmatprep.subr.mxu0 0.0
    %1488 = vmatpush2.msra.mxu0 0.0
    %1489 = vmatprep.subr.mxu0 0.0
    %1490 = vmatpush2.msra.mxu0 0.0
    %1491 = vmatprep.subr.mxu0 0.0
    %1492 = vmatpush2.msra.mxu0 0.0
    %1493 = vmatprep.subr.mxu0 0.0
    %1494 = vmatpush2.msra.mxu0 0.0
    %1495 = vmatprep.subr.mxu0 0.0
    %1496 = vmatpush2.msra.mxu0 0.0
    %1497 = vmatprep.subr.mxu0 0.0
    %1498 = vmatpush2.msra.mxu0 0.0
    %1499 = vmatprep.subr.mxu0 0.0
    %1500 = vmatpush2.msra.mxu0 0.0
    %1501 = vmatprep.subr.mxu0 0.0
    %1502 = vmatpush2.msra.mxu0 0.0
    %1503 = vmatprep.subr.mxu0 0.0
    %1504 = vmatpush2.msra.mxu0 0.0
    %1505 = vmatprep.subr.mxu0 0.0
    %1506 = vmatpush2.msra.mxu0 0.0
    %1507 = vmatprep.subr.mxu0 0.0
    %1508 = vmatpush2.msra.mxu0 0.0
    %1509 = vmatprep.subr.mxu0 0.0
    %1510 = vmatpush2.msra.mxu0 0.0
    %1511 = vmatprep.subr.mxu0 0.0
    %1512 = vmatpush2.msra.mxu0 0.0
    %1513 = vmatprep.subr.mxu0 0.0
    %1514 = vmatpush2.msra.mxu0 0.0
    %1515 = vmatprep.subr.mxu0 0.0
    %1516 = vmatpush2.msra.mxu0 0.0
    %1517 = vmatprep.subr.mxu0 0.0
    %1518 = vmatpush2.msra.mxu0 0.0
    %1519 = vmatprep.mubr.f32.mxu0 0.0
    %1520 = vmatmul.mubr.f32.gmra.mxu0 %v1453
    %v1521 = vpop.f32.mrf.mxu0
    %v1522 = vadd.f32 0.0, %v1521
    %v1523 = vpop.f32.mrf.mxu0
    %v1524 = vadd.f32 0.0, %v1523
    %1525 = vdwg.mxu0
    %v1526 = vadd.f32 %v1448, %v1522
    %v1527 = vadd.f32 %v1450, %v1524
    %v1528 = vxor.u32 %v1526, 2147483648
    %v1529 = vmul.f32 %v1528, 1.442695
    %v1530 = vpow.pop %v1529
    %v1531 = vadd.f32 %v1530, 1.0
    %v1532 = vrcp.pop %v1531
    %v1533 = vmul.f32 1.0, %v1532
    %v1534 = vtanh.pop %v1527
    %v1535 = vxor.u32 %v1527, 2147483648
    %v1536 = vmul.f32 %v1535, 1.442695
    %v1537 = vpow.pop %v1536
    %v1538 = vadd.f32 %v1537, 1.0
    %v1539 = vrcp.pop %v1538
    %v1540 = vmul.f32 1.0, %v1539
    %v1541 = vmul.f32 %v1533, 0.0
    %v1542 = vmul.f32 %v1533, %v1534
    %1544 = vrot.lane.b32.xlu0 %v1542, 64
    %v1545 = vpop.permute.xlu0 %1544
    %v1547 = vadd.f32 %v1541, %v1545
    %v1548 = vtanh.pop %v1547
    %v1549 = vmul.f32 %v1540, %v1548
    %1551 = vrot.lane.b32.xlu0 %v1549, 64
    %v1552 = vpop.permute.xlu0 %1551
    %vm1554 = vcmask 516096
    %1555 = vst.msk [vmem:[#allocation2] sm:$0x1] %vm1554, %v1552
    %v1556 = vsel %vm1452, %v1552, 0
    %1558 = vmatprep.subr.mxu0 0.0
    %1559 = vmatpush1.msra.mxu0 0.0
    %1560 = vmatprep.subr.mxu0 0.0
    %1561 = vmatpush1.msra.mxu0 0.0
    %1562 = vmatprep.subr.mxu0 0.0
    %1563 = vmatpush1.msra.mxu0 0.0
    %1564 = vmatprep.subr.mxu0 0.0
    %1565 = vmatpush1.msra.mxu0 0.0
    %1566 = vmatprep.subr.mxu0 0.0
    %1567 = vmatpush1.msra.mxu0 0.0
    %1568 = vmatprep.subr.mxu0 0.0
    %1569 = vmatpush1.msra.mxu0 0.0
    %1570 = vmatprep.subr.mxu0 0.0
    %1571 = vmatpush1.msra.mxu0 0.0
    %1572 = vmatprep.subr.mxu0 0.0
    %1573 = vmatpush1.msra.mxu0 0.0
    %1574 = vmatprep.subr.mxu0 %v1351
    %1575 = vmatpush1.msra.mxu0 %v1350
    %1576 = vmatprep.subr.mxu0 %v1349
    %1577 = vmatpush1.msra.mxu0 %v1348
    %1578 = vmatprep.subr.mxu0 %v1347
    %1579 = vmatpush1.msra.mxu0 %v1346
    %1580 = vmatprep.subr.mxu0 %v1345
    %1581 = vmatpush1.msra.mxu0 %v1344
    %1582 = vmatprep.subr.mxu0 %v1343
    %1583 = vmatpush1.msra.mxu0 %v1342
    %1584 = vmatprep.subr.mxu0 %v1341
    %1585 = vmatpush1.msra.mxu0 %v1340
    %1586 = vmatprep.subr.mxu0 %v1339
    %1587 = vmatpush1.msra.mxu0 %v1338
    %1588 = vmatprep.subr.mxu0 %v1337
    %1589 = vmatpush1.msra.mxu0 %v1336
    %1590 = vmatprep.subr.mxu0 0.0
    %1591 = vmatpush2.msra.mxu0 0.0
    %1592 = vmatprep.subr.mxu0 0.0
    %1593 = vmatpush2.msra.mxu0 0.0
    %1594 = vmatprep.subr.mxu0 0.0
    %1595 = vmatpush2.msra.mxu0 0.0
    %1596 = vmatprep.subr.mxu0 0.0
    %1597 = vmatpush2.msra.mxu0 0.0
    %1598 = vmatprep.subr.mxu0 0.0
    %1599 = vmatpush2.msra.mxu0 0.0
    %1600 = vmatprep.subr.mxu0 0.0
    %1601 = vmatpush2.msra.mxu0 0.0
    %1602 = vmatprep.subr.mxu0 0.0
    %1603 = vmatpush2.msra.mxu0 0.0
    %1604 = vmatprep.subr.mxu0 0.0
    %1605 = vmatpush2.msra.mxu0 0.0
    %1606 = vmatprep.subr.mxu0 0.0
    %1607 = vmatpush2.msra.mxu0 0.0
    %1608 = vmatprep.subr.mxu0 0.0
    %1609 = vmatpush2.msra.mxu0 0.0
    %1610 = vmatprep.subr.mxu0 0.0
    %1611 = vmatpush2.msra.mxu0 0.0
    %1612 = vmatprep.subr.mxu0 0.0
    %1613 = vmatpush2.msra.mxu0 0.0
    %1614 = vmatprep.subr.mxu0 0.0
    %1615 = vmatpush2.msra.mxu0 0.0
    %1616 = vmatprep.subr.mxu0 0.0
    %1617 = vmatpush2.msra.mxu0 0.0
    %1618 = vmatprep.subr.mxu0 0.0
    %1619 = vmatpush2.msra.mxu0 0.0
    %1620 = vmatprep.subr.mxu0 0.0
    %1621 = vmatpush2.msra.mxu0 0.0
    %1622 = vmatprep.mubr.f32.mxu0 0.0
    %1623 = vmatmul.mubr.f32.gmra.mxu0 %v1556
    %v1624 = vpop.f32.mrf.mxu0
    %v1625 = vadd.f32 0.0, %v1624
    %v1626 = vpop.f32.mrf.mxu0
    %v1627 = vadd.f32 0.0, %v1626
    %1628 = vdwg.mxu0
    %v1631 = vrot.slane %v1625, 7
    %v1632 = vrot.slane %v1627, 7
    %v1635 = vadd.f32 %v1448, %v1631
    %v1636 = vadd.f32 %v1450, %v1632
    %v1637 = vxor.u32 %v1635, 2147483648
    %v1638 = vmul.f32 %v1637, 1.442695
    %v1639 = vpow.pop %v1638
    %v1640 = vadd.f32 %v1639, 1.0
    %v1641 = vrcp.pop %v1640
    %v1642 = vmul.f32 1.0, %v1641
    %v1643 = vtanh.pop %v1636
    %v1644 = vxor.u32 %v1636, 2147483648
    %v1645 = vmul.f32 %v1644, 1.442695
    %v1646 = vpow.pop %v1645
    %v1647 = vadd.f32 %v1646, 1.0
    %v1648 = vrcp.pop %v1647
    %v1649 = vmul.f32 1.0, %v1648
    %v1651 = vrot.slane %v1547, 7
    %v1653 = vmul.f32 %v1642, %v1651
    %v1654 = vmul.f32 %v1642, %v1643
    %1656 = vrot.lane.b32.xlu0 %v1654, 64
    %v1657 = vpop.permute.xlu0 %1656
    %v1659 = vadd.f32 %v1653, %v1657
    %v1660 = vtanh.pop %v1659
    %v1661 = vmul.f32 %v1649, %v1660
    %1663 = vrot.lane.b32.xlu0 %v1661, 64
    %v1664 = vpop.permute.xlu0 %1663
    %vm1666 = vcmask 517121
    %1667 = vst.msk [vmem:[#allocation2] sm:$0x2] %vm1666, %v1664
    %v1668 = vrot.slane %v1661, 1
    %1669 = vrot.lane.b32.xlu0 %v1668, 64
    %v1670 = vpop.permute.xlu0 %1669
    %v1671 = vsel %vm1452, %v1670, 0
    %1673 = vmatprep.subr.mxu0 0.0
    %1674 = vmatpush1.msra.mxu0 0.0
    %1675 = vmatprep.subr.mxu0 0.0
    %1676 = vmatpush1.msra.mxu0 0.0
    %1677 = vmatprep.subr.mxu0 0.0
    %1678 = vmatpush1.msra.mxu0 0.0
    %1679 = vmatprep.subr.mxu0 0.0
    %1680 = vmatpush1.msra.mxu0 0.0
    %1681 = vmatprep.subr.mxu0 0.0
    %1682 = vmatpush1.msra.mxu0 0.0
    %1683 = vmatprep.subr.mxu0 0.0
    %1684 = vmatpush1.msra.mxu0 0.0
    %1685 = vmatprep.subr.mxu0 0.0
    %1686 = vmatpush1.msra.mxu0 0.0
    %1687 = vmatprep.subr.mxu0 0.0
    %1688 = vmatpush1.msra.mxu0 0.0
    %1689 = vmatprep.subr.mxu0 %v1351
    %1690 = vmatpush1.msra.mxu0 %v1350
    %1691 = vmatprep.subr.mxu0 %v1349
    %1692 = vmatpush1.msra.mxu0 %v1348
    %1693 = vmatprep.subr.mxu0 %v1347
    %1694 = vmatpush1.msra.mxu0 %v1346
    %1695 = vmatprep.subr.mxu0 %v1345
    %1696 = vmatpush1.msra.mxu0 %v1344
    %1697 = vmatprep.subr.mxu0 %v1343
    %1698 = vmatpush1.msra.mxu0 %v1342
    %1699 = vmatprep.subr.mxu0 %v1341
    %1700 = vmatpush1.msra.mxu0 %v1340
    %1701 = vmatprep.subr.mxu0 %v1339
    %1702 = vmatpush1.msra.mxu0 %v1338
    %1703 = vmatprep.subr.mxu0 %v1337
    %1704 = vmatpush1.msra.mxu0 %v1336
    %1705 = vmatprep.subr.mxu0 0.0
    %1706 = vmatpush2.msra.mxu0 0.0
    %1707 = vmatprep.subr.mxu0 0.0
    %1708 = vmatpush2.msra.mxu0 0.0
    %1709 = vmatprep.subr.mxu0 0.0
    %1710 = vmatpush2.msra.mxu0 0.0
    %1711 = vmatprep.subr.mxu0 0.0
    %1712 = vmatpush2.msra.mxu0 0.0
    %1713 = vmatprep.subr.mxu0 0.0
    %1714 = vmatpush2.msra.mxu0 0.0
    %1715 = vmatprep.subr.mxu0 0.0
    %1716 = vmatpush2.msra.mxu0 0.0
    %1717 = vmatprep.subr.mxu0 0.0
    %1718 = vmatpush2.msra.mxu0 0.0
    %1719 = vmatprep.subr.mxu0 0.0
    %1720 = vmatpush2.msra.mxu0 0.0
    %1721 = vmatprep.subr.mxu0 0.0
    %1722 = vmatpush2.msra.mxu0 0.0
    %1723 = vmatprep.subr.mxu0 0.0
    %1724 = vmatpush2.msra.mxu0 0.0
    %1725 = vmatprep.subr.mxu0 0.0
    %1726 = vmatpush2.msra.mxu0 0.0
    %1727 = vmatprep.subr.mxu0 0.0
    %1728 = vmatpush2.msra.mxu0 0.0
    %1729 = vmatprep.subr.mxu0 0.0
    %1730 = vmatpush2.msra.mxu0 0.0
    %1731 = vmatprep.subr.mxu0 0.0
    %1732 = vmatpush2.msra.mxu0 0.0
    %1733 = vmatprep.subr.mxu0 0.0
    %1734 = vmatpush2.msra.mxu0 0.0
    %1735 = vmatprep.subr.mxu0 0.0
    %1736 = vmatpush2.msra.mxu0 0.0
    %1737 = vmatprep.mubr.f32.mxu0 0.0
    %1738 = vmatmul.mubr.f32.gmra.mxu0 %v1671
    %v1739 = vpop.f32.mrf.mxu0
    %v1740 = vadd.f32 0.0, %v1739
    %v1741 = vpop.f32.mrf.mxu0
    %v1742 = vadd.f32 0.0, %v1741
    %1743 = vdwg.mxu0
    %v1744 = vadd.f32 %v1448, %v1740
    %v1745 = vadd.f32 %v1450, %v1742
    %v1746 = vxor.u32 %v1744, 2147483648
    %v1747 = vmul.f32 %v1746, 1.442695
    %v1748 = vpow.pop %v1747
    %v1749 = vadd.f32 %v1748, 1.0
    %v1750 = vrcp.pop %v1749
    %v1751 = vmul.f32 1.0, %v1750
    %v1752 = vtanh.pop %v1745
    %v1753 = vxor.u32 %v1745, 2147483648
    %v1754 = vmul.f32 %v1753, 1.442695
    %v1755 = vpow.pop %v1754
    %v1756 = vadd.f32 %v1755, 1.0
    %v1757 = vrcp.pop %v1756
    %v1758 = vmul.f32 1.0, %v1757
    %v1760 = vrot.slane %v1659, 1
    %v1762 = vmul.f32 %v1751, %v1760
    %v1763 = vmul.f32 %v1751, %v1752
    %1765 = vrot.lane.b32.xlu0 %v1763, 64
    %v1766 = vpop.permute.xlu0 %1765
    %v1768 = vadd.f32 %v1762, %v1766
    %v1769 = vtanh.pop %v1768
    %v1770 = vmul.f32 %v1758, %v1769
    %1772 = vrot.lane.b32.xlu0 %v1770, 64
    %v1773 = vpop.permute.xlu0 %1772
    %1775 = vst.msk [vmem:[#allocation2 + $0x2] sm:$0x1] %vm1554, %v1773
    %v1776 = vsel %vm1452, %v1773, 0
    %1778 = vmatprep.subr.mxu0 0.0
    %1779 = vmatpush1.msra.mxu0 0.0
    %1780 = vmatprep.subr.mxu0 0.0
    %1781 = vmatpush1.msra.mxu0 0.0
    %1782 = vmatprep.subr.mxu0 0.0
    %1783 = vmatpush1.msra.mxu0 0.0
    %1784 = vmatprep.subr.mxu0 0.0
    %1785 = vmatpush1.msra.mxu0 0.0
    %1786 = vmatprep.subr.mxu0 0.0
    %1787 = vmatpush1.msra.mxu0 0.0
    %1788 = vmatprep.subr.mxu0 0.0
    %1789 = vmatpush1.msra.mxu0 0.0
    %1790 = vmatprep.subr.mxu0 0.0
    %1791 = vmatpush1.msra.mxu0 0.0
    %1792 = vmatprep.subr.mxu0 0.0
    %1793 = vmatpush1.msra.mxu0 0.0
    %1794 = vmatprep.subr.mxu0 %v1351
    %1795 = vmatpush1.msra.mxu0 %v1350
    %1796 = vmatprep.subr.mxu0 %v1349
    %1797 = vmatpush1.msra.mxu0 %v1348
    %1798 = vmatprep.subr.mxu0 %v1347
    %1799 = vmatpush1.msra.mxu0 %v1346
    %1800 = vmatprep.subr.mxu0 %v1345
    %1801 = vmatpush1.msra.mxu0 %v1344
    %1802 = vmatprep.subr.mxu0 %v1343
    %1803 = vmatpush1.msra.mxu0 %v1342
    %1804 = vmatprep.subr.mxu0 %v1341
    %1805 = vmatpush1.msra.mxu0 %v1340
    %1806 = vmatprep.subr.mxu0 %v1339
    %1807 = vmatpush1.msra.mxu0 %v1338
    %1808 = vmatprep.subr.mxu0 %v1337
    %1809 = vmatpush1.msra.mxu0 %v1336
    %1810 = vmatprep.subr.mxu0 0.0
    %1811 = vmatpush2.msra.mxu0 0.0
    %1812 = vmatprep.subr.mxu0 0.0
    %1813 = vmatpush2.msra.mxu0 0.0
    %1814 = vmatprep.subr.mxu0 0.0
    %1815 = vmatpush2.msra.mxu0 0.0
    %1816 = vmatprep.subr.mxu0 0.0
    %1817 = vmatpush2.msra.mxu0 0.0
    %1818 = vmatprep.subr.mxu0 0.0
    %1819 = vmatpush2.msra.mxu0 0.0
    %1820 = vmatprep.subr.mxu0 0.0
    %1821 = vmatpush2.msra.mxu0 0.0
    %1822 = vmatprep.subr.mxu0 0.0
    %1823 = vmatpush2.msra.mxu0 0.0
    %1824 = vmatprep.subr.mxu0 0.0
    %1825 = vmatpush2.msra.mxu0 0.0
    %1826 = vmatprep.subr.mxu0 0.0
    %1827 = vmatpush2.msra.mxu0 0.0
    %1828 = vmatprep.subr.mxu0 0.0
    %1829 = vmatpush2.msra.mxu0 0.0
    %1830 = vmatprep.subr.mxu0 0.0
    %1831 = vmatpush2.msra.mxu0 0.0
    %1832 = vmatprep.subr.mxu0 0.0
    %1833 = vmatpush2.msra.mxu0 0.0
    %1834 = vmatprep.subr.mxu0 0.0
    %1835 = vmatpush2.msra.mxu0 0.0
    %1836 = vmatprep.subr.mxu0 0.0
    %1837 = vmatpush2.msra.mxu0 0.0
    %1838 = vmatprep.subr.mxu0 0.0
    %1839 = vmatpush2.msra.mxu0 0.0
    %1840 = vmatprep.subr.mxu0 0.0
    %1841 = vmatpush2.msra.mxu0 0.0
    %1842 = vmatprep.mubr.f32.mxu0 0.0
    %1843 = vmatmul.mubr.f32.gmra.mxu0 %v1776
    %v1844 = vpop.f32.mrf.mxu0
    %v1845 = vadd.f32 0.0, %v1844
    %v1846 = vpop.f32.mrf.mxu0
    %v1847 = vadd.f32 0.0, %v1846
    %1848 = vdwg.mxu0
    %v1851 = vrot.slane %v1845, 7
    %v1852 = vrot.slane %v1847, 7
    %v1855 = vadd.f32 %v1448, %v1851
    %v1856 = vadd.f32 %v1450, %v1852
    %v1857 = vxor.u32 %v1855, 2147483648
    %v1858 = vmul.f32 %v1857, 1.442695
    %v1859 = vpow.pop %v1858
    %v1860 = vadd.f32 %v1859, 1.0
    %v1861 = vrcp.pop %v1860
    %v1862 = vmul.f32 1.0, %v1861
    %v1863 = vtanh.pop %v1856
    %v1864 = vxor.u32 %v1856, 2147483648
    %v1865 = vmul.f32 %v1864, 1.442695
    %v1866 = vpow.pop %v1865
    %v1867 = vadd.f32 %v1866, 1.0
    %v1868 = vrcp.pop %v1867
    %v1869 = vmul.f32 1.0, %v1868
    %v1871 = vrot.slane %v1768, 7
    %v1873 = vmul.f32 %v1862, %v1871
    %v1874 = vmul.f32 %v1862, %v1863
    %1876 = vrot.lane.b32.xlu0 %v1874, 64
    %v1877 = vpop.permute.xlu0 %1876
    %v1879 = vadd.f32 %v1873, %v1877
    %v1880 = vtanh.pop %v1879
    %v1881 = vmul.f32 %v1869, %v1880
    %1883 = vrot.lane.b32.xlu0 %v1881, 64
    %v1884 = vpop.permute.xlu0 %1883
    %1886 = vst.msk [vmem:[#allocation2 + $0x2] sm:$0x2] %vm1666, %v1884
    %v1887 = vrot.slane %v1881, 1
    %1888 = vrot.lane.b32.xlu0 %v1887, 64
    %v1889 = vpop.permute.xlu0 %1888
    %v1890 = vsel %vm1452, %v1889, 0
    %1892 = vmatprep.subr.mxu0 0.0
    %1893 = vmatpush1.msra.mxu0 0.0
    %1894 = vmatprep.subr.mxu0 0.0
    %1895 = vmatpush1.msra.mxu0 0.0
    %1896 = vmatprep.subr.mxu0 0.0
    %1897 = vmatpush1.msra.mxu0 0.0
    %1898 = vmatprep.subr.mxu0 0.0
    %1899 = vmatpush1.msra.mxu0 0.0
    %1900 = vmatprep.subr.mxu0 0.0
    %1901 = vmatpush1.msra.mxu0 0.0
    %1902 = vmatprep.subr.mxu0 0.0
    %1903 = vmatpush1.msra.mxu0 0.0
    %1904 = vmatprep.subr.mxu0 0.0
    %1905 = vmatpush1.msra.mxu0 0.0
    %1906 = vmatprep.subr.mxu0 0.0
    %1907 = vmatpush1.msra.mxu0 0.0
    %1908 = vmatprep.subr.mxu0 %v1351
    %1909 = vmatpush1.msra.mxu0 %v1350
    %1910 = vmatprep.subr.mxu0 %v1349
    %1911 = vmatpush1.msra.mxu0 %v1348
    %1912 = vmatprep.subr.mxu0 %v1347
    %1913 = vmatpush1.msra.mxu0 %v1346
    %1914 = vmatprep.subr.mxu0 %v1345
    %1915 = vmatpush1.msra.mxu0 %v1344
    %1916 = vmatprep.subr.mxu0 %v1343
    %1917 = vmatpush1.msra.mxu0 %v1342
    %1918 = vmatprep.subr.mxu0 %v1341
    %1919 = vmatpush1.msra.mxu0 %v1340
    %1920 = vmatprep.subr.mxu0 %v1339
    %1921 = vmatpush1.msra.mxu0 %v1338
    %1922 = vmatprep.subr.mxu0 %v1337
    %1923 = vmatpush1.msra.mxu0 %v1336
    %1924 = vmatprep.subr.mxu0 0.0
    %1925 = vmatpush2.msra.mxu0 0.0
    %1926 = vmatprep.subr.mxu0 0.0
    %1927 = vmatpush2.msra.mxu0 0.0
    %1928 = vmatprep.subr.mxu0 0.0
    %1929 = vmatpush2.msra.mxu0 0.0
    %1930 = vmatprep.subr.mxu0 0.0
    %1931 = vmatpush2.msra.mxu0 0.0
    %1932 = vmatprep.subr.mxu0 0.0
    %1933 = vmatpush2.msra.mxu0 0.0
    %1934 = vmatprep.subr.mxu0 0.0
    %1935 = vmatpush2.msra.mxu0 0.0
    %1936 = vmatprep.subr.mxu0 0.0
    %1937 = vmatpush2.msra.mxu0 0.0
    %1938 = vmatprep.subr.mxu0 0.0
    %1939 = vmatpush2.msra.mxu0 0.0
    %1940 = vmatprep.subr.mxu0 0.0
    %1941 = vmatpush2.msra.mxu0 0.0
    %1942 = vmatprep.subr.mxu0 0.0
    %1943 = vmatpush2.msra.mxu0 0.0
    %1944 = vmatprep.subr.mxu0 0.0
    %1945 = vmatpush2.msra.mxu0 0.0
    %1946 = vmatprep.subr.mxu0 0.0
    %1947 = vmatpush2.msra.mxu0 0.0
    %1948 = vmatprep.subr.mxu0 0.0
    %1949 = vmatpush2.msra.mxu0 0.0
    %1950 = vmatprep.subr.mxu0 0.0
    %1951 = vmatpush2.msra.mxu0 0.0
    %1952 = vmatprep.subr.mxu0 0.0
    %1953 = vmatpush2.msra.mxu0 0.0
    %1954 = vmatprep.subr.mxu0 0.0
    %1955 = vmatpush2.msra.mxu0 0.0
    %1956 = vmatprep.mubr.f32.mxu0 0.0
    %1957 = vmatmul.mubr.f32.gmra.mxu0 %v1890
    %v1958 = vpop.f32.mrf.mxu0
    %v1959 = vadd.f32 0.0, %v1958
    %v1960 = vpop.f32.mrf.mxu0
    %v1961 = vadd.f32 0.0, %v1960
    %1962 = vdwg.mxu0
    %v1963 = vadd.f32 %v1448, %v1959
    %v1964 = vadd.f32 %v1450, %v1961
    %v1965 = vxor.u32 %v1963, 2147483648
    %v1966 = vmul.f32 %v1965, 1.442695
    %v1967 = vpow.pop %v1966
    %v1968 = vadd.f32 %v1967, 1.0
    %v1969 = vrcp.pop %v1968
    %v1970 = vmul.f32 1.0, %v1969
    %v1971 = vtanh.pop %v1964
    %v1972 = vxor.u32 %v1964, 2147483648
    %v1973 = vmul.f32 %v1972, 1.442695
    %v1974 = vpow.pop %v1973
    %v1975 = vadd.f32 %v1974, 1.0
    %v1976 = vrcp.pop %v1975
    %v1977 = vmul.f32 1.0, %v1976
    %v1979 = vrot.slane %v1879, 1
    %v1981 = vmul.f32 %v1970, %v1979
    %v1982 = vmul.f32 %v1970, %v1971
    %1984 = vrot.lane.b32.xlu0 %v1982, 64
    %v1985 = vpop.permute.xlu0 %1984
    %v1987 = vadd.f32 %v1981, %v1985
    %v1988 = vtanh.pop %v1987
    %v1989 = vmul.f32 %v1977, %v1988
    %1991 = vrot.lane.b32.xlu0 %v1989, 64
    %v1992 = vpop.permute.xlu0 %1991
    %1994 = vst.msk [vmem:[#allocation2 + $0x4] sm:$0x1] %vm1554, %v1992
    %v1995 = vsel %vm1452, %v1992, 0
    %1997 = vmatprep.subr.mxu0 0.0
    %1998 = vmatpush1.msra.mxu0 0.0
    %1999 = vmatprep.subr.mxu0 0.0
    %2000 = vmatpush1.msra.mxu0 0.0
    %2001 = vmatprep.subr.mxu0 0.0
    %2002 = vmatpush1.msra.mxu0 0.0
    %2003 = vmatprep.subr.mxu0 0.0
    %2004 = vmatpush1.msra.mxu0 0.0
    %2005 = vmatprep.subr.mxu0 0.0
    %2006 = vmatpush1.msra.mxu0 0.0
    %2007 = vmatprep.subr.mxu0 0.0
    %2008 = vmatpush1.msra.mxu0 0.0
    %2009 = vmatprep.subr.mxu0 0.0
    %2010 = vmatpush1.msra.mxu0 0.0
    %2011 = vmatprep.subr.mxu0 0.0
    %2012 = vmatpush1.msra.mxu0 0.0
    %2013 = vmatprep.subr.mxu0 %v1351
    %2014 = vmatpush1.msra.mxu0 %v1350
    %2015 = vmatprep.subr.mxu0 %v1349
    %2016 = vmatpush1.msra.mxu0 %v1348
    %2017 = vmatprep.subr.mxu0 %v1347
    %2018 = vmatpush1.msra.mxu0 %v1346
    %2019 = vmatprep.subr.mxu0 %v1345
    %2020 = vmatpush1.msra.mxu0 %v1344
    %2021 = vmatprep.subr.mxu0 %v1343
    %2022 = vmatpush1.msra.mxu0 %v1342
    %2023 = vmatprep.subr.mxu0 %v1341
    %2024 = vmatpush1.msra.mxu0 %v1340
    %2025 = vmatprep.subr.mxu0 %v1339
    %2026 = vmatpush1.msra.mxu0 %v1338
    %2027 = vmatprep.subr.mxu0 %v1337
    %2028 = vmatpush1.msra.mxu0 %v1336
    %2029 = vmatprep.subr.mxu0 0.0
    %2030 = vmatpush2.msra.mxu0 0.0
    %2031 = vmatprep.subr.mxu0 0.0
    %2032 = vmatpush2.msra.mxu0 0.0
    %2033 = vmatprep.subr.mxu0 0.0
    %2034 = vmatpush2.msra.mxu0 0.0
    %2035 = vmatprep.subr.mxu0 0.0
    %2036 = vmatpush2.msra.mxu0 0.0
    %2037 = vmatprep.subr.mxu0 0.0
    %2038 = vmatpush2.msra.mxu0 0.0
    %2039 = vmatprep.subr.mxu0 0.0
    %2040 = vmatpush2.msra.mxu0 0.0
    %2041 = vmatprep.subr.mxu0 0.0
    %2042 = vmatpush2.msra.mxu0 0.0
    %2043 = vmatprep.subr.mxu0 0.0
    %2044 = vmatpush2.msra.mxu0 0.0
    %2045 = vmatprep.subr.mxu0 0.0
    %2046 = vmatpush2.msra.mxu0 0.0
    %2047 = vmatprep.subr.mxu0 0.0
    %2048 = vmatpush2.msra.mxu0 0.0
    %2049 = vmatprep.subr.mxu0 0.0
    %2050 = vmatpush2.msra.mxu0 0.0
    %2051 = vmatprep.subr.mxu0 0.0
    %2052 = vmatpush2.msra.mxu0 0.0
    %2053 = vmatprep.subr.mxu0 0.0
    %2054 = vmatpush2.msra.mxu0 0.0
    %2055 = vmatprep.subr.mxu0 0.0
    %2056 = vmatpush2.msra.mxu0 0.0
    %2057 = vmatprep.subr.mxu0 0.0
    %2058 = vmatpush2.msra.mxu0 0.0
    %2059 = vmatprep.subr.mxu0 0.0
    %2060 = vmatpush2.msra.mxu0 0.0
    %2061 = vmatprep.mubr.f32.mxu0 0.0
    %2062 = vmatmul.mubr.f32.gmra.mxu0 %v1995
    %v2063 = vpop.f32.mrf.mxu0
    %v2064 = vadd.f32 0.0, %v2063
    %v2065 = vpop.f32.mrf.mxu0
    %v2066 = vadd.f32 0.0, %v2065
    %2067 = vdwg.mxu0
    %v2070 = vrot.slane %v2064, 7
    %v2071 = vrot.slane %v2066, 7
    %v2074 = vadd.f32 %v1448, %v2070
    %v2075 = vadd.f32 %v1450, %v2071
    %v2076 = vxor.u32 %v2074, 2147483648
    %v2077 = vmul.f32 %v2076, 1.442695
    %v2078 = vpow.pop %v2077
    %v2079 = vadd.f32 %v2078, 1.0
    %v2080 = vrcp.pop %v2079
    %v2081 = vmul.f32 1.0, %v2080
    %v2082 = vtanh.pop %v2075
    %v2083 = vxor.u32 %v2075, 2147483648
    %v2084 = vmul.f32 %v2083, 1.442695
    %v2085 = vpow.pop %v2084
    %v2086 = vadd.f32 %v2085, 1.0
    %v2087 = vrcp.pop %v2086
    %v2088 = vmul.f32 1.0, %v2087
    %v2090 = vrot.slane %v1987, 7
    %v2092 = vmul.f32 %v2081, %v2090
    %v2093 = vmul.f32 %v2081, %v2082
    %2095 = vrot.lane.b32.xlu0 %v2093, 64
    %v2096 = vpop.permute.xlu0 %2095
    %v2098 = vadd.f32 %v2092, %v2096
    %v2099 = vtanh.pop %v2098
    %v2100 = vmul.f32 %v2088, %v2099
    %2102 = vrot.lane.b32.xlu0 %v2100, 64
    %v2103 = vpop.permute.xlu0 %2102
    %2105 = vst.msk [vmem:[#allocation2 + $0x4] sm:$0x2] %vm1666, %v2103
    %v2106 = vrot.slane %v2100, 1
    %2107 = vrot.lane.b32.xlu0 %v2106, 64
    %v2108 = vpop.permute.xlu0 %2107
    %v2109 = vsel %vm1452, %v2108, 0
    %2111 = vmatprep.subr.mxu0 0.0
    %2112 = vmatpush1.msra.mxu0 0.0
    %2113 = vmatprep.subr.mxu0 0.0
    %2114 = vmatpush1.msra.mxu0 0.0
    %2115 = vmatprep.subr.mxu0 0.0
    %2116 = vmatpush1.msra.mxu0 0.0
    %2117 = vmatprep.subr.mxu0 0.0
    %2118 = vmatpush1.msra.mxu0 0.0
    %2119 = vmatprep.subr.mxu0 0.0
    %2120 = vmatpush1.msra.mxu0 0.0
    %2121 = vmatprep.subr.mxu0 0.0
    %2122 = vmatpush1.msra.mxu0 0.0
    %2123 = vmatprep.subr.mxu0 0.0
    %2124 = vmatpush1.msra.mxu0 0.0
    %2125 = vmatprep.subr.mxu0 0.0
    %2126 = vmatpush1.msra.mxu0 0.0
    %2127 = vmatprep.subr.mxu0 %v1351
    %2128 = vmatpush1.msra.mxu0 %v1350
    %2129 = vmatprep.subr.mxu0 %v1349
    %2130 = vmatpush1.msra.mxu0 %v1348
    %2131 = vmatprep.subr.mxu0 %v1347
    %2132 = vmatpush1.msra.mxu0 %v1346
    %2133 = vmatprep.subr.mxu0 %v1345
    %2134 = vmatpush1.msra.mxu0 %v1344
    %2135 = vmatprep.subr.mxu0 %v1343
    %2136 = vmatpush1.msra.mxu0 %v1342
    %2137 = vmatprep.subr.mxu0 %v1341
    %2138 = vmatpush1.msra.mxu0 %v1340
    %2139 = vmatprep.subr.mxu0 %v1339
    %2140 = vmatpush1.msra.mxu0 %v1338
    %2141 = vmatprep.subr.mxu0 %v1337
    %2142 = vmatpush1.msra.mxu0 %v1336
    %2143 = vmatprep.subr.mxu0 0.0
    %2144 = vmatpush2.msra.mxu0 0.0
    %2145 = vmatprep.subr.mxu0 0.0
    %2146 = vmatpush2.msra.mxu0 0.0
    %2147 = vmatprep.subr.mxu0 0.0
    %2148 = vmatpush2.msra.mxu0 0.0
    %2149 = vmatprep.subr.mxu0 0.0
    %2150 = vmatpush2.msra.mxu0 0.0
    %2151 = vmatprep.subr.mxu0 0.0
    %2152 = vmatpush2.msra.mxu0 0.0
    %2153 = vmatprep.subr.mxu0 0.0
    %2154 = vmatpush2.msra.mxu0 0.0
    %2155 = vmatprep.subr.mxu0 0.0
    %2156 = vmatpush2.msra.mxu0 0.0
    %2157 = vmatprep.subr.mxu0 0.0
    %2158 = vmatpush2.msra.mxu0 0.0
    %2159 = vmatprep.subr.mxu0 0.0
    %2160 = vmatpush2.msra.mxu0 0.0
    %2161 = vmatprep.subr.mxu0 0.0
    %2162 = vmatpush2.msra.mxu0 0.0
    %2163 = vmatprep.subr.mxu0 0.0
    %2164 = vmatpush2.msra.mxu0 0.0
    %2165 = vmatprep.subr.mxu0 0.0
    %2166 = vmatpush2.msra.mxu0 0.0
    %2167 = vmatprep.subr.mxu0 0.0
    %2168 = vmatpush2.msra.mxu0 0.0
    %2169 = vmatprep.subr.mxu0 0.0
    %2170 = vmatpush2.msra.mxu0 0.0
    %2171 = vmatprep.subr.mxu0 0.0
    %2172 = vmatpush2.msra.mxu0 0.0
    %2173 = vmatprep.subr.mxu0 0.0
    %2174 = vmatpush2.msra.mxu0 0.0
    %2175 = vmatprep.mubr.f32.mxu0 0.0
    %2176 = vmatmul.mubr.f32.gmra.mxu0 %v2109
    %v2177 = vpop.f32.mrf.mxu0
    %v2178 = vadd.f32 0.0, %v2177
    %v2179 = vpop.f32.mrf.mxu0
    %v2180 = vadd.f32 0.0, %v2179
    %2181 = vdwg.mxu0
    %v2182 = vadd.f32 %v1448, %v2178
    %v2183 = vadd.f32 %v1450, %v2180
    %v2184 = vxor.u32 %v2182, 2147483648
    %v2185 = vmul.f32 %v2184, 1.442695
    %v2186 = vpow.pop %v2185
    %v2187 = vadd.f32 %v2186, 1.0
    %v2188 = vrcp.pop %v2187
    %v2189 = vmul.f32 1.0, %v2188
    %v2190 = vtanh.pop %v2183
    %v2191 = vxor.u32 %v2183, 2147483648
    %v2192 = vmul.f32 %v2191, 1.442695
    %v2193 = vpow.pop %v2192
    %v2194 = vadd.f32 %v2193, 1.0
    %v2195 = vrcp.pop %v2194
    %v2196 = vmul.f32 1.0, %v2195
    %v2198 = vrot.slane %v2098, 1
    %v2200 = vmul.f32 %v2189, %v2198
    %v2201 = vmul.f32 %v2189, %v2190
    %2203 = vrot.lane.b32.xlu0 %v2201, 64
    %v2204 = vpop.permute.xlu0 %2203
    %v2206 = vadd.f32 %v2200, %v2204
    %v2207 = vtanh.pop %v2206
    %v2208 = vmul.f32 %v2196, %v2207
    %2210 = vrot.lane.b32.xlu0 %v2208, 64
    %v2211 = vpop.permute.xlu0 %2210
    %2213 = vst.msk [vmem:[#allocation2 + $0x6] sm:$0x1] %vm1554, %v2211
    %v2214 = vsel %vm1452, %v2211, 0
    %2216 = vmatprep.subr.mxu0 0.0
    %2217 = vmatpush1.msra.mxu0 0.0
    %2218 = vmatprep.subr.mxu0 0.0
    %2219 = vmatpush1.msra.mxu0 0.0
    %2220 = vmatprep.subr.mxu0 0.0
    %2221 = vmatpush1.msra.mxu0 0.0
    %2222 = vmatprep.subr.mxu0 0.0
    %2223 = vmatpush1.msra.mxu0 0.0
    %2224 = vmatprep.subr.mxu0 0.0
    %2225 = vmatpush1.msra.mxu0 0.0
    %2226 = vmatprep.subr.mxu0 0.0
    %2227 = vmatpush1.msra.mxu0 0.0
    %2228 = vmatprep.subr.mxu0 0.0
    %2229 = vmatpush1.msra.mxu0 0.0
    %2230 = vmatprep.subr.mxu0 0.0
    %2231 = vmatpush1.msra.mxu0 0.0
    %2232 = vmatprep.subr.mxu0 %v1351
    %2233 = vmatpush1.msra.mxu0 %v1350
    %2234 = vmatprep.subr.mxu0 %v1349
    %2235 = vmatpush1.msra.mxu0 %v1348
    %2236 = vmatprep.subr.mxu0 %v1347
    %2237 = vmatpush1.msra.mxu0 %v1346
    %2238 = vmatprep.subr.mxu0 %v1345
    %2239 = vmatpush1.msra.mxu0 %v1344
    %2240 = vmatprep.subr.mxu0 %v1343
    %2241 = vmatpush1.msra.mxu0 %v1342
    %2242 = vmatprep.subr.mxu0 %v1341
    %2243 = vmatpush1.msra.mxu0 %v1340
    %2244 = vmatprep.subr.mxu0 %v1339
    %2245 = vmatpush1.msra.mxu0 %v1338
    %2246 = vmatprep.subr.mxu0 %v1337
    %2247 = vmatpush1.msra.mxu0 %v1336
    %2248 = vmatprep.subr.mxu0 0.0
    %2249 = vmatpush2.msra.mxu0 0.0
    %2250 = vmatprep.subr.mxu0 0.0
    %2251 = vmatpush2.msra.mxu0 0.0
    %2252 = vmatprep.subr.mxu0 0.0
    %2253 = vmatpush2.msra.mxu0 0.0
    %2254 = vmatprep.subr.mxu0 0.0
    %2255 = vmatpush2.msra.mxu0 0.0
    %2256 = vmatprep.subr.mxu0 0.0
    %2257 = vmatpush2.msra.mxu0 0.0
    %2258 = vmatprep.subr.mxu0 0.0
    %2259 = vmatpush2.msra.mxu0 0.0
    %2260 = vmatprep.subr.mxu0 0.0
    %2261 = vmatpush2.msra.mxu0 0.0
    %2262 = vmatprep.subr.mxu0 0.0
    %2263 = vmatpush2.msra.mxu0 0.0
    %2264 = vmatprep.subr.mxu0 0.0
    %2265 = vmatpush2.msra.mxu0 0.0
    %2266 = vmatprep.subr.mxu0 0.0
    %2267 = vmatpush2.msra.mxu0 0.0
    %2268 = vmatprep.subr.mxu0 0.0
    %2269 = vmatpush2.msra.mxu0 0.0
    %2270 = vmatprep.subr.mxu0 0.0
    %2271 = vmatpush2.msra.mxu0 0.0
    %2272 = vmatprep.subr.mxu0 0.0
    %2273 = vmatpush2.msra.mxu0 0.0
    %2274 = vmatprep.subr.mxu0 0.0
    %2275 = vmatpush2.msra.mxu0 0.0
    %2276 = vmatprep.subr.mxu0 0.0
    %2277 = vmatpush2.msra.mxu0 0.0
    %2278 = vmatprep.subr.mxu0 0.0
    %2279 = vmatpush2.msra.mxu0 0.0
    %2280 = vmatprep.mubr.f32.mxu0 0.0
    %2281 = vmatmul.mubr.f32.gmra.mxu0 %v2214
    %v2282 = vpop.f32.mrf.mxu0
    %v2283 = vadd.f32 0.0, %v2282
    %v2284 = vpop.f32.mrf.mxu0
    %v2285 = vadd.f32 0.0, %v2284
    %2286 = vdwg.mxu0
    %v2289 = vrot.slane %v2283, 7
    %v2290 = vrot.slane %v2285, 7
    %v2293 = vadd.f32 %v1448, %v2289
    %v2294 = vadd.f32 %v1450, %v2290
    %v2295 = vxor.u32 %v2293, 2147483648
    %v2296 = vmul.f32 %v2295, 1.442695
    %v2297 = vpow.pop %v2296
    %v2298 = vadd.f32 %v2297, 1.0
    %v2299 = vrcp.pop %v2298
    %v2300 = vmul.f32 1.0, %v2299
    %v2301 = vtanh.pop %v2294
    %v2302 = vxor.u32 %v2294, 2147483648
    %v2303 = vmul.f32 %v2302, 1.442695
    %v2304 = vpow.pop %v2303
    %v2305 = vadd.f32 %v2304, 1.0
    %v2306 = vrcp.pop %v2305
    %v2307 = vmul.f32 1.0, %v2306
    %v2309 = vrot.slane %v2206, 7
    %v2311 = vmul.f32 %v2300, %v2309
    %v2312 = vmul.f32 %v2300, %v2301
    %2314 = vrot.lane.b32.xlu0 %v2312, 64
    %v2315 = vpop.permute.xlu0 %2314
    %v2317 = vadd.f32 %v2311, %v2315
    %v2318 = vtanh.pop %v2317
    %v2319 = vmul.f32 %v2307, %v2318
    %2321 = vrot.lane.b32.xlu0 %v2319, 64
    %v2322 = vpop.permute.xlu0 %2321
    %2324 = vst.msk [vmem:[#allocation2 + $0x6] sm:$0x2] %vm1666, %v2322
    %v2325 = vrot.slane %v2319, 1
    %2326 = vrot.lane.b32.xlu0 %v2325, 64
    %v2327 = vpop.permute.xlu0 %2326
    %v2328 = vsel %vm1452, %v2327, 0
    %2330 = vmatprep.subr.mxu0 0.0
    %2331 = vmatpush1.msra.mxu0 0.0
    %2332 = vmatprep.subr.mxu0 0.0
    %2333 = vmatpush1.msra.mxu0 0.0
    %2334 = vmatprep.subr.mxu0 0.0
    %2335 = vmatpush1.msra.mxu0 0.0
    %2336 = vmatprep.subr.mxu0 0.0
    %2337 = vmatpush1.msra.mxu0 0.0
    %2338 = vmatprep.subr.mxu0 0.0
    %2339 = vmatpush1.msra.mxu0 0.0
    %2340 = vmatprep.subr.mxu0 0.0
    %2341 = vmatpush1.msra.mxu0 0.0
    %2342 = vmatprep.subr.mxu0 0.0
    %2343 = vmatpush1.msra.mxu0 0.0
    %2344 = vmatprep.subr.mxu0 0.0
    %2345 = vmatpush1.msra.mxu0 0.0
    %2346 = vmatprep.subr.mxu0 %v1351
    %2347 = vmatpush1.msra.mxu0 %v1350
    %2348 = vmatprep.subr.mxu0 %v1349
    %2349 = vmatpush1.msra.mxu0 %v1348
    %2350 = vmatprep.subr.mxu0 %v1347
    %2351 = vmatpush1.msra.mxu0 %v1346
    %2352 = vmatprep.subr.mxu0 %v1345
    %2353 = vmatpush1.msra.mxu0 %v1344
    %2354 = vmatprep.subr.mxu0 %v1343
    %2355 = vmatpush1.msra.mxu0 %v1342
    %2356 = vmatprep.subr.mxu0 %v1341
    %2357 = vmatpush1.msra.mxu0 %v1340
    %2358 = vmatprep.subr.mxu0 %v1339
    %2359 = vmatpush1.msra.mxu0 %v1338
    %2360 = vmatprep.subr.mxu0 %v1337
    %2361 = vmatpush1.msra.mxu0 %v1336
    %2362 = vmatprep.subr.mxu0 0.0
    %2363 = vmatpush2.msra.mxu0 0.0
    %2364 = vmatprep.subr.mxu0 0.0
    %2365 = vmatpush2.msra.mxu0 0.0
    %2366 = vmatprep.subr.mxu0 0.0
    %2367 = vmatpush2.msra.mxu0 0.0
    %2368 = vmatprep.subr.mxu0 0.0
    %2369 = vmatpush2.msra.mxu0 0.0
    %2370 = vmatprep.subr.mxu0 0.0
    %2371 = vmatpush2.msra.mxu0 0.0
    %2372 = vmatprep.subr.mxu0 0.0
    %2373 = vmatpush2.msra.mxu0 0.0
    %2374 = vmatprep.subr.mxu0 0.0
    %2375 = vmatpush2.msra.mxu0 0.0
    %2376 = vmatprep.subr.mxu0 0.0
    %2377 = vmatpush2.msra.mxu0 0.0
    %2378 = vmatprep.subr.mxu0 0.0
    %2379 = vmatpush2.msra.mxu0 0.0
    %2380 = vmatprep.subr.mxu0 0.0
    %2381 = vmatpush2.msra.mxu0 0.0
    %2382 = vmatprep.subr.mxu0 0.0
    %2383 = vmatpush2.msra.mxu0 0.0
    %2384 = vmatprep.subr.mxu0 0.0
    %2385 = vmatpush2.msra.mxu0 0.0
    %2386 = vmatprep.subr.mxu0 0.0
    %2387 = vmatpush2.msra.mxu0 0.0
    %2388 = vmatprep.subr.mxu0 0.0
    %2389 = vmatpush2.msra.mxu0 0.0
    %2390 = vmatprep.subr.mxu0 0.0
    %2391 = vmatpush2.msra.mxu0 0.0
    %2392 = vmatprep.subr.mxu0 0.0
    %2393 = vmatpush2.msra.mxu0 0.0
    %2394 = vmatprep.mubr.f32.mxu0 0.0
    %2395 = vmatmul.mubr.f32.gmra.mxu0 %v2328
    %v2396 = vpop.f32.mrf.mxu0
    %v2397 = vadd.f32 0.0, %v2396
    %v2398 = vpop.f32.mrf.mxu0
    %v2399 = vadd.f32 0.0, %v2398
    %2400 = vdwg.mxu0
    %v2401 = vadd.f32 %v1448, %v2397
    %v2402 = vadd.f32 %v1450, %v2399
    %v2403 = vxor.u32 %v2401, 2147483648
    %v2404 = vmul.f32 %v2403, 1.442695
    %v2405 = vpow.pop %v2404
    %v2406 = vadd.f32 %v2405, 1.0
    %v2407 = vrcp.pop %v2406
    %v2408 = vmul.f32 1.0, %v2407
    %v2409 = vtanh.pop %v2402
    %v2410 = vxor.u32 %v2402, 2147483648
    %v2411 = vmul.f32 %v2410, 1.442695
    %v2412 = vpow.pop %v2411
    %v2413 = vadd.f32 %v2412, 1.0
    %v2414 = vrcp.pop %v2413
    %v2415 = vmul.f32 1.0, %v2414
    %v2417 = vrot.slane %v2317, 1
    %v2419 = vmul.f32 %v2408, %v2417
    %v2420 = vmul.f32 %v2408, %v2409
    %2422 = vrot.lane.b32.xlu0 %v2420, 64
    %v2423 = vpop.permute.xlu0 %2422
    %v2425 = vadd.f32 %v2419, %v2423
    %v2426 = vtanh.pop %v2425
    %v2427 = vmul.f32 %v2415, %v2426
    %2429 = vrot.lane.b32.xlu0 %v2427, 64
    %v2430 = vpop.permute.xlu0 %2429
    %2432 = vst.msk [vmem:[#allocation2 + $0x8] sm:$0x1] %vm1554, %v2430
    %v2433 = vsel %vm1452, %v2430, 0
    %2435 = vmatprep.subr.mxu0 0.0
    %2436 = vmatpush1.msra.mxu0 0.0
    %2437 = vmatprep.subr.mxu0 0.0
    %2438 = vmatpush1.msra.mxu0 0.0
    %2439 = vmatprep.subr.mxu0 0.0
    %2440 = vmatpush1.msra.mxu0 0.0
    %2441 = vmatprep.subr.mxu0 0.0
    %2442 = vmatpush1.msra.mxu0 0.0
    %2443 = vmatprep.subr.mxu0 0.0
    %2444 = vmatpush1.msra.mxu0 0.0
    %2445 = vmatprep.subr.mxu0 0.0
    %2446 = vmatpush1.msra.mxu0 0.0
    %2447 = vmatprep.subr.mxu0 0.0
    %2448 = vmatpush1.msra.mxu0 0.0
    %2449 = vmatprep.subr.mxu0 0.0
    %2450 = vmatpush1.msra.mxu0 0.0
    %2451 = vmatprep.subr.mxu0 %v1351
    %2452 = vmatpush1.msra.mxu0 %v1350
    %2453 = vmatprep.subr.mxu0 %v1349
    %2454 = vmatpush1.msra.mxu0 %v1348
    %2455 = vmatprep.subr.mxu0 %v1347
    %2456 = vmatpush1.msra.mxu0 %v1346
    %2457 = vmatprep.subr.mxu0 %v1345
    %2458 = vmatpush1.msra.mxu0 %v1344
    %2459 = vmatprep.subr.mxu0 %v1343
    %2460 = vmatpush1.msra.mxu0 %v1342
    %2461 = vmatprep.subr.mxu0 %v1341
    %2462 = vmatpush1.msra.mxu0 %v1340
    %2463 = vmatprep.subr.mxu0 %v1339
    %2464 = vmatpush1.msra.mxu0 %v1338
    %2465 = vmatprep.subr.mxu0 %v1337
    %2466 = vmatpush1.msra.mxu0 %v1336
    %2467 = vmatprep.subr.mxu0 0.0
    %2468 = vmatpush2.msra.mxu0 0.0
    %2469 = vmatprep.subr.mxu0 0.0
    %2470 = vmatpush2.msra.mxu0 0.0
    %2471 = vmatprep.subr.mxu0 0.0
    %2472 = vmatpush2.msra.mxu0 0.0
    %2473 = vmatprep.subr.mxu0 0.0
    %2474 = vmatpush2.msra.mxu0 0.0
    %2475 = vmatprep.subr.mxu0 0.0
    %2476 = vmatpush2.msra.mxu0 0.0
    %2477 = vmatprep.subr.mxu0 0.0
    %2478 = vmatpush2.msra.mxu0 0.0
    %2479 = vmatprep.subr.mxu0 0.0
    %2480 = vmatpush2.msra.mxu0 0.0
    %2481 = vmatprep.subr.mxu0 0.0
    %2482 = vmatpush2.msra.mxu0 0.0
    %2483 = vmatprep.subr.mxu0 0.0
    %2484 = vmatpush2.msra.mxu0 0.0
    %2485 = vmatprep.subr.mxu0 0.0
    %2486 = vmatpush2.msra.mxu0 0.0
    %2487 = vmatprep.subr.mxu0 0.0
    %2488 = vmatpush2.msra.mxu0 0.0
    %2489 = vmatprep.subr.mxu0 0.0
    %2490 = vmatpush2.msra.mxu0 0.0
    %2491 = vmatprep.subr.mxu0 0.0
    %2492 = vmatpush2.msra.mxu0 0.0
    %2493 = vmatprep.subr.mxu0 0.0
    %2494 = vmatpush2.msra.mxu0 0.0
    %2495 = vmatprep.subr.mxu0 0.0
    %2496 = vmatpush2.msra.mxu0 0.0
    %2497 = vmatprep.subr.mxu0 0.0
    %2498 = vmatpush2.msra.mxu0 0.0
    %2499 = vmatprep.mubr.f32.mxu0 0.0
    %2500 = vmatmul.mubr.f32.gmra.mxu0 %v2433
    %v2501 = vpop.f32.mrf.mxu0
    %v2502 = vadd.f32 0.0, %v2501
    %v2503 = vpop.f32.mrf.mxu0
    %v2504 = vadd.f32 0.0, %v2503
    %2505 = vdwg.mxu0
    %v2508 = vrot.slane %v2502, 7
    %v2509 = vrot.slane %v2504, 7
    %v2512 = vadd.f32 %v1448, %v2508
    %v2513 = vadd.f32 %v1450, %v2509
    %v2514 = vxor.u32 %v2512, 2147483648
    %v2515 = vmul.f32 %v2514, 1.442695
    %v2516 = vpow.pop %v2515
    %v2517 = vadd.f32 %v2516, 1.0
    %v2518 = vrcp.pop %v2517
    %v2519 = vmul.f32 1.0, %v2518
    %v2520 = vtanh.pop %v2513
    %v2521 = vxor.u32 %v2513, 2147483648
    %v2522 = vmul.f32 %v2521, 1.442695
    %v2523 = vpow.pop %v2522
    %v2524 = vadd.f32 %v2523, 1.0
    %v2525 = vrcp.pop %v2524
    %v2526 = vmul.f32 1.0, %v2525
    %v2528 = vrot.slane %v2425, 7
    %v2530 = vmul.f32 %v2519, %v2528
    %v2531 = vmul.f32 %v2519, %v2520
    %2533 = vrot.lane.b32.xlu0 %v2531, 64
    %v2534 = vpop.permute.xlu0 %2533
    %v2536 = vadd.f32 %v2530, %v2534
    %v2537 = vtanh.pop %v2536
    %v2538 = vmul.f32 %v2526, %v2537
    %2540 = vrot.lane.b32.xlu0 %v2538, 64
    %v2541 = vpop.permute.xlu0 %2540
    %2543 = vst.msk [vmem:[#allocation2 + $0x8] sm:$0x2] %vm1666, %v2541
    %v2544 = vrot.slane %v2538, 1
    %2545 = vrot.lane.b32.xlu0 %v2544, 64
    %v2546 = vpop.permute.xlu0 %2545
    %v2547 = vsel %vm1452, %v2546, 0
    %2549 = vmatprep.subr.mxu0 0.0
    %2550 = vmatpush1.msra.mxu0 0.0
    %2551 = vmatprep.subr.mxu0 0.0
    %2552 = vmatpush1.msra.mxu0 0.0
    %2553 = vmatprep.subr.mxu0 0.0
    %2554 = vmatpush1.msra.mxu0 0.0
    %2555 = vmatprep.subr.mxu0 0.0
    %2556 = vmatpush1.msra.mxu0 0.0
    %2557 = vmatprep.subr.mxu0 0.0
    %2558 = vmatpush1.msra.mxu0 0.0
    %2559 = vmatprep.subr.mxu0 0.0
    %2560 = vmatpush1.msra.mxu0 0.0
    %2561 = vmatprep.subr.mxu0 0.0
    %2562 = vmatpush1.msra.mxu0 0.0
    %2563 = vmatprep.subr.mxu0 0.0
    %2564 = vmatpush1.msra.mxu0 0.0
    %2565 = vmatprep.subr.mxu0 %v1351
    %2566 = vmatpush1.msra.mxu0 %v1350
    %2567 = vmatprep.subr.mxu0 %v1349
    %2568 = vmatpush1.msra.mxu0 %v1348
    %2569 = vmatprep.subr.mxu0 %v1347
    %2570 = vmatpush1.msra.mxu0 %v1346
    %2571 = vmatprep.subr.mxu0 %v1345
    %2572 = vmatpush1.msra.mxu0 %v1344
    %2573 = vmatprep.subr.mxu0 %v1343
    %2574 = vmatpush1.msra.mxu0 %v1342
    %2575 = vmatprep.subr.mxu0 %v1341
    %2576 = vmatpush1.msra.mxu0 %v1340
    %2577 = vmatprep.subr.mxu0 %v1339
    %2578 = vmatpush1.msra.mxu0 %v1338
    %2579 = vmatprep.subr.mxu0 %v1337
    %2580 = vmatpush1.msra.mxu0 %v1336
    %2581 = vmatprep.subr.mxu0 0.0
    %2582 = vmatpush2.msra.mxu0 0.0
    %2583 = vmatprep.subr.mxu0 0.0
    %2584 = vmatpush2.msra.mxu0 0.0
    %2585 = vmatprep.subr.mxu0 0.0
    %2586 = vmatpush2.msra.mxu0 0.0
    %2587 = vmatprep.subr.mxu0 0.0
    %2588 = vmatpush2.msra.mxu0 0.0
    %2589 = vmatprep.subr.mxu0 0.0
    %2590 = vmatpush2.msra.mxu0 0.0
    %2591 = vmatprep.subr.mxu0 0.0
    %2592 = vmatpush2.msra.mxu0 0.0
    %2593 = vmatprep.subr.mxu0 0.0
    %2594 = vmatpush2.msra.mxu0 0.0
    %2595 = vmatprep.subr.mxu0 0.0
    %2596 = vmatpush2.msra.mxu0 0.0
    %2597 = vmatprep.subr.mxu0 0.0
    %2598 = vmatpush2.msra.mxu0 0.0
    %2599 = vmatprep.subr.mxu0 0.0
    %2600 = vmatpush2.msra.mxu0 0.0
    %2601 = vmatprep.subr.mxu0 0.0
    %2602 = vmatpush2.msra.mxu0 0.0
    %2603 = vmatprep.subr.mxu0 0.0
    %2604 = vmatpush2.msra.mxu0 0.0
    %2605 = vmatprep.subr.mxu0 0.0
    %2606 = vmatpush2.msra.mxu0 0.0
    %2607 = vmatprep.subr.mxu0 0.0
    %2608 = vmatpush2.msra.mxu0 0.0
    %2609 = vmatprep.subr.mxu0 0.0
    %2610 = vmatpush2.msra.mxu0 0.0
    %2611 = vmatprep.subr.mxu0 0.0
    %2612 = vmatpush2.msra.mxu0 0.0
    %2613 = vmatprep.mubr.f32.mxu0 0.0
    %2614 = vmatmul.mubr.f32.gmra.mxu0 %v2547
    %v2615 = vpop.f32.mrf.mxu0
    %v2616 = vadd.f32 0.0, %v2615
    %v2617 = vpop.f32.mrf.mxu0
    %v2618 = vadd.f32 0.0, %v2617
    %2619 = vdwg.mxu0
    %v2620 = vadd.f32 %v1448, %v2616
    %v2621 = vadd.f32 %v1450, %v2618
    %v2622 = vxor.u32 %v2620, 2147483648
    %v2623 = vmul.f32 %v2622, 1.442695
    %v2624 = vpow.pop %v2623
    %v2625 = vadd.f32 %v2624, 1.0
    %v2626 = vrcp.pop %v2625
    %v2627 = vmul.f32 1.0, %v2626
    %v2628 = vtanh.pop %v2621
    %v2629 = vxor.u32 %v2621, 2147483648
    %v2630 = vmul.f32 %v2629, 1.442695
    %v2631 = vpow.pop %v2630
    %v2632 = vadd.f32 %v2631, 1.0
    %v2633 = vrcp.pop %v2632
    %v2634 = vmul.f32 1.0, %v2633
    %v2636 = vrot.slane %v2536, 1
    %v2638 = vmul.f32 %v2627, %v2636
    %v2639 = vmul.f32 %v2627, %v2628
    %2641 = vrot.lane.b32.xlu0 %v2639, 64
    %v2642 = vpop.permute.xlu0 %2641
    %v2644 = vadd.f32 %v2638, %v2642
    %v2645 = vtanh.pop %v2644
    %v2646 = vmul.f32 %v2634, %v2645
    %2648 = vrot.lane.b32.xlu0 %v2646, 64
    %v2649 = vpop.permute.xlu0 %2648
    %2651 = vst.msk [vmem:[#allocation2 + $0xa] sm:$0x1] %vm1554, %v2649
    %v2652 = vsel %vm1452, %v2649, 0
    %2654 = vmatprep.subr.mxu0 0.0
    %2655 = vmatpush1.msra.mxu0 0.0
    %2656 = vmatprep.subr.mxu0 0.0
    %2657 = vmatpush1.msra.mxu0 0.0
    %2658 = vmatprep.subr.mxu0 0.0
    %2659 = vmatpush1.msra.mxu0 0.0
    %2660 = vmatprep.subr.mxu0 0.0
    %2661 = vmatpush1.msra.mxu0 0.0
    %2662 = vmatprep.subr.mxu0 0.0
    %2663 = vmatpush1.msra.mxu0 0.0
    %2664 = vmatprep.subr.mxu0 0.0
    %2665 = vmatpush1.msra.mxu0 0.0
    %2666 = vmatprep.subr.mxu0 0.0
    %2667 = vmatpush1.msra.mxu0 0.0
    %2668 = vmatprep.subr.mxu0 0.0
    %2669 = vmatpush1.msra.mxu0 0.0
    %2670 = vmatprep.subr.mxu0 %v1351
    %2671 = vmatpush1.msra.mxu0 %v1350
    %2672 = vmatprep.subr.mxu0 %v1349
    %2673 = vmatpush1.msra.mxu0 %v1348
    %2674 = vmatprep.subr.mxu0 %v1347
    %2675 = vmatpush1.msra.mxu0 %v1346
    %2676 = vmatprep.subr.mxu0 %v1345
    %2677 = vmatpush1.msra.mxu0 %v1344
    %2678 = vmatprep.subr.mxu0 %v1343
    %2679 = vmatpush1.msra.mxu0 %v1342
    %2680 = vmatprep.subr.mxu0 %v1341
    %2681 = vmatpush1.msra.mxu0 %v1340
    %2682 = vmatprep.subr.mxu0 %v1339
    %2683 = vmatpush1.msra.mxu0 %v1338
    %2684 = vmatprep.subr.mxu0 %v1337
    %2685 = vmatpush1.msra.mxu0 %v1336
    %2686 = vmatprep.subr.mxu0 0.0
    %2687 = vmatpush2.msra.mxu0 0.0
    %2688 = vmatprep.subr.mxu0 0.0
    %2689 = vmatpush2.msra.mxu0 0.0
    %2690 = vmatprep.subr.mxu0 0.0
    %2691 = vmatpush2.msra.mxu0 0.0
    %2692 = vmatprep.subr.mxu0 0.0
    %2693 = vmatpush2.msra.mxu0 0.0
    %2694 = vmatprep.subr.mxu0 0.0
    %2695 = vmatpush2.msra.mxu0 0.0
    %2696 = vmatprep.subr.mxu0 0.0
    %2697 = vmatpush2.msra.mxu0 0.0
    %2698 = vmatprep.subr.mxu0 0.0
    %2699 = vmatpush2.msra.mxu0 0.0
    %2700 = vmatprep.subr.mxu0 0.0
    %2701 = vmatpush2.msra.mxu0 0.0
    %2702 = vmatprep.subr.mxu0 0.0
    %2703 = vmatpush2.msra.mxu0 0.0
    %2704 = vmatprep.subr.mxu0 0.0
    %2705 = vmatpush2.msra.mxu0 0.0
    %2706 = vmatprep.subr.mxu0 0.0
    %2707 = vmatpush2.msra.mxu0 0.0
    %2708 = vmatprep.subr.mxu0 0.0
    %2709 = vmatpush2.msra.mxu0 0.0
    %2710 = vmatprep.subr.mxu0 0.0
    %2711 = vmatpush2.msra.mxu0 0.0
    %2712 = vmatprep.subr.mxu0 0.0
    %2713 = vmatpush2.msra.mxu0 0.0
    %2714 = vmatprep.subr.mxu0 0.0
    %2715 = vmatpush2.msra.mxu0 0.0
    %2716 = vmatprep.subr.mxu0 0.0
    %2717 = vmatpush2.msra.mxu0 0.0
    %2718 = vmatprep.mubr.f32.mxu0 0.0
    %2719 = vmatmul.mubr.f32.gmra.mxu0 %v2652
    %v2720 = vpop.f32.mrf.mxu0
    %v2721 = vadd.f32 0.0, %v2720
    %v2722 = vpop.f32.mrf.mxu0
    %v2723 = vadd.f32 0.0, %v2722
    %2724 = vdwg.mxu0
    %v2727 = vrot.slane %v2721, 7
    %v2728 = vrot.slane %v2723, 7
    %v2731 = vadd.f32 %v1448, %v2727
    %v2732 = vadd.f32 %v1450, %v2728
    %v2733 = vxor.u32 %v2731, 2147483648
    %v2734 = vmul.f32 %v2733, 1.442695
    %v2735 = vpow.pop %v2734
    %v2736 = vadd.f32 %v2735, 1.0
    %v2737 = vrcp.pop %v2736
    %v2738 = vmul.f32 1.0, %v2737
    %v2739 = vtanh.pop %v2732
    %v2740 = vxor.u32 %v2732, 2147483648
    %v2741 = vmul.f32 %v2740, 1.442695
    %v2742 = vpow.pop %v2741
    %v2743 = vadd.f32 %v2742, 1.0
    %v2744 = vrcp.pop %v2743
    %v2745 = vmul.f32 1.0, %v2744
    %v2747 = vrot.slane %v2644, 7
    %v2749 = vmul.f32 %v2738, %v2747
    %v2750 = vmul.f32 %v2738, %v2739
    %2752 = vrot.lane.b32.xlu0 %v2750, 64
    %v2753 = vpop.permute.xlu0 %2752
    %v2755 = vadd.f32 %v2749, %v2753
    %v2756 = vtanh.pop %v2755
    %v2757 = vmul.f32 %v2745, %v2756
    %2759 = vrot.lane.b32.xlu0 %v2757, 64
    %v2760 = vpop.permute.xlu0 %2759
    %2762 = vst.msk [vmem:[#allocation2 + $0xa] sm:$0x2] %vm1666, %v2760
    %v2763 = vrot.slane %v2757, 1
    %2764 = vrot.lane.b32.xlu0 %v2763, 64
    %v2765 = vpop.permute.xlu0 %2764
    %v2766 = vsel %vm1452, %v2765, 0
    %2768 = vmatprep.subr.mxu0 0.0
    %2769 = vmatpush1.msra.mxu0 0.0
    %2770 = vmatprep.subr.mxu0 0.0
    %2771 = vmatpush1.msra.mxu0 0.0
    %2772 = vmatprep.subr.mxu0 0.0
    %2773 = vmatpush1.msra.mxu0 0.0
    %2774 = vmatprep.subr.mxu0 0.0
    %2775 = vmatpush1.msra.mxu0 0.0
    %2776 = vmatprep.subr.mxu0 0.0
    %2777 = vmatpush1.msra.mxu0 0.0
    %2778 = vmatprep.subr.mxu0 0.0
    %2779 = vmatpush1.msra.mxu0 0.0
    %2780 = vmatprep.subr.mxu0 0.0
    %2781 = vmatpush1.msra.mxu0 0.0
    %2782 = vmatprep.subr.mxu0 0.0
    %2783 = vmatpush1.msra.mxu0 0.0
    %2784 = vmatprep.subr.mxu0 %v1351
    %2785 = vmatpush1.msra.mxu0 %v1350
    %2786 = vmatprep.subr.mxu0 %v1349
    %2787 = vmatpush1.msra.mxu0 %v1348
    %2788 = vmatprep.subr.mxu0 %v1347
    %2789 = vmatpush1.msra.mxu0 %v1346
    %2790 = vmatprep.subr.mxu0 %v1345
    %2791 = vmatpush1.msra.mxu0 %v1344
    %2792 = vmatprep.subr.mxu0 %v1343
    %2793 = vmatpush1.msra.mxu0 %v1342
    %2794 = vmatprep.subr.mxu0 %v1341
    %2795 = vmatpush1.msra.mxu0 %v1340
    %2796 = vmatprep.subr.mxu0 %v1339
    %2797 = vmatpush1.msra.mxu0 %v1338
    %2798 = vmatprep.subr.mxu0 %v1337
    %2799 = vmatpush1.msra.mxu0 %v1336
    %2800 = vmatprep.subr.mxu0 0.0
    %2801 = vmatpush2.msra.mxu0 0.0
    %2802 = vmatprep.subr.mxu0 0.0
    %2803 = vmatpush2.msra.mxu0 0.0
    %2804 = vmatprep.subr.mxu0 0.0
    %2805 = vmatpush2.msra.mxu0 0.0
    %2806 = vmatprep.subr.mxu0 0.0
    %2807 = vmatpush2.msra.mxu0 0.0
    %2808 = vmatprep.subr.mxu0 0.0
    %2809 = vmatpush2.msra.mxu0 0.0
    %2810 = vmatprep.subr.mxu0 0.0
    %2811 = vmatpush2.msra.mxu0 0.0
    %2812 = vmatprep.subr.mxu0 0.0
    %2813 = vmatpush2.msra.mxu0 0.0
    %2814 = vmatprep.subr.mxu0 0.0
    %2815 = vmatpush2.msra.mxu0 0.0
    %2816 = vmatprep.subr.mxu0 0.0
    %2817 = vmatpush2.msra.mxu0 0.0
    %2818 = vmatprep.subr.mxu0 0.0
    %2819 = vmatpush2.msra.mxu0 0.0
    %2820 = vmatprep.subr.mxu0 0.0
    %2821 = vmatpush2.msra.mxu0 0.0
    %2822 = vmatprep.subr.mxu0 0.0
    %2823 = vmatpush2.msra.mxu0 0.0
    %2824 = vmatprep.subr.mxu0 0.0
    %2825 = vmatpush2.msra.mxu0 0.0
    %2826 = vmatprep.subr.mxu0 0.0
    %2827 = vmatpush2.msra.mxu0 0.0
    %2828 = vmatprep.subr.mxu0 0.0
    %2829 = vmatpush2.msra.mxu0 0.0
    %2830 = vmatprep.subr.mxu0 0.0
    %2831 = vmatpush2.msra.mxu0 0.0
    %2832 = vmatprep.mubr.f32.mxu0 0.0
    %2833 = vmatmul.mubr.f32.gmra.mxu0 %v2766
    %v2834 = vpop.f32.mrf.mxu0
    %v2835 = vadd.f32 0.0, %v2834
    %v2836 = vpop.f32.mrf.mxu0
    %v2837 = vadd.f32 0.0, %v2836
    %2838 = vdwg.mxu0
    %v2839 = vadd.f32 %v1448, %v2835
    %v2840 = vadd.f32 %v1450, %v2837
    %v2841 = vxor.u32 %v2839, 2147483648
    %v2842 = vmul.f32 %v2841, 1.442695
    %v2843 = vpow.pop %v2842
    %v2844 = vadd.f32 %v2843, 1.0
    %v2845 = vrcp.pop %v2844
    %v2846 = vmul.f32 1.0, %v2845
    %v2847 = vtanh.pop %v2840
    %v2848 = vxor.u32 %v2840, 2147483648
    %v2849 = vmul.f32 %v2848, 1.442695
    %v2850 = vpow.pop %v2849
    %v2851 = vadd.f32 %v2850, 1.0
    %v2852 = vrcp.pop %v2851
    %v2853 = vmul.f32 1.0, %v2852
    %v2855 = vrot.slane %v2755, 1
    %v2857 = vmul.f32 %v2846, %v2855
    %v2858 = vmul.f32 %v2846, %v2847
    %2860 = vrot.lane.b32.xlu0 %v2858, 64
    %v2861 = vpop.permute.xlu0 %2860
    %v2863 = vadd.f32 %v2857, %v2861
    %v2864 = vtanh.pop %v2863
    %v2865 = vmul.f32 %v2853, %v2864
    %2867 = vrot.lane.b32.xlu0 %v2865, 64
    %v2868 = vpop.permute.xlu0 %2867
    %2870 = vst.msk [vmem:[#allocation2 + $0xc] sm:$0x1] %vm1554, %v2868
    %v2871 = vsel %vm1452, %v2868, 0
    %2873 = vmatprep.subr.mxu0 0.0
    %2874 = vmatpush1.msra.mxu0 0.0
    %2875 = vmatprep.subr.mxu0 0.0
    %2876 = vmatpush1.msra.mxu0 0.0
    %2877 = vmatprep.subr.mxu0 0.0
    %2878 = vmatpush1.msra.mxu0 0.0
    %2879 = vmatprep.subr.mxu0 0.0
    %2880 = vmatpush1.msra.mxu0 0.0
    %2881 = vmatprep.subr.mxu0 0.0
    %2882 = vmatpush1.msra.mxu0 0.0
    %2883 = vmatprep.subr.mxu0 0.0
    %2884 = vmatpush1.msra.mxu0 0.0
    %2885 = vmatprep.subr.mxu0 0.0
    %2886 = vmatpush1.msra.mxu0 0.0
    %2887 = vmatprep.subr.mxu0 0.0
    %2888 = vmatpush1.msra.mxu0 0.0
    %2889 = vmatprep.subr.mxu0 %v1351
    %2890 = vmatpush1.msra.mxu0 %v1350
    %2891 = vmatprep.subr.mxu0 %v1349
    %2892 = vmatpush1.msra.mxu0 %v1348
    %2893 = vmatprep.subr.mxu0 %v1347
    %2894 = vmatpush1.msra.mxu0 %v1346
    %2895 = vmatprep.subr.mxu0 %v1345
    %2896 = vmatpush1.msra.mxu0 %v1344
    %2897 = vmatprep.subr.mxu0 %v1343
    %2898 = vmatpush1.msra.mxu0 %v1342
    %2899 = vmatprep.subr.mxu0 %v1341
    %2900 = vmatpush1.msra.mxu0 %v1340
    %2901 = vmatprep.subr.mxu0 %v1339
    %2902 = vmatpush1.msra.mxu0 %v1338
    %2903 = vmatprep.subr.mxu0 %v1337
    %2904 = vmatpush1.msra.mxu0 %v1336
    %2905 = vmatprep.subr.mxu0 0.0
    %2906 = vmatpush2.msra.mxu0 0.0
    %2907 = vmatprep.subr.mxu0 0.0
    %2908 = vmatpush2.msra.mxu0 0.0
    %2909 = vmatprep.subr.mxu0 0.0
    %2910 = vmatpush2.msra.mxu0 0.0
    %2911 = vmatprep.subr.mxu0 0.0
    %2912 = vmatpush2.msra.mxu0 0.0
    %2913 = vmatprep.subr.mxu0 0.0
    %2914 = vmatpush2.msra.mxu0 0.0
    %2915 = vmatprep.subr.mxu0 0.0
    %2916 = vmatpush2.msra.mxu0 0.0
    %2917 = vmatprep.subr.mxu0 0.0
    %2918 = vmatpush2.msra.mxu0 0.0
    %2919 = vmatprep.subr.mxu0 0.0
    %2920 = vmatpush2.msra.mxu0 0.0
    %2921 = vmatprep.subr.mxu0 0.0
    %2922 = vmatpush2.msra.mxu0 0.0
    %2923 = vmatprep.subr.mxu0 0.0
    %2924 = vmatpush2.msra.mxu0 0.0
    %2925 = vmatprep.subr.mxu0 0.0
    %2926 = vmatpush2.msra.mxu0 0.0
    %2927 = vmatprep.subr.mxu0 0.0
    %2928 = vmatpush2.msra.mxu0 0.0
    %2929 = vmatprep.subr.mxu0 0.0
    %2930 = vmatpush2.msra.mxu0 0.0
    %2931 = vmatprep.subr.mxu0 0.0
    %2932 = vmatpush2.msra.mxu0 0.0
    %2933 = vmatprep.subr.mxu0 0.0
    %2934 = vmatpush2.msra.mxu0 0.0
    %2935 = vmatprep.subr.mxu0 0.0
    %2936 = vmatpush2.msra.mxu0 0.0
    %2937 = vmatprep.mubr.f32.mxu0 0.0
    %2938 = vmatmul.mubr.f32.gmra.mxu0 %v2871
    %v2939 = vpop.f32.mrf.mxu0
    %v2940 = vadd.f32 0.0, %v2939
    %v2941 = vpop.f32.mrf.mxu0
    %v2942 = vadd.f32 0.0, %v2941
    %2943 = vdwg.mxu0
    %v2946 = vrot.slane %v2940, 7
    %v2947 = vrot.slane %v2942, 7
    %v2950 = vadd.f32 %v1448, %v2946
    %v2951 = vadd.f32 %v1450, %v2947
    %v2952 = vxor.u32 %v2950, 2147483648
    %v2953 = vmul.f32 %v2952, 1.442695
    %v2954 = vpow.pop %v2953
    %v2955 = vadd.f32 %v2954, 1.0
    %v2956 = vrcp.pop %v2955
    %v2957 = vmul.f32 1.0, %v2956
    %v2958 = vtanh.pop %v2951
    %v2959 = vxor.u32 %v2951, 2147483648
    %v2960 = vmul.f32 %v2959, 1.442695
    %v2961 = vpow.pop %v2960
    %v2962 = vadd.f32 %v2961, 1.0
    %v2963 = vrcp.pop %v2962
    %v2964 = vmul.f32 1.0, %v2963
    %v2966 = vrot.slane %v2863, 7
    %v2968 = vmul.f32 %v2957, %v2966
    %v2969 = vmul.f32 %v2957, %v2958
    %2971 = vrot.lane.b32.xlu0 %v2969, 64
    %v2972 = vpop.permute.xlu0 %2971
    %v2974 = vadd.f32 %v2968, %v2972
    %v2975 = vtanh.pop %v2974
    %v2976 = vmul.f32 %v2964, %v2975
    %2978 = vrot.lane.b32.xlu0 %v2976, 64
    %v2979 = vpop.permute.xlu0 %2978
    %2981 = vst.msk [vmem:[#allocation2 + $0xc] sm:$0x2] %vm1666, %v2979
    %v2982 = vrot.slane %v2976, 1
    %2983 = vrot.lane.b32.xlu0 %v2982, 64
    %v2984 = vpop.permute.xlu0 %2983
    %v2985 = vsel %vm1452, %v2984, 0
    %2987 = vmatprep.subr.mxu0 0.0
    %2988 = vmatpush1.msra.mxu0 0.0
    %2989 = vmatprep.subr.mxu0 0.0
    %2990 = vmatpush1.msra.mxu0 0.0
    %2991 = vmatprep.subr.mxu0 0.0
    %2992 = vmatpush1.msra.mxu0 0.0
    %2993 = vmatprep.subr.mxu0 0.0
    %2994 = vmatpush1.msra.mxu0 0.0
    %2995 = vmatprep.subr.mxu0 0.0
    %2996 = vmatpush1.msra.mxu0 0.0
    %2997 = vmatprep.subr.mxu0 0.0
    %2998 = vmatpush1.msra.mxu0 0.0
    %2999 = vmatprep.subr.mxu0 0.0
    %3000 = vmatpush1.msra.mxu0 0.0
    %3001 = vmatprep.subr.mxu0 0.0
    %3002 = vmatpush1.msra.mxu0 0.0
    %3003 = vmatprep.subr.mxu0 %v1351
    %3004 = vmatpush1.msra.mxu0 %v1350
    %3005 = vmatprep.subr.mxu0 %v1349
    %3006 = vmatpush1.msra.mxu0 %v1348
    %3007 = vmatprep.subr.mxu0 %v1347
    %3008 = vmatpush1.msra.mxu0 %v1346
    %3009 = vmatprep.subr.mxu0 %v1345
    %3010 = vmatpush1.msra.mxu0 %v1344
    %3011 = vmatprep.subr.mxu0 %v1343
    %3012 = vmatpush1.msra.mxu0 %v1342
    %3013 = vmatprep.subr.mxu0 %v1341
    %3014 = vmatpush1.msra.mxu0 %v1340
    %3015 = vmatprep.subr.mxu0 %v1339
    %3016 = vmatpush1.msra.mxu0 %v1338
    %3017 = vmatprep.subr.mxu0 %v1337
    %3018 = vmatpush1.msra.mxu0 %v1336
    %3019 = vmatprep.subr.mxu0 0.0
    %3020 = vmatpush2.msra.mxu0 0.0
    %3021 = vmatprep.subr.mxu0 0.0
    %3022 = vmatpush2.msra.mxu0 0.0
    %3023 = vmatprep.subr.mxu0 0.0
    %3024 = vmatpush2.msra.mxu0 0.0
    %3025 = vmatprep.subr.mxu0 0.0
    %3026 = vmatpush2.msra.mxu0 0.0
    %3027 = vmatprep.subr.mxu0 0.0
    %3028 = vmatpush2.msra.mxu0 0.0
    %3029 = vmatprep.subr.mxu0 0.0
    %3030 = vmatpush2.msra.mxu0 0.0
    %3031 = vmatprep.subr.mxu0 0.0
    %3032 = vmatpush2.msra.mxu0 0.0
    %3033 = vmatprep.subr.mxu0 0.0
    %3034 = vmatpush2.msra.mxu0 0.0
    %3035 = vmatprep.subr.mxu0 0.0
    %3036 = vmatpush2.msra.mxu0 0.0
    %3037 = vmatprep.subr.mxu0 0.0
    %3038 = vmatpush2.msra.mxu0 0.0
    %3039 = vmatprep.subr.mxu0 0.0
    %3040 = vmatpush2.msra.mxu0 0.0
    %3041 = vmatprep.subr.mxu0 0.0
    %3042 = vmatpush2.msra.mxu0 0.0
    %3043 = vmatprep.subr.mxu0 0.0
    %3044 = vmatpush2.msra.mxu0 0.0
    %3045 = vmatprep.subr.mxu0 0.0
    %3046 = vmatpush2.msra.mxu0 0.0
    %3047 = vmatprep.subr.mxu0 0.0
    %3048 = vmatpush2.msra.mxu0 0.0
    %3049 = vmatprep.subr.mxu0 0.0
    %3050 = vmatpush2.msra.mxu0 0.0
    %3051 = vmatprep.mubr.f32.mxu0 0.0
    %3052 = vmatmul.mubr.f32.gmra.mxu0 %v2985
    %v3053 = vpop.f32.mrf.mxu0
    %v3054 = vadd.f32 0.0, %v3053
    %v3055 = vpop.f32.mrf.mxu0
    %v3056 = vadd.f32 0.0, %v3055
    %3057 = vdwg.mxu0
    %v3058 = vadd.f32 %v1448, %v3054
    %v3059 = vadd.f32 %v1450, %v3056
    %v3060 = vxor.u32 %v3058, 2147483648
    %v3061 = vmul.f32 %v3060, 1.442695
    %v3062 = vpow.pop %v3061
    %v3063 = vadd.f32 %v3062, 1.0
    %v3064 = vrcp.pop %v3063
    %v3065 = vmul.f32 1.0, %v3064
    %v3066 = vtanh.pop %v3059
    %v3067 = vxor.u32 %v3059, 2147483648
    %v3068 = vmul.f32 %v3067, 1.442695
    %v3069 = vpow.pop %v3068
    %v3070 = vadd.f32 %v3069, 1.0
    %v3071 = vrcp.pop %v3070
    %v3072 = vmul.f32 1.0, %v3071
    %v3074 = vrot.slane %v2974, 1
    %v3076 = vmul.f32 %v3065, %v3074
    %v3077 = vmul.f32 %v3065, %v3066
    %3079 = vrot.lane.b32.xlu0 %v3077, 64
    %v3080 = vpop.permute.xlu0 %3079
    %v3082 = vadd.f32 %v3076, %v3080
    %v3083 = vtanh.pop %v3082
    %v3084 = vmul.f32 %v3072, %v3083
    %3086 = vrot.lane.b32.xlu0 %v3084, 64
    %v3087 = vpop.permute.xlu0 %3086
    %3089 = vst.msk [vmem:[#allocation2 + $0xe] sm:$0x1] %vm1554, %v3087
    %v3090 = vsel %vm1452, %v3087, 0
    %3092 = vmatprep.subr.mxu0 0.0
    %3093 = vmatpush1.msra.mxu0 0.0
    %3094 = vmatprep.subr.mxu0 0.0
    %3095 = vmatpush1.msra.mxu0 0.0
    %3096 = vmatprep.subr.mxu0 0.0
    %3097 = vmatpush1.msra.mxu0 0.0
    %3098 = vmatprep.subr.mxu0 0.0
    %3099 = vmatpush1.msra.mxu0 0.0
    %3100 = vmatprep.subr.mxu0 0.0
    %3101 = vmatpush1.msra.mxu0 0.0
    %3102 = vmatprep.subr.mxu0 0.0
    %3103 = vmatpush1.msra.mxu0 0.0
    %3104 = vmatprep.subr.mxu0 0.0
    %3105 = vmatpush1.msra.mxu0 0.0
    %3106 = vmatprep.subr.mxu0 0.0
    %3107 = vmatpush1.msra.mxu0 0.0
    %3108 = vmatprep.subr.mxu0 %v1351
    %3109 = vmatpush1.msra.mxu0 %v1350
    %3110 = vmatprep.subr.mxu0 %v1349
    %3111 = vmatpush1.msra.mxu0 %v1348
    %3112 = vmatprep.subr.mxu0 %v1347
    %3113 = vmatpush1.msra.mxu0 %v1346
    %3114 = vmatprep.subr.mxu0 %v1345
    %3115 = vmatpush1.msra.mxu0 %v1344
    %3116 = vmatprep.subr.mxu0 %v1343
    %3117 = vmatpush1.msra.mxu0 %v1342
    %3118 = vmatprep.subr.mxu0 %v1341
    %3119 = vmatpush1.msra.mxu0 %v1340
    %3120 = vmatprep.subr.mxu0 %v1339
    %3121 = vmatpush1.msra.mxu0 %v1338
    %3122 = vmatprep.subr.mxu0 %v1337
    %3123 = vmatpush1.msra.mxu0 %v1336
    %3124 = vmatprep.subr.mxu0 0.0
    %3125 = vmatpush2.msra.mxu0 0.0
    %3126 = vmatprep.subr.mxu0 0.0
    %3127 = vmatpush2.msra.mxu0 0.0
    %3128 = vmatprep.subr.mxu0 0.0
    %3129 = vmatpush2.msra.mxu0 0.0
    %3130 = vmatprep.subr.mxu0 0.0
    %3131 = vmatpush2.msra.mxu0 0.0
    %3132 = vmatprep.subr.mxu0 0.0
    %3133 = vmatpush2.msra.mxu0 0.0
    %3134 = vmatprep.subr.mxu0 0.0
    %3135 = vmatpush2.msra.mxu0 0.0
    %3136 = vmatprep.subr.mxu0 0.0
    %3137 = vmatpush2.msra.mxu0 0.0
    %3138 = vmatprep.subr.mxu0 0.0
    %3139 = vmatpush2.msra.mxu0 0.0
    %3140 = vmatprep.subr.mxu0 0.0
    %3141 = vmatpush2.msra.mxu0 0.0
    %3142 = vmatprep.subr.mxu0 0.0
    %3143 = vmatpush2.msra.mxu0 0.0
    %3144 = vmatprep.subr.mxu0 0.0
    %3145 = vmatpush2.msra.mxu0 0.0
    %3146 = vmatprep.subr.mxu0 0.0
    %3147 = vmatpush2.msra.mxu0 0.0
    %3148 = vmatprep.subr.mxu0 0.0
    %3149 = vmatpush2.msra.mxu0 0.0
    %3150 = vmatprep.subr.mxu0 0.0
    %3151 = vmatpush2.msra.mxu0 0.0
    %3152 = vmatprep.subr.mxu0 0.0
    %3153 = vmatpush2.msra.mxu0 0.0
    %3154 = vmatprep.subr.mxu0 0.0
    %3155 = vmatpush2.msra.mxu0 0.0
    %3156 = vmatprep.mubr.f32.mxu0 0.0
    %3157 = vmatmul.mubr.f32.gmra.mxu0 %v3090
    %v3158 = vpop.f32.mrf.mxu0
    %v3159 = vadd.f32 0.0, %v3158
    %v3160 = vpop.f32.mrf.mxu0
    %v3161 = vadd.f32 0.0, %v3160
    %3162 = vdwg.mxu0
    %v3165 = vrot.slane %v3159, 7
    %v3166 = vrot.slane %v3161, 7
    %v3169 = vadd.f32 %v1448, %v3165
    %v3170 = vadd.f32 %v1450, %v3166
    %v3171 = vxor.u32 %v3169, 2147483648
    %v3172 = vmul.f32 %v3171, 1.442695
    %v3173 = vpow.pop %v3172
    %v3174 = vadd.f32 %v3173, 1.0
    %v3175 = vrcp.pop %v3174
    %v3176 = vmul.f32 1.0, %v3175
    %v3177 = vtanh.pop %v3170
    %v3178 = vxor.u32 %v3170, 2147483648
    %v3179 = vmul.f32 %v3178, 1.442695
    %v3180 = vpow.pop %v3179
    %v3181 = vadd.f32 %v3180, 1.0
    %v3182 = vrcp.pop %v3181
    %v3183 = vmul.f32 1.0, %v3182
    %v3185 = vrot.slane %v3082, 7
    %v3187 = vmul.f32 %v3176, %v3185
    %v3188 = vmul.f32 %v3176, %v3177
    %3190 = vrot.lane.b32.xlu0 %v3188, 64
    %v3191 = vpop.permute.xlu0 %3190
    %v3193 = vadd.f32 %v3187, %v3191
    %v3194 = vtanh.pop %v3193
    %v3195 = vmul.f32 %v3183, %v3194
    %3197 = vrot.lane.b32.xlu0 %v3195, 64
    %v3198 = vpop.permute.xlu0 %3197
    %3200 = vst.msk [vmem:[#allocation2 + $0xe] sm:$0x2] %vm1666, %v3198
    %v3201 = vld [vmem:[#allocation2] sm:$0xff]
    %v3202 = vld [vmem:[#allocation2 + $0x8] sm:$0xff]
    %v3203 = vld [vmem:[#allocation14] sm:$0xff]
    %v3204 = vld [vmem:[#allocation14 + $0x8] sm:$0xff]
    %v3205 = vld [vmem:[#allocation14 + $0x10] sm:$0xff]
    %v3206 = vld [vmem:[#allocation14 + $0x18] sm:$0xff]
    %v3207 = vld [vmem:[#allocation14 + $0x20] sm:$0xff]
    %v3208 = vld [vmem:[#allocation14 + $0x28] sm:$0xff]
    %v3209 = vld [vmem:[#allocation14 + $0x30] sm:$0xff]
    %v3210 = vld [vmem:[#allocation14 + $0x38] sm:$0xff]
    %v3211 = vld [vmem:[%s8] sm:$0x1]
    %v3213 = vlaneseq
    %v3214 = vshrl.u32 %v3213, 7
    %v3215 = vsub.s32 0, %v3214
    %v3216 = vrot.slane %v3211, %v3215
    %v3219 = vsel %vm1452, %v3201, 0
    %v3222 = vsel %vm1452, %v3202, 0
    %3224 = vmatprep.subr.mxu0 0.0
    %3225 = vmatpush1.msra.mxu0 0.0
    %3226 = vmatprep.subr.mxu0 0.0
    %3227 = vmatpush1.msra.mxu0 0.0
    %3228 = vmatprep.subr.mxu0 0.0
    %3229 = vmatpush1.msra.mxu0 0.0
    %3230 = vmatprep.subr.mxu0 0.0
    %3231 = vmatpush1.msra.mxu0 0.0
    %3232 = vmatprep.subr.mxu0 0.0
    %3233 = vmatpush1.msra.mxu0 0.0
    %3234 = vmatprep.subr.mxu0 0.0
    %3235 = vmatpush1.msra.mxu0 0.0
    %3236 = vmatprep.subr.mxu0 0.0
    %3237 = vmatpush1.msra.mxu0 0.0
    %3238 = vmatprep.subr.mxu0 0.0
    %3239 = vmatpush1.msra.mxu0 0.0
    %3240 = vmatprep.subr.mxu0 0.0
    %3241 = vmatpush1.msra.mxu0 %v3210
    %3242 = vmatprep.subr.mxu0 0.0
    %3243 = vmatpush1.msra.mxu0 %v3209
    %3244 = vmatprep.subr.mxu0 0.0
    %3245 = vmatpush1.msra.mxu0 %v3208
    %3246 = vmatprep.subr.mxu0 0.0
    %3247 = vmatpush1.msra.mxu0 %v3207
    %3248 = vmatprep.subr.mxu0 0.0
    %3249 = vmatpush1.msra.mxu0 %v3206
    %3250 = vmatprep.subr.mxu0 0.0
    %3251 = vmatpush1.msra.mxu0 %v3205
    %3252 = vmatprep.subr.mxu0 0.0
    %3253 = vmatpush1.msra.mxu0 %v3204
    %3254 = vmatprep.subr.mxu0 0.0
    %3255 = vmatpush1.msra.mxu0 %v3203
    %3256 = vmatprep.subr.mxu0 0.0
    %3257 = vmatpush2.msra.mxu0 0.0
    %3258 = vmatprep.subr.mxu0 0.0
    %3259 = vmatpush2.msra.mxu0 0.0
    %3260 = vmatprep.subr.mxu0 0.0
    %3261 = vmatpush2.msra.mxu0 0.0
    %3262 = vmatprep.subr.mxu0 0.0
    %3263 = vmatpush2.msra.mxu0 0.0
    %3264 = vmatprep.subr.mxu0 0.0
    %3265 = vmatpush2.msra.mxu0 0.0
    %3266 = vmatprep.subr.mxu0 0.0
    %3267 = vmatpush2.msra.mxu0 0.0
    %3268 = vmatprep.subr.mxu0 0.0
    %3269 = vmatpush2.msra.mxu0 0.0
    %3270 = vmatprep.subr.mxu0 0.0
    %3271 = vmatpush2.msra.mxu0 0.0
    %3272 = vmatprep.subr.mxu0 0.0
    %3273 = vmatpush2.msra.mxu0 0.0
    %3274 = vmatprep.subr.mxu0 0.0
    %3275 = vmatpush2.msra.mxu0 0.0
    %3276 = vmatprep.subr.mxu0 0.0
    %3277 = vmatpush2.msra.mxu0 0.0
    %3278 = vmatprep.subr.mxu0 0.0
    %3279 = vmatpush2.msra.mxu0 0.0
    %3280 = vmatprep.subr.mxu0 0.0
    %3281 = vmatpush2.msra.mxu0 0.0
    %3282 = vmatprep.subr.mxu0 0.0
    %3283 = vmatpush2.msra.mxu0 0.0
    %3284 = vmatprep.subr.mxu0 0.0
    %3285 = vmatpush2.msra.mxu0 0.0
    %3286 = vmatprep.subr.mxu0 0.0
    %3287 = vmatpush2.msra.mxu0 0.0
    %3288 = vmatprep.mubr.f32.mxu0 0.0
    %3289 = vmatmul.mubr.f32.gmra.mxu0 %v3219
    %v3290 = vpop.f32.mrf.mxu0
    %v3291 = vadd.f32 %v3216, %v3290
    %v3292 = vpop.f32.mrf.mxu0
    %3293 = vmatprep.mubr.f32.mxu0 0.0
    %3294 = vmatmul.mubr.f32.gmra.mxu0 %v3222
    %v3295 = vpop.f32.mrf.mxu0
    %v3296 = vadd.f32 %v3216, %v3295
    %v3297 = vpop.f32.mrf.mxu0
    %3298 = vdwg.mxu0
    %3299 = vst [vmem:[#allocation15] sm:$0xff] %v3291
    %3300 = vst [vmem:[#allocation15 + $0x8] sm:$0xff] %v3296
    // Predicated region
    $region66: #{recurrent_autoencoder_forward.1} parent=1 // pred_check
      _
    $region67: #{recurrent_autoencoder_forward.1} parent=1 // pred_check_branch
      %3302 = sbr.rel (0) target = $region69
    $region68: #{recurrent_autoencoder_forward.1} parent=1 // pred_region
      %s3304 = ssub.s32 256, 256
      %3305 = vsyncadd [#allocation5], %s3304
      %s3306 = sshll.u32 [#allocation15], 4
      %s3307 = int_to_ptr.vmem [resolvable:$true] %s3306
      %3312 = dma.vmem_to_hbm [thread:$0]  %s3307, 256, %s9, [#allocation5], 128, 128, 8
    $region69: #{recurrent_autoencoder_forward.1} parent=1 // pred_fallthru
      _
    // Predicated region
    $region70: #{recurrent_autoencoder_forward.1} parent=1 // pred_check
      _
    $region71: #{recurrent_autoencoder_forward.1} parent=1 // pred_check_branch
      %3314 = sbr.rel (0) target = $region73
    $region72: #{recurrent_autoencoder_forward.1} parent=1 // pred_region
      %3315 = dma.done [#allocation5], 256
    $region73: #{recurrent_autoencoder_forward.1} parent=1 // pred_fallthru
      _
    %3316 = vsyncpa [#allocation4], 1
    %3317 = vsyncpa [#allocation7], 1
    %3318 = vsyncpa [#allocation10], 1
    %3319 = vsyncpa [#allocation13], 1
    %3320 = vsyncpa [#allocation5], 1

</llo_original>
